<compile_context>
chip_gen: v7x
topology: tpu7x:2x2x1
jax: 0.10.0
libtpu: 0.0.40
codegen_flags: <defaults>
</compile_context>

<pallas_src>
import functools

import jax
import jax.numpy as jnp
from jax.experimental import pallas as pl
from jax.experimental.pallas import tpu as pltpu


# ----------------------------------------------------------------------------
# Small helpers
# ----------------------------------------------------------------------------
def _round_up(x, m):
    return ((x + m - 1) // m) * m


def _choose_tile_m(m):
    """Row-tile for the M (pixel/batch) axis.

    >=2 grid steps once M is non-trivial (v7x has 2 TensorCores), <=512 rows
    per tile, and multiples of 16 so bf16 blocks keep native (16,128) tiling.
    """
    if m <= 64:
        return _round_up(max(m, 16), 16)
    n_tiles = max(2, pl.cdiv(m, 512))
    return _round_up(pl.cdiv(m, n_tiles), 16)


_SQRT_2_OVER_PI = 0.7978845608028654


def _gelu_tanh(x):
    # tanh-approximate GELU: the tanh goes to the EUP, the rest is 4 VPU ops.
    return 0.5 * x * (1.0 + jnp.tanh(_SQRT_2_OVER_PI * (x + 0.044715 * x * x * x)))


def _apply_act(x, activation):
    if activation == "gelu":
        return _gelu_tanh(x)
    if activation == "sigmoid":
        return jax.nn.sigmoid(x)
    return x


# ----------------------------------------------------------------------------
# Pallas kernels
# ----------------------------------------------------------------------------
def _matmul_act_kernel(x_ref, w_ref, b_ref, o_ref, *, activation):
    # bf16 x bf16 -> fp32 accumulate on the MXU, fp32 epilogue, cast at store.
    acc = jnp.dot(x_ref[...], w_ref[...], preferred_element_type=jnp.float32)
    y = _apply_act(acc + b_ref[...], activation)
    o_ref[...] = y.astype(o_ref.dtype)


def _mlp_kernel(x_ref, w1_ref, b1_ref, w2_ref, b2_ref, o_ref):
    # Fused Linear+GELU -> Linear+GELU (both weight matrices are tiny and
    # resident in VMEM for the whole call).
    h = jnp.dot(x_ref[...], w1_ref[...], preferred_element_type=jnp.float32)
    h = _gelu_tanh(h + b1_ref[...])
    y = jnp.dot(h.astype(jnp.bfloat16), w2_ref[...],
                preferred_element_type=jnp.float32)
    y = _gelu_tanh(y + b2_ref[...])
    o_ref[...] = y.astype(o_ref.dtype)


_COMPILER_PARAMS = pltpu.CompilerParams(
    dimension_semantics=("parallel",),
    vmem_limit_bytes=32 * 1024 * 1024,
)


def fused_matmul_act(x, w, b, activation, out_dtype=jnp.bfloat16):
    """act(x @ w + b) with bias / BN already folded into (w, b).

    x: (M, K) any float; w: (K, Np) bf16 with Np % 128 == 0; b: (1, Np) fp32.
    """
    M, K = x.shape
    K2, Np = w.shape
    assert K == K2 and Np % 128 == 0
    x = x.astype(jnp.bfloat16)

    tile_m = _choose_tile_m(M)
    Mp = _round_up(M, tile_m)
    if Mp != M:
        x = jnp.pad(x, ((0, Mp - M), (0, 0)))
    grid = (Mp // tile_m,)

    kernel = functools.partial(_matmul_act_kernel, activation=activation)
    out = pl.pallas_call(
        kernel,
        out_shape=jax.ShapeDtypeStruct((Mp, Np), out_dtype),
        grid_spec=pltpu.PrefetchScalarGridSpec(
            num_scalar_prefetch=0,
            grid=grid,
            in_specs=[
                pl.BlockSpec((tile_m, K), lambda i: (i, 0)),
                pl.BlockSpec((K, Np), lambda i: (0, 0)),
                pl.BlockSpec((1, Np), lambda i: (0, 0)),
            ],
            out_specs=pl.BlockSpec((tile_m, Np), lambda i: (i, 0)),
        ),
        compiler_params=_COMPILER_PARAMS,
    )(x, w, b)
    if Mp != M:
        out = out[:M]
    return out


def fused_mlp(x, w1, b1, w2, b2):
    """gelu(gelu(x @ w1 + b1) @ w2 + b2) in one pallas_call."""
    M, K = x.shape
    N1 = w1.shape[1]
    N2 = w2.shape[1]
    x = x.astype(jnp.bfloat16)

    tile_m = _choose_tile_m(M)
    Mp = _round_up(M, tile_m)
    if Mp != M:
        x = jnp.pad(x, ((0, Mp - M), (0, 0)))
    grid = (Mp // tile_m,)

    out = pl.pallas_call(
        _mlp_kernel,
        out_shape=jax.ShapeDtypeStruct((Mp, N2), jnp.bfloat16),
        grid_spec=pltpu.PrefetchScalarGridSpec(
            num_scalar_prefetch=0,
            grid=grid,
            in_specs=[
                pl.BlockSpec((tile_m, K), lambda i: (i, 0)),
                pl.BlockSpec((K, N1), lambda i: (0, 0)),
                pl.BlockSpec((1, N1), lambda i: (0, 0)),
                pl.BlockSpec((N1, N2), lambda i: (0, 0)),
                pl.BlockSpec((1, N2), lambda i: (0, 0)),
            ],
            out_specs=pl.BlockSpec((tile_m, N2), lambda i: (i, 0)),
        ),
        compiler_params=_COMPILER_PARAMS,
    )(x, w1, b1, w2, b2)
    if Mp != M:
        out = out[:M]
    return out


# ----------------------------------------------------------------------------
# ConvTranspose2d glue: zero-dilate + pad + im2col (bf16), feeding the fused
# matmul kernel.  Weight matrices are pre-built (flipped, BN/bias folded,
# N padded to 128) at prepare time.
# ----------------------------------------------------------------------------
def _convtranspose_patches(x_nhwc, stride, padding, output_padding, k=3):
    B, H, W, C = x_nhwc.shape
    Hd = (H - 1) * stride + 1
    Wd = (W - 1) * stride + 1
    xd = jnp.zeros((B, Hd, Wd, C), x_nhwc.dtype)
    xd = xd.at[:, ::stride, ::stride, :].set(x_nhwc)

    pad = k - 1 - padding
    xp = jnp.pad(xd, ((0, 0),
                      (pad, pad + output_padding),
                      (pad, pad + output_padding),
                      (0, 0)))
    Hout = Hd + 2 * pad + output_padding - k + 1
    Wout = Wd + 2 * pad + output_padding - k + 1

    cols = [xp[:, kh:kh + Hout, kw:kw + Wout, :]
            for kh in range(k) for kw in range(k)]
    patches = jnp.concatenate(cols, axis=-1).reshape(B * Hout * Wout, k * k * C)
    return patches, (B, Hout, Wout)


def conv_transpose_act(x_nhwc, wmat, bvec, cout, stride, padding,
                       output_padding, activation, out_dtype=jnp.bfloat16):
    patches, (B, Ho, Wo) = _convtranspose_patches(
        x_nhwc.astype(jnp.bfloat16), stride, padding, output_padding)
    y = fused_matmul_act(patches, wmat, bvec, activation, out_dtype)
    return y[:, :cout].reshape(B, Ho, Wo, cout)


# ----------------------------------------------------------------------------
# Parameter init (deterministic, PyTorch-like uniform bounds).
# ----------------------------------------------------------------------------
def init_params(key, latent_dim=100):
    ks = jax.random.split(key, 12)

    def u(k, shape, fan_in):
        bound = 1.0 / float(fan_in) ** 0.5
        return jax.random.uniform(k, shape, jnp.float32, -bound, bound)

    p = {}
    p["w1"] = u(ks[0], (latent_dim, 128), latent_dim)
    p["b1"] = u(ks[1], (128,), latent_dim)
    p["w2"] = u(ks[2], (128, 3 * 3 * 128), 128)
    p["b2"] = u(ks[3], (3 * 3 * 128,), 128)
    # ConvTranspose2d weights in PyTorch layout (Cin, Cout, kH, kW)
    p["ct1_w"] = u(ks[4], (128, 64, 3, 3), 64 * 9)
    p["ct1_b"] = u(ks[5], (64,), 64 * 9)
    p["ct2_w"] = u(ks[6], (64, 16, 3, 3), 16 * 9)
    p["ct2_b"] = u(ks[7], (16,), 16 * 9)
    p["ct3_w"] = u(ks[8], (16, 1, 3, 3), 1 * 9)
    p["ct3_b"] = u(ks[9], (1,), 1 * 9)

    def bn_init(c):
        return (jnp.ones((c,), jnp.float32),    # gamma
                jnp.zeros((c,), jnp.float32),   # beta
                jnp.zeros((c,), jnp.float32),   # running_mean
                jnp.ones((c,), jnp.float32),    # running_var
                1e-5)
    p["bn1"] = bn_init(64)
    p["bn2"] = bn_init(16)
    return p


def prepare_params(p):
    """One-time transform: flip/flatten conv weights, fold BN + bias, pad to
    lane-dense widths, cast MXU operands to bf16."""
    f32 = jnp.float32

    def fold_conv(w, b, bn):
        cin, cout, k, _ = w.shape
        if bn is not None:
            gamma, beta, mean, var, eps = bn
            scale = gamma / jnp.sqrt(var + eps)
            shift = beta - mean * scale
        else:
            scale = jnp.ones((cout,), f32)
            shift = jnp.zeros((cout,), f32)
        # Equivalent regular-conv weight on the dilated input (flip kernel),
        # K ordering (kh, kw, cin) matches the im2col concat order.
        wflip = w[:, :, ::-1, ::-1]
        wmat = jnp.transpose(wflip, (2, 3, 0, 1)).reshape(k * k * cin, cout)
        wmat = wmat * scale[None, :]
        bvec = b * scale + shift
        n_pad = _round_up(cout, 128)
        wmat = jnp.pad(wmat, ((0, 0), (0, n_pad - cout))).astype(jnp.bfloat16)
        bvec = jnp.pad(bvec, (0, n_pad - cout)).reshape(1, n_pad).astype(f32)
        return wmat, bvec

    q = {}
    # Linear 1: pad latent K (100 -> 128) with zero rows once, here.
    k_in = p["w1"].shape[0]
    k_pad = _round_up(k_in, 128)
    q["w1"] = jnp.pad(p["w1"], ((0, k_pad - k_in), (0, 0))).astype(jnp.bfloat16)
    q["b1"] = p["b1"].reshape(1, -1).astype(f32)
    q["w2"] = p["w2"].astype(jnp.bfloat16)
    q["b2"] = p["b2"].reshape(1, -1).astype(f32)
    q["ct1_w"], q["ct1_b"] = fold_conv(p["ct1_w"], p["ct1_b"], p["bn1"])
    q["ct2_w"], q["ct2_b"] = fold_conv(p["ct2_w"], p["ct2_b"], p["bn2"])
    q["ct3_w"], q["ct3_b"] = fold_conv(p["ct3_w"], p["ct3_b"], None)
    return q


# ----------------------------------------------------------------------------
# Forward pass (jit-able; `q` contains only arrays).
# ----------------------------------------------------------------------------
def deep_generator_forward(x, q):
    # x: (B, latent_dim)
    B, latent = x.shape
    k_pad = q["w1"].shape[0]
    x = jnp.pad(x, ((0, 0), (0, k_pad - latent)))

    # Linear(latent,128)+GELU -> Linear(128,1152)+GELU, one fused kernel.
    # (Dropout = identity in eval mode.)
    h = fused_mlp(x, q["w1"], q["b1"], q["w2"], q["b2"])        # (B, 1152) bf16

    # Unflatten(1, (128, 3, 3)) -> NCHW, then NHWC for the conv path.
    h = jnp.transpose(h.reshape(B, 128, 3, 3), (0, 2, 3, 1))    # (B, 3, 3, 128)

    # ConvTranspose2d(128,64,3,s=2) + BN + GELU                -> (B, 7, 7, 64)
    h = conv_transpose_act(h, q["ct1_w"], q["ct1_b"], 64,
                           stride=2, padding=0, output_padding=0,
                           activation="gelu")
    # ConvTranspose2d(64,16,3,s=2,p=1,op=1) + BN + GELU        -> (B,14,14,16)
    h = conv_transpose_act(h, q["ct2_w"], q["ct2_b"], 16,
                           stride=2, padding=1, output_padding=1,
                           activation="gelu")
    # ConvTranspose2d(16,1,3,s=2,p=1,op=1) + Sigmoid           -> (B,28,28, 1)
    h = conv_transpose_act(h, q["ct3_w"], q["ct3_b"], 1,
                           stride=2, padding=1, output_padding=1,
                           activation="sigmoid", out_dtype=jnp.float32)

    # Back to PyTorch NCHW: (B, 1, 28, 28)
    return jnp.transpose(h, (0, 3, 1, 2))


if __name__ == "__main__":
    key = jax.random.PRNGKey(0)
    k_x, k_p = jax.random.split(key)

    batch, latent_dim = 2, 100
    x = jax.random.normal(k_x, (batch, latent_dim), jnp.float32)

    params = init_params(k_p, latent_dim)
    prepared = prepare_params(params)          # one-time weight fold / pad / cast

    fwd = jax.jit(deep_generator_forward)
    y = fwd(x, prepared)
    y = jax.block_until_ready(y)

    assert y.shape == (batch, 1, 28, 28), y.shape
    assert bool(jnp.all(jnp.isfinite(y)))
    assert bool(jnp.all((y >= 0.0) & (y <= 1.0)))   # sigmoid output range
    print("KERNEL_OK")
</pallas_src>

<mosaic_0001>
module attributes {stable_mosaic.version = 11 : i64} {
  func.func @_mlp_kernel(%arg0: i32, %arg1: memref<16x128xbf16, #tpu.memory_space<vmem>>, %arg2: memref<128x128xbf16, #tpu.memory_space<vmem>>, %arg3: memref<1x128xf32, #tpu.memory_space<vmem>>, %arg4: memref<128x1152xbf16, #tpu.memory_space<vmem>>, %arg5: memref<1x1152xf32, #tpu.memory_space<vmem>>, %arg6: memref<16x1152xbf16, #tpu.memory_space<vmem>>) attributes {dimension_semantics = [#tpu.dimension_semantics<parallel>], iteration_bounds = array<i64: 1>, scalar_prefetch = 0 : i64, scratch_operands = 0 : i64, tpu.core_type = #tpu.core_type<tc>, window_params = [{transform_indices = @transform_0, window_bounds = array<i64: 16, 128>}, {pipeline_mode = #tpu.pipeline_mode<synchronous>, transform_indices = @transform_1, window_bounds = array<i64: 128, 128>}, {pipeline_mode = #tpu.pipeline_mode<synchronous>, transform_indices = @transform_2, window_bounds = array<i64: 1, 128>}, {pipeline_mode = #tpu.pipeline_mode<synchronous>, transform_indices = @transform_3, window_bounds = array<i64: 128, 1152>}, {pipeline_mode = #tpu.pipeline_mode<synchronous>, transform_indices = @transform_4, window_bounds = array<i64: 1, 1152>}, {transform_indices = @transform_5, window_bounds = array<i64: 16, 1152>}]} {
    %c0 = arith.constant 0 : index
    %c0_0 = arith.constant 0 : index
    %0 = vector.load %arg1[%c0, %c0_0] : memref<16x128xbf16, #tpu.memory_space<vmem>>, vector<16x128xbf16>
    %c0_1 = arith.constant 0 : index
    %c0_2 = arith.constant 0 : index
    %1 = vector.load %arg2[%c0_1, %c0_2] : memref<128x128xbf16, #tpu.memory_space<vmem>>, vector<128x128xbf16>
    %cst = arith.constant dense<0.000000e+00> : vector<16x128xf32>
    %2 = tpu.matmul %0, %1, %cst {dimension_numbers = #tpu.dot_dimension_numbers<[1], [0], [0], [1], [0, 0, 1, 1], [], []>} : vector<16x128xbf16>, vector<128x128xbf16>, vector<16x128xf32> -> vector<16x128xf32>
    %c0_3 = arith.constant 0 : index
    %c0_4 = arith.constant 0 : index
    %3 = vector.load %arg3[%c0_3, %c0_4] : memref<1x128xf32, #tpu.memory_space<vmem>>, vector<1x128xf32>
    %4 = vector.broadcast %3 : vector<1x128xf32> to vector<16x128xf32>
    %5 = arith.addf %2, %4 : vector<16x128xf32>
    %cst_5 = arith.constant 5.000000e-01 : f32
    %6 = vector.broadcast %cst_5 : f32 to vector<16x128xf32>
    %7 = arith.mulf %6, %5 : vector<16x128xf32>
    %cst_6 = arith.constant 4.471500e-02 : f32
    %8 = vector.broadcast %cst_6 : f32 to vector<16x128xf32>
    %9 = arith.mulf %8, %5 : vector<16x128xf32>
    %10 = arith.mulf %9, %5 : vector<16x128xf32>
    %11 = arith.mulf %10, %5 : vector<16x128xf32>
    %12 = arith.addf %5, %11 : vector<16x128xf32>
    %cst_7 = arith.constant 0.797884583 : f32
    %13 = vector.broadcast %cst_7 : f32 to vector<16x128xf32>
    %14 = arith.mulf %13, %12 : vector<16x128xf32>
    %15 = math.tanh %14 : vector<16x128xf32>
    %cst_8 = arith.constant 1.000000e+00 : f32
    %16 = vector.broadcast %cst_8 : f32 to vector<16x128xf32>
    %17 = arith.addf %16, %15 : vector<16x128xf32>
    %18 = arith.mulf %7, %17 : vector<16x128xf32>
    %19 = arith.truncf %18 : vector<16x128xf32> to vector<16x128xbf16>
    %c0_9 = arith.constant 0 : index
    %c0_10 = arith.constant 0 : index
    %20 = vector.load %arg4[%c0_9, %c0_10] : memref<128x1152xbf16, #tpu.memory_space<vmem>>, vector<128x1152xbf16>
    %cst_11 = arith.constant dense<0.000000e+00> : vector<16x1152xf32>
    %21 = tpu.matmul %19, %20, %cst_11 {dimension_numbers = #tpu.dot_dimension_numbers<[1], [0], [0], [1], [0, 0, 1, 1], [], []>} : vector<16x128xbf16>, vector<128x1152xbf16>, vector<16x1152xf32> -> vector<16x1152xf32>
    %c0_12 = arith.constant 0 : index
    %c0_13 = arith.constant 0 : index
    %22 = vector.load %arg5[%c0_12, %c0_13] : memref<1x1152xf32, #tpu.memory_space<vmem>>, vector<1x1152xf32>
    %23 = vector.broadcast %22 : vector<1x1152xf32> to vector<16x1152xf32>
    %24 = arith.addf %21, %23 : vector<16x1152xf32>
    %cst_14 = arith.constant 5.000000e-01 : f32
    %25 = vector.broadcast %cst_14 : f32 to vector<16x1152xf32>
    %26 = arith.mulf %25, %24 : vector<16x1152xf32>
    %cst_15 = arith.constant 4.471500e-02 : f32
    %27 = vector.broadcast %cst_15 : f32 to vector<16x1152xf32>
    %28 = arith.mulf %27, %24 : vector<16x1152xf32>
    %29 = arith.mulf %28, %24 : vector<16x1152xf32>
    %30 = arith.mulf %29, %24 : vector<16x1152xf32>
    %31 = arith.addf %24, %30 : vector<16x1152xf32>
    %cst_16 = arith.constant 0.797884583 : f32
    %32 = vector.broadcast %cst_16 : f32 to vector<16x1152xf32>
    %33 = arith.mulf %32, %31 : vector<16x1152xf32>
    %34 = math.tanh %33 : vector<16x1152xf32>
    %cst_17 = arith.constant 1.000000e+00 : f32
    %35 = vector.broadcast %cst_17 : f32 to vector<16x1152xf32>
    %36 = arith.addf %35, %34 : vector<16x1152xf32>
    %37 = arith.mulf %26, %36 : vector<16x1152xf32>
    %38 = arith.truncf %37 : vector<16x1152xf32> to vector<16x1152xbf16>
    %c0_18 = arith.constant 0 : index
    %c0_19 = arith.constant 0 : index
    %39 = vector.load %arg6[%c0_18, %c0_19] : memref<16x1152xbf16, #tpu.memory_space<vmem>>, vector<16x1152xbf16>
    tpu.vector_store %arg6[%c0_18, %c0_19], %38 {strides = array<i32>} : memref<16x1152xbf16, #tpu.memory_space<vmem>>, vector<16x1152xbf16>,
    return
  }
  func.func @transform_0(%arg0: i32) -> (i32, i32) {
    %c0_i32 = arith.constant 0 : i32
    %c0_i32_0 = arith.constant 0 : i32
    return %arg0, %c0_i32 : i32, i32
  }
  func.func @transform_1(%arg0: i32) -> (i32, i32) {
    %c0_i32 = arith.constant 0 : i32
    %c0_i32_0 = arith.constant 0 : i32
    %c0_i32_1 = arith.constant 0 : i32
    return %c0_i32, %c0_i32_0 : i32, i32
  }
  func.func @transform_2(%arg0: i32) -> (i32, i32) {
    %c0_i32 = arith.constant 0 : i32
    %c0_i32_0 = arith.constant 0 : i32
    %c0_i32_1 = arith.constant 0 : i32
    return %c0_i32, %c0_i32_0 : i32, i32
  }
  func.func @transform_3(%arg0: i32) -> (i32, i32) {
    %c0_i32 = arith.constant 0 : i32
    %c0_i32_0 = arith.constant 0 : i32
    %c0_i32_1 = arith.constant 0 : i32
    return %c0_i32, %c0_i32_0 : i32, i32
  }
  func.func @transform_4(%arg0: i32) -> (i32, i32) {
    %c0_i32 = arith.constant 0 : i32
    %c0_i32_0 = arith.constant 0 : i32
    %c0_i32_1 = arith.constant 0 : i32
    return %c0_i32, %c0_i32_0 : i32, i32
  }
  func.func @transform_5(%arg0: i32) -> (i32, i32) {
    %c0_i32 = arith.constant 0 : i32
    %c0_i32_0 = arith.constant 0 : i32
    return %arg0, %c0_i32 : i32, i32
  }
}

module attributes {stable_mosaic.version = 11 : i64} {
  func.func @_matmul_act_kernel(%arg0: i32, %arg1: memref<64x1152xbf16, #tpu.memory_space<vmem>>, %arg2: memref<1152x128xbf16, #tpu.memory_space<vmem>>, %arg3: memref<1x128xf32, #tpu.memory_space<vmem>>, %arg4: memref<64x128xbf16, #tpu.memory_space<vmem>>) attributes {dimension_semantics = [#tpu.dimension_semantics<parallel>], iteration_bounds = array<i64: 2>, scalar_prefetch = 0 : i64, scratch_operands = 0 : i64, tpu.core_type = #tpu.core_type<tc>, window_params = [{transform_indices = @transform_0, window_bounds = array<i64: 64, 1152>}, {pipeline_mode = #tpu.pipeline_mode<synchronous>, transform_indices = @transform_1, window_bounds = array<i64: 1152, 128>}, {pipeline_mode = #tpu.pipeline_mode<synchronous>, transform_indices = @transform_2, window_bounds = array<i64: 1, 128>}, {transform_indices = @transform_3, window_bounds = array<i64: 64, 128>}]} {
    %c0 = arith.constant 0 : index
    %c0_0 = arith.constant 0 : index
    %0 = vector.load %arg1[%c0, %c0_0] : memref<64x1152xbf16, #tpu.memory_space<vmem>>, vector<64x1152xbf16>
    %c0_1 = arith.constant 0 : index
    %c0_2 = arith.constant 0 : index
    %1 = vector.load %arg2[%c0_1, %c0_2] : memref<1152x128xbf16, #tpu.memory_space<vmem>>, vector<1152x128xbf16>
    %cst = arith.constant dense<0.000000e+00> : vector<64x128xf32>
    %2 = tpu.matmul %0, %1, %cst {dimension_numbers = #tpu.dot_dimension_numbers<[1], [0], [0], [1], [0, 0, 1, 1], [], []>} : vector<64x1152xbf16>, vector<1152x128xbf16>, vector<64x128xf32> -> vector<64x128xf32>
    %c0_3 = arith.constant 0 : index
    %c0_4 = arith.constant 0 : index
    %3 = vector.load %arg3[%c0_3, %c0_4] : memref<1x128xf32, #tpu.memory_space<vmem>>, vector<1x128xf32>
    %4 = vector.broadcast %3 : vector<1x128xf32> to vector<64x128xf32>
    %5 = arith.addf %2, %4 : vector<64x128xf32>
    %cst_5 = arith.constant 5.000000e-01 : f32
    %6 = vector.broadcast %cst_5 : f32 to vector<64x128xf32>
    %7 = arith.mulf %6, %5 : vector<64x128xf32>
    %cst_6 = arith.constant 4.471500e-02 : f32
    %8 = vector.broadcast %cst_6 : f32 to vector<64x128xf32>
    %9 = arith.mulf %8, %5 : vector<64x128xf32>
    %10 = arith.mulf %9, %5 : vector<64x128xf32>
    %11 = arith.mulf %10, %5 : vector<64x128xf32>
    %12 = arith.addf %5, %11 : vector<64x128xf32>
    %cst_7 = arith.constant 0.797884583 : f32
    %13 = vector.broadcast %cst_7 : f32 to vector<64x128xf32>
    %14 = arith.mulf %13, %12 : vector<64x128xf32>
    %15 = math.tanh %14 : vector<64x128xf32>
    %cst_8 = arith.constant 1.000000e+00 : f32
    %16 = vector.broadcast %cst_8 : f32 to vector<64x128xf32>
    %17 = arith.addf %16, %15 : vector<64x128xf32>
    %18 = arith.mulf %7, %17 : vector<64x128xf32>
    %19 = arith.truncf %18 : vector<64x128xf32> to vector<64x128xbf16>
    %c0_9 = arith.constant 0 : index
    %c0_10 = arith.constant 0 : index
    %20 = vector.load %arg4[%c0_9, %c0_10] : memref<64x128xbf16, #tpu.memory_space<vmem>>, vector<64x128xbf16>
    tpu.vector_store %arg4[%c0_9, %c0_10], %19 {strides = array<i32>} : memref<64x128xbf16, #tpu.memory_space<vmem>>, vector<64x128xbf16>,
    return
  }
  func.func @transform_0(%arg0: i32) -> (i32, i32) {
    %c0_i32 = arith.constant 0 : i32
    %c0_i32_0 = arith.constant 0 : i32
    return %arg0, %c0_i32 : i32, i32
  }
  func.func @transform_1(%arg0: i32) -> (i32, i32) {
    %c0_i32 = arith.constant 0 : i32
    %c0_i32_0 = arith.constant 0 : i32
    %c0_i32_1 = arith.constant 0 : i32
    return %c0_i32, %c0_i32_0 : i32, i32
  }
  func.func @transform_2(%arg0: i32) -> (i32, i32) {
    %c0_i32 = arith.constant 0 : i32
    %c0_i32_0 = arith.constant 0 : i32
    %c0_i32_1 = arith.constant 0 : i32
    return %c0_i32, %c0_i32_0 : i32, i32
  }
  func.func @transform_3(%arg0: i32) -> (i32, i32) {
    %c0_i32 = arith.constant 0 : i32
    %c0_i32_0 = arith.constant 0 : i32
    return %arg0, %c0_i32 : i32, i32
  }
}

module attributes {stable_mosaic.version = 11 : i64} {
  func.func @_matmul_act_kernel(%arg0: i32, %arg1: memref<208x576xbf16, #tpu.memory_space<vmem>>, %arg2: memref<576x128xbf16, #tpu.memory_space<vmem>>, %arg3: memref<1x128xf32, #tpu.memory_space<vmem>>, %arg4: memref<208x128xbf16, #tpu.memory_space<vmem>>) attributes {dimension_semantics = [#tpu.dimension_semantics<parallel>], iteration_bounds = array<i64: 2>, scalar_prefetch = 0 : i64, scratch_operands = 0 : i64, tpu.core_type = #tpu.core_type<tc>, window_params = [{transform_indices = @transform_0, window_bounds = array<i64: 208, 576>}, {pipeline_mode = #tpu.pipeline_mode<synchronous>, transform_indices = @transform_1, window_bounds = array<i64: 576, 128>}, {pipeline_mode = #tpu.pipeline_mode<synchronous>, transform_indices = @transform_2, window_bounds = array<i64: 1, 128>}, {transform_indices = @transform_3, window_bounds = array<i64: 208, 128>}]} {
    %c0 = arith.constant 0 : index
    %c0_0 = arith.constant 0 : index
    %0 = vector.load %arg1[%c0, %c0_0] : memref<208x576xbf16, #tpu.memory_space<vmem>>, vector<208x576xbf16>
    %c0_1 = arith.constant 0 : index
    %c0_2 = arith.constant 0 : index
    %1 = vector.load %arg2[%c0_1, %c0_2] : memref<576x128xbf16, #tpu.memory_space<vmem>>, vector<576x128xbf16>
    %cst = arith.constant dense<0.000000e+00> : vector<208x128xf32>
    %2 = tpu.matmul %0, %1, %cst {dimension_numbers = #tpu.dot_dimension_numbers<[1], [0], [0], [1], [0, 0, 1, 1], [], []>} : vector<208x576xbf16>, vector<576x128xbf16>, vector<208x128xf32> -> vector<208x128xf32>
    %c0_3 = arith.constant 0 : index
    %c0_4 = arith.constant 0 : index
    %3 = vector.load %arg3[%c0_3, %c0_4] : memref<1x128xf32, #tpu.memory_space<vmem>>, vector<1x128xf32>
    %4 = vector.broadcast %3 : vector<1x128xf32> to vector<208x128xf32>
    %5 = arith.addf %2, %4 : vector<208x128xf32>
    %cst_5 = arith.constant 5.000000e-01 : f32
    %6 = vector.broadcast %cst_5 : f32 to vector<208x128xf32>
    %7 = arith.mulf %6, %5 : vector<208x128xf32>
    %cst_6 = arith.constant 4.471500e-02 : f32
    %8 = vector.broadcast %cst_6 : f32 to vector<208x128xf32>
    %9 = arith.mulf %8, %5 : vector<208x128xf32>
    %10 = arith.mulf %9, %5 : vector<208x128xf32>
    %11 = arith.mulf %10, %5 : vector<208x128xf32>
    %12 = arith.addf %5, %11 : vector<208x128xf32>
    %cst_7 = arith.constant 0.797884583 : f32
    %13 = vector.broadcast %cst_7 : f32 to vector<208x128xf32>
    %14 = arith.mulf %13, %12 : vector<208x128xf32>
    %15 = math.tanh %14 : vector<208x128xf32>
    %cst_8 = arith.constant 1.000000e+00 : f32
    %16 = vector.broadcast %cst_8 : f32 to vector<208x128xf32>
    %17 = arith.addf %16, %15 : vector<208x128xf32>
    %18 = arith.mulf %7, %17 : vector<208x128xf32>
    %19 = arith.truncf %18 : vector<208x128xf32> to vector<208x128xbf16>
    %c0_9 = arith.constant 0 : index
    %c0_10 = arith.constant 0 : index
    %20 = vector.load %arg4[%c0_9, %c0_10] : memref<208x128xbf16, #tpu.memory_space<vmem>>, vector<208x128xbf16>
    tpu.vector_store %arg4[%c0_9, %c0_10], %19 {strides = array<i32>} : memref<208x128xbf16, #tpu.memory_space<vmem>>, vector<208x128xbf16>,
    return
  }
  func.func @transform_0(%arg0: i32) -> (i32, i32) {
    %c0_i32 = arith.constant 0 : i32
    %c0_i32_0 = arith.constant 0 : i32
    return %arg0, %c0_i32 : i32, i32
  }
  func.func @transform_1(%arg0: i32) -> (i32, i32) {
    %c0_i32 = arith.constant 0 : i32
    %c0_i32_0 = arith.constant 0 : i32
    %c0_i32_1 = arith.constant 0 : i32
    return %c0_i32, %c0_i32_0 : i32, i32
  }
  func.func @transform_2(%arg0: i32) -> (i32, i32) {
    %c0_i32 = arith.constant 0 : i32
    %c0_i32_0 = arith.constant 0 : i32
    %c0_i32_1 = arith.constant 0 : i32
    return %c0_i32, %c0_i32_0 : i32, i32
  }
  func.func @transform_3(%arg0: i32) -> (i32, i32) {
    %c0_i32 = arith.constant 0 : i32
    %c0_i32_0 = arith.constant 0 : i32
    return %arg0, %c0_i32 : i32, i32
  }
}

module attributes {stable_mosaic.version = 11 : i64} {
  func.func @_matmul_act_kernel(%arg0: i32, %arg1: memref<400x144xbf16, #tpu.memory_space<vmem>>, %arg2: memref<144x128xbf16, #tpu.memory_space<vmem>>, %arg3: memref<1x128xf32, #tpu.memory_space<vmem>>, %arg4: memref<400x128xf32, #tpu.memory_space<vmem>>) attributes {dimension_semantics = [#tpu.dimension_semantics<parallel>], iteration_bounds = array<i64: 4>, scalar_prefetch = 0 : i64, scratch_operands = 0 : i64, tpu.core_type = #tpu.core_type<tc>, window_params = [{transform_indices = @transform_0, window_bounds = array<i64: 400, 144>}, {pipeline_mode = #tpu.pipeline_mode<synchronous>, transform_indices = @transform_1, window_bounds = array<i64: 144, 128>}, {pipeline_mode = #tpu.pipeline_mode<synchronous>, transform_indices = @transform_2, window_bounds = array<i64: 1, 128>}, {transform_indices = @transform_3, window_bounds = array<i64: 400, 128>}]} {
    %c0 = arith.constant 0 : index
    %c0_0 = arith.constant 0 : index
    %0 = vector.load %arg1[%c0, %c0_0] : memref<400x144xbf16, #tpu.memory_space<vmem>>, vector<400x144xbf16>
    %c0_1 = arith.constant 0 : index
    %c0_2 = arith.constant 0 : index
    %1 = vector.load %arg2[%c0_1, %c0_2] : memref<144x128xbf16, #tpu.memory_space<vmem>>, vector<144x128xbf16>
    %cst = arith.constant dense<0.000000e+00> : vector<400x128xf32>
    %2 = tpu.matmul %0, %1, %cst {dimension_numbers = #tpu.dot_dimension_numbers<[1], [0], [0], [1], [0, 0, 1, 1], [], []>} : vector<400x144xbf16>, vector<144x128xbf16>, vector<400x128xf32> -> vector<400x128xf32>
    %c0_3 = arith.constant 0 : index
    %c0_4 = arith.constant 0 : index
    %3 = vector.load %arg3[%c0_3, %c0_4] : memref<1x128xf32, #tpu.memory_space<vmem>>, vector<1x128xf32>
    %4 = vector.broadcast %3 : vector<1x128xf32> to vector<400x128xf32>
    %5 = arith.addf %2, %4 : vector<400x128xf32>
    %6 = arith.negf %5 : vector<400x128xf32>
    %7 = math.exp %6 : vector<400x128xf32>
    %cst_5 = arith.constant 1.000000e+00 : f32
    %8 = vector.broadcast %cst_5 : f32 to vector<400x128xf32>
    %9 = arith.addf %8, %7 : vector<400x128xf32>
    %10 = arith.divf %8, %9 : vector<400x128xf32>
    %c0_6 = arith.constant 0 : index
    %c0_7 = arith.constant 0 : index
    %11 = vector.load %arg4[%c0_6, %c0_7] : memref<400x128xf32, #tpu.memory_space<vmem>>, vector<400x128xf32>
    tpu.vector_store %arg4[%c0_6, %c0_7], %10 {strides = array<i32>} : memref<400x128xf32, #tpu.memory_space<vmem>>, vector<400x128xf32>,
    return
  }
  func.func @transform_0(%arg0: i32) -> (i32, i32) {
    %c0_i32 = arith.constant 0 : i32
    %c0_i32_0 = arith.constant 0 : i32
    return %arg0, %c0_i32 : i32, i32
  }
  func.func @transform_1(%arg0: i32) -> (i32, i32) {
    %c0_i32 = arith.constant 0 : i32
    %c0_i32_0 = arith.constant 0 : i32
    %c0_i32_1 = arith.constant 0 : i32
    return %c0_i32, %c0_i32_0 : i32, i32
  }
  func.func @transform_2(%arg0: i32) -> (i32, i32) {
    %c0_i32 = arith.constant 0 : i32
    %c0_i32_0 = arith.constant 0 : i32
    %c0_i32_1 = arith.constant 0 : i32
    return %c0_i32, %c0_i32_0 : i32, i32
  }
  func.func @transform_3(%arg0: i32) -> (i32, i32) {
    %c0_i32 = arith.constant 0 : i32
    %c0_i32_0 = arith.constant 0 : i32
    return %arg0, %c0_i32 : i32, i32
  }
}

</mosaic_0001>

<llo_original>
// kernel: deep_generator_forward.4
$region0: #{deep_generator_forward.4}
  #allocation0 [shape = 'u32[]', space=smem, size = 0x4, offset = 0x4, fixed_abs, tag = 'smem constant byte address 0x4 - core index']
  #allocation1 [shape = 'u32[144,128]{1,0:T(1,128)}', space=vmem, size = 0x12000, scoped, tag = 'internal scratch']
  %s0 = inlined_call_operand.vmem [shape: bf16[16,128], index: 0, kind: input, shape index: {}]
  %s1 = inlined_call_operand.vmem [shape: bf16[128,128], index: 1, kind: input, shape index: {}]
  %s2 = inlined_call_operand.vmem [shape: f32[1,128], index: 2, kind: input, shape index: {}]
  %s3 = inlined_call_operand.hbm [shape: bf16[128,1152], index: 3, kind: input, shape index: {}]
  %s4 = inlined_call_operand.vmem [shape: f32[1,1152], index: 4, kind: input, shape index: {}]
  %s5 = inlined_call_operand.vmem [shape: bf16[16,1152], index: 5, kind: output, shape index: {}]
  %s6 = sld [smem:[#allocation0]]
  $region34: #{deep_generator_forward.4} parent=0
    _
  %s8 = ssub.s32 1, %s6
  %s9 = scalar_select 0, %s8, %s6
  $region1: #{deep_generator_forward.4} parent=0
    #allocation2 [shape = 'u8[294912]{0}', space=vmem, size = 0x48000, scoped, tag = 'input window, operand 3, single buffered']
    #allocation3 [shape = 's32[1]{0}', space=sflag, size = 0x4, scoped, tag = 'scoped memory for deep_generator_forward.4']
    %10 = vsyncpa [#allocation3], 0
    // Predicated region
    $region2: #{deep_generator_forward.4} parent=1 // pred_check
      _
    $region3: #{deep_generator_forward.4} parent=1 // pred_check_branch
      %12 = sbr.rel (0) target = $region5
    $region4: #{deep_generator_forward.4} parent=1 // pred_region
      _
    $region5: #{deep_generator_forward.4} parent=1 // pred_fallthru
      _
    // Predicated region
    $region6: #{deep_generator_forward.4} parent=1 // pred_check
      _
    $region7: #{deep_generator_forward.4} parent=1 // pred_check_branch
      %14 = sbr.rel (0) target = $region9
    $region8: #{deep_generator_forward.4} parent=1 // pred_region
      _
    $region9: #{deep_generator_forward.4} parent=1 // pred_fallthru
      _
    // Predicated region
    $region10: #{deep_generator_forward.4} parent=1 // pred_check
      _
    $region11: #{deep_generator_forward.4} parent=1 // pred_check_branch
      %16 = sbr.rel (0) target = $region13
    $region12: #{deep_generator_forward.4} parent=1 // pred_region
      _
    $region13: #{deep_generator_forward.4} parent=1 // pred_fallthru
      _
    // Predicated region
    $region14: #{deep_generator_forward.4} parent=1 // pred_check
      _
    $region15: #{deep_generator_forward.4} parent=1 // pred_check_branch
      %18 = sbr.rel (0) target = $region17
    $region16: #{deep_generator_forward.4} parent=1 // pred_region
      %s20 = ssub.s32 9216, 9216
      %21 = vsyncadd [#allocation3], %s20
      %s22 = sshll.u32 [#allocation2], 4
      %s23 = int_to_ptr.vmem [resolvable:$true] %s22
      %28 = dma.hbm_to_vmem [thread:$0]  %s3, 9216, %s23, [#allocation3], 576, 576, 36
    $region17: #{deep_generator_forward.4} parent=1 // pred_fallthru
      _
    // Predicated region
    $region18: #{deep_generator_forward.4} parent=1 // pred_check
      _
    $region19: #{deep_generator_forward.4} parent=1 // pred_check_branch
      %30 = sbr.rel (0) target = $region21
    $region20: #{deep_generator_forward.4} parent=1 // pred_region
      _
    $region21: #{deep_generator_forward.4} parent=1 // pred_fallthru
      _
    // Predicated region
    $region22: #{deep_generator_forward.4} parent=1 // pred_check
      _
    $region23: #{deep_generator_forward.4} parent=1 // pred_check_branch
      %32 = sbr.rel (0) target = $region25
    $region24: #{deep_generator_forward.4} parent=1 // pred_region
      %33 = dma.done [#allocation3], 9216
    $region25: #{deep_generator_forward.4} parent=1 // pred_fallthru
      _
    %v35 = vld [vmem:[%s0] sm:$0xf]
    %v36 = vld [vmem:[%s0 + $0x4] sm:$0xf]
    %v37 = vld [vmem:[%s1] sm:$0xf]
    %v38 = vld [vmem:[%s1 + $0x4] sm:$0xf]
    %v39 = vld [vmem:[%s1 + $0x8] sm:$0xf]
    %v40 = vld [vmem:[%s1 + $0xc] sm:$0xf]
    %v41 = vld [vmem:[%s1 + $0x10] sm:$0xf]
    %v42 = vld [vmem:[%s1 + $0x14] sm:$0xf]
    %v43 = vld [vmem:[%s1 + $0x18] sm:$0xf]
    %v44 = vld [vmem:[%s1 + $0x1c] sm:$0xf]
    %v45 = vld [vmem:[%s1 + $0x20] sm:$0xf]
    %v46 = vld [vmem:[%s1 + $0x24] sm:$0xf]
    %v47 = vld [vmem:[%s1 + $0x28] sm:$0xf]
    %v48 = vld [vmem:[%s1 + $0x2c] sm:$0xf]
    %v49 = vld [vmem:[%s1 + $0x30] sm:$0xf]
    %v50 = vld [vmem:[%s1 + $0x34] sm:$0xf]
    %v51 = vld [vmem:[%s1 + $0x38] sm:$0xf]
    %v52 = vld [vmem:[%s1 + $0x3c] sm:$0xf]
    %v53 = vld [vmem:[%s2] sm:$0x1]
    %v55 = vlaneseq
    %v56 = vshrl.u32 %v55, 7
    %v57 = vsub.s32 0, %v56
    %v58 = vrot.slane %v53, %v57
    %v62 = vunpack.c.l.b16 %v35
    %v63 = vunpack.c.l.b16 %v36
    %v64 = vpack.c.b16 %v63, %v62
    %v82 = vunpack.c.l.b16 %v37
    %v83 = vunpack.c.l.b16 %v38
    %v84 = vunpack.c.l.b16 %v39
    %v85 = vunpack.c.l.b16 %v40
    %v86 = vunpack.c.l.b16 %v41
    %v87 = vunpack.c.l.b16 %v42
    %v88 = vunpack.c.l.b16 %v43
    %v89 = vunpack.c.l.b16 %v44
    %v90 = vunpack.c.l.b16 %v45
    %v91 = vunpack.c.l.b16 %v46
    %v92 = vunpack.c.l.b16 %v47
    %v93 = vunpack.c.l.b16 %v48
    %v94 = vunpack.c.l.b16 %v49
    %v95 = vunpack.c.l.b16 %v50
    %v96 = vunpack.c.l.b16 %v51
    %v97 = vunpack.c.l.b16 %v52
    %v98 = vpack.c.b16 %v83, %v82
    %v99 = vpack.c.b16 %v85, %v84
    %v100 = vpack.c.b16 %v87, %v86
    %v101 = vpack.c.b16 %v89, %v88
    %v102 = vpack.c.b16 %v91, %v90
    %v103 = vpack.c.b16 %v93, %v92
    %v104 = vpack.c.b16 %v95, %v94
    %v105 = vpack.c.b16 %v97, %v96
    %114 = vmatprep.subr.bf16.mxu0 0
    %115 = vmatpush1.bf16.msra.mxu0 %v98
    %116 = vmatprep.subr.bf16.mxu0 0
    %117 = vmatpush1.bf16.msra.mxu0 %v99
    %118 = vmatprep.subr.bf16.mxu0 0
    %119 = vmatpush1.bf16.msra.mxu0 %v100
    %120 = vmatprep.subr.bf16.mxu0 0
    %121 = vmatpush1.bf16.msra.mxu0 %v101
    %122 = vmatprep.subr.bf16.mxu0 0
    %123 = vmatpush1.bf16.msra.mxu0 %v102
    %124 = vmatprep.subr.bf16.mxu0 0
    %125 = vmatpush1.bf16.msra.mxu0 %v103
    %126 = vmatprep.subr.bf16.mxu0 0
    %127 = vmatpush1.bf16.msra.mxu0 %v104
    %128 = vmatprep.subr.bf16.mxu0 0
    %129 = vmatpush1.bf16.msra.mxu0 %v105
    %130 = vmatprep.subr.bf16.mxu0 0
    %131 = vmatpush1.bf16.msra.mxu0 0
    %132 = vmatprep.subr.bf16.mxu0 0
    %133 = vmatpush1.bf16.msra.mxu0 0
    %134 = vmatprep.subr.bf16.mxu0 0
    %135 = vmatpush1.bf16.msra.mxu0 0
    %136 = vmatprep.subr.bf16.mxu0 0
    %137 = vmatpush1.bf16.msra.mxu0 0
    %138 = vmatprep.subr.bf16.mxu0 0
    %139 = vmatpush1.bf16.msra.mxu0 0
    %140 = vmatprep.subr.bf16.mxu0 0
    %141 = vmatpush1.bf16.msra.mxu0 0
    %142 = vmatprep.subr.bf16.mxu0 0
    %143 = vmatpush1.bf16.msra.mxu0 0
    %144 = vmatprep.subr.bf16.mxu0 0
    %145 = vmatpush1.bf16.msra.mxu0 0
    %146 = vmatprep.mubr.bf16.mxu0 0
    %147 = vmatmul.mubr.bf16.gmra.mrb[0].mxu0 %v64
    %v148 = vpop.f32.mrb[0].mxu0
    %v149 = vadd.f32 %v58, %v148
    %v150 = vpop.f32.mrb[0].mxu0
    %v151 = vpop.f32.mrb[0].mxu0
    %v152 = vadd.f32 %v58, %v151
    %v153 = vpop.f32.mrb[0].mxu0
    %154 = vdwg.mxu0
    %v155 = vmul.f32 %v149, 0.5
    %v156 = vmul.f32 %v152, 0.5
    %v157 = vmul.f32 %v149, 0.044715
    %v158 = vmul.f32 %v152, 0.044715
    %v159 = vmul.f32 %v157, %v149
    %v160 = vmul.f32 %v158, %v152
    %v161 = vmul.f32 %v159, %v149
    %v162 = vmul.f32 %v160, %v152
    %v163 = vadd.f32 %v149, %v161
    %v164 = vadd.f32 %v152, %v162
    %v165 = vmul.f32 %v163, 0.7978846
    %v166 = vmul.f32 %v164, 0.7978846
    %v167 = vtanh.pop %v165
    %v168 = vtanh.pop %v166
    %v169 = vadd.f32 %v167, 1.0
    %v170 = vadd.f32 %v168, 1.0
    %v171 = vmul.f32 %v155, %v169
    %v172 = vmul.f32 %v156, %v170
    %v173 = vpack.c.bf16 %v172, %v171
    %v174 = vld [vmem:[#allocation2] sm:$0xff]
    %v175 = vld [vmem:[#allocation2 + $0x8] sm:$0xff]
    %v176 = vld [vmem:[#allocation2 + $0x10] sm:$0xff]
    %v177 = vld [vmem:[#allocation2 + $0x18] sm:$0xff]
    %v178 = vld [vmem:[#allocation2 + $0x20] sm:$0xf]
    %v179 = vld [vmem:[#allocation2 + $0x24] sm:$0xff]
    %v180 = vld [vmem:[#allocation2 + $0x2c] sm:$0xff]
    %v181 = vld [vmem:[#allocation2 + $0x34] sm:$0xff]
    %v182 = vld [vmem:[#allocation2 + $0x3c] sm:$0xff]
    %v183 = vld [vmem:[#allocation2 + $0x44] sm:$0xf]
    %v184 = vld [vmem:[#allocation2 + $0x48] sm:$0xff]
    %v185 = vld [vmem:[#allocation2 + $0x50] sm:$0xff]
    %v186 = vld [vmem:[#allocation2 + $0x58] sm:$0xff]
    %v187 = vld [vmem:[#allocation2 + $0x60] sm:$0xff]
    %v188 = vld [vmem:[#allocation2 + $0x68] sm:$0xf]
    %v189 = vld [vmem:[#allocation2 + $0x6c] sm:$0xff]
    %v190 = vld [vmem:[#allocation2 + $0x74] sm:$0xff]
    %v191 = vld [vmem:[#allocation2 + $0x7c] sm:$0xff]
    %v192 = vld [vmem:[#allocation2 + $0x84] sm:$0xff]
    %v193 = vld [vmem:[#allocation2 + $0x8c] sm:$0xf]
    %v194 = vld [vmem:[#allocation2 + $0x90] sm:$0xff]
    %v195 = vld [vmem:[#allocation2 + $0x98] sm:$0xff]
    %v196 = vld [vmem:[#allocation2 + $0xa0] sm:$0xff]
    %v197 = vld [vmem:[#allocation2 + $0xa8] sm:$0xff]
    %v198 = vld [vmem:[#allocation2 + $0xb0] sm:$0xf]
    %v199 = vld [vmem:[#allocation2 + $0xb4] sm:$0xff]
    %v200 = vld [vmem:[#allocation2 + $0xbc] sm:$0xff]
    %v201 = vld [vmem:[#allocation2 + $0xc4] sm:$0xff]
    %v202 = vld [vmem:[#allocation2 + $0xcc] sm:$0xff]
    %v203 = vld [vmem:[#allocation2 + $0xd4] sm:$0xf]
    %v204 = vld [vmem:[#allocation2 + $0xd8] sm:$0xff]
    %v205 = vld [vmem:[#allocation2 + $0xe0] sm:$0xff]
    %v206 = vld [vmem:[#allocation2 + $0xe8] sm:$0xff]
    %v207 = vld [vmem:[#allocation2 + $0xf0] sm:$0xff]
    %v208 = vld [vmem:[#allocation2 + $0xf8] sm:$0xf]
    %v209 = vld [vmem:[#allocation2 + $0xfc] sm:$0xff]
    %v210 = vld [vmem:[#allocation2 + $0x104] sm:$0xff]
    %v211 = vld [vmem:[#allocation2 + $0x10c] sm:$0xff]
    %v212 = vld [vmem:[#allocation2 + $0x114] sm:$0xff]
    %v213 = vld [vmem:[#allocation2 + $0x11c] sm:$0xf]
    %v214 = vld [vmem:[#allocation2 + $0x120] sm:$0xff]
    %v215 = vld [vmem:[#allocation2 + $0x128] sm:$0xff]
    %v216 = vld [vmem:[#allocation2 + $0x130] sm:$0xff]
    %v217 = vld [vmem:[#allocation2 + $0x138] sm:$0xff]
    %v218 = vld [vmem:[#allocation2 + $0x140] sm:$0xf]
    %v219 = vld [vmem:[#allocation2 + $0x144] sm:$0xff]
    %v220 = vld [vmem:[#allocation2 + $0x14c] sm:$0xff]
    %v221 = vld [vmem:[#allocation2 + $0x154] sm:$0xff]
    %v222 = vld [vmem:[#allocation2 + $0x15c] sm:$0xff]
    %v223 = vld [vmem:[#allocation2 + $0x164] sm:$0xf]
    %v224 = vld [vmem:[#allocation2 + $0x168] sm:$0xff]
    %v225 = vld [vmem:[#allocation2 + $0x170] sm:$0xff]
    %v226 = vld [vmem:[#allocation2 + $0x178] sm:$0xff]
    %v227 = vld [vmem:[#allocation2 + $0x180] sm:$0xff]
    %v228 = vld [vmem:[#allocation2 + $0x188] sm:$0xf]
    %v229 = vld [vmem:[#allocation2 + $0x18c] sm:$0xff]
    %v230 = vld [vmem:[#allocation2 + $0x194] sm:$0xff]
    %v231 = vld [vmem:[#allocation2 + $0x19c] sm:$0xff]
    %v232 = vld [vmem:[#allocation2 + $0x1a4] sm:$0xff]
    %v233 = vld [vmem:[#allocation2 + $0x1ac] sm:$0xf]
    %v234 = vld [vmem:[#allocation2 + $0x1b0] sm:$0xff]
    %v235 = vld [vmem:[#allocation2 + $0x1b8] sm:$0xff]
    %v236 = vld [vmem:[#allocation2 + $0x1c0] sm:$0xff]
    %v237 = vld [vmem:[#allocation2 + $0x1c8] sm:$0xff]
    %v238 = vld [vmem:[#allocation2 + $0x1d0] sm:$0xf]
    %v239 = vld [vmem:[#allocation2 + $0x1d4] sm:$0xff]
    %v240 = vld [vmem:[#allocation2 + $0x1dc] sm:$0xff]
    %v241 = vld [vmem:[#allocation2 + $0x1e4] sm:$0xff]
    %v242 = vld [vmem:[#allocation2 + $0x1ec] sm:$0xff]
    %v243 = vld [vmem:[#allocation2 + $0x1f4] sm:$0xf]
    %v244 = vld [vmem:[#allocation2 + $0x1f8] sm:$0xff]
    %v245 = vld [vmem:[#allocation2 + $0x200] sm:$0xff]
    %v246 = vld [vmem:[#allocation2 + $0x208] sm:$0xff]
    %v247 = vld [vmem:[#allocation2 + $0x210] sm:$0xff]
    %v248 = vld [vmem:[#allocation2 + $0x218] sm:$0xf]
    %v249 = vld [vmem:[#allocation2 + $0x21c] sm:$0xff]
    %v250 = vld [vmem:[#allocation2 + $0x224] sm:$0xff]
    %v251 = vld [vmem:[#allocation2 + $0x22c] sm:$0xff]
    %v252 = vld [vmem:[#allocation2 + $0x234] sm:$0xff]
    %v253 = vld [vmem:[#allocation2 + $0x23c] sm:$0xf]
    %v254 = vld [vmem:[%s4] sm:$0xff]
    %v255 = vld [vmem:[%s4 + $0x8] sm:$0x1]
    %v258 = vlaneseq
    %v259 = vshrl.u32 %v258, 7
    %v260 = vsub.s32 0, %v259
    %v261 = vrot.slane %v254, %v260
    %v262 = vlaneseq
    %v263 = vshrl.u32 %v262, 7
    %v264 = vsub.s32 1, %v263
    %v265 = vrot.slane %v254, %v264
    %v266 = vlaneseq
    %v267 = vshrl.u32 %v266, 7
    %v268 = vsub.s32 2, %v267
    %v269 = vrot.slane %v254, %v268
    %v270 = vlaneseq
    %v271 = vshrl.u32 %v270, 7
    %v272 = vsub.s32 3, %v271
    %v273 = vrot.slane %v254, %v272
    %v274 = vlaneseq
    %v275 = vshrl.u32 %v274, 7
    %v276 = vsub.s32 4, %v275
    %v277 = vrot.slane %v254, %v276
    %v278 = vlaneseq
    %v279 = vshrl.u32 %v278, 7
    %v280 = vsub.s32 5, %v279
    %v281 = vrot.slane %v254, %v280
    %v282 = vlaneseq
    %v283 = vshrl.u32 %v282, 7
    %v284 = vsub.s32 6, %v283
    %v285 = vrot.slane %v254, %v284
    %v286 = vlaneseq
    %v287 = vshrl.u32 %v286, 7
    %v288 = vsub.s32 7, %v287
    %v289 = vrot.slane %v254, %v288
    %v290 = vlaneseq
    %v291 = vshrl.u32 %v290, 7
    %v292 = vsub.s32 0, %v291
    %v293 = vrot.slane %v255, %v292
    %v383 = vunpack.c.l.b16 %v174
    %v384 = vunpack.c.h.b16 %v174
    %v385 = vunpack.c.l.b16 %v175
    %v386 = vunpack.c.h.b16 %v175
    %v387 = vunpack.c.l.b16 %v176
    %v388 = vunpack.c.h.b16 %v176
    %v389 = vunpack.c.l.b16 %v177
    %v390 = vunpack.c.h.b16 %v177
    %v391 = vunpack.c.l.b16 %v178
    %v392 = vunpack.c.l.b16 %v179
    %v393 = vunpack.c.h.b16 %v179
    %v394 = vunpack.c.l.b16 %v180
    %v395 = vunpack.c.h.b16 %v180
    %v396 = vunpack.c.l.b16 %v181
    %v397 = vunpack.c.h.b16 %v181
    %v398 = vunpack.c.l.b16 %v182
    %v399 = vunpack.c.h.b16 %v182
    %v400 = vunpack.c.l.b16 %v183
    %v401 = vunpack.c.l.b16 %v184
    %v402 = vunpack.c.h.b16 %v184
    %v403 = vunpack.c.l.b16 %v185
    %v404 = vunpack.c.h.b16 %v185
    %v405 = vunpack.c.l.b16 %v186
    %v406 = vunpack.c.h.b16 %v186
    %v407 = vunpack.c.l.b16 %v187
    %v408 = vunpack.c.h.b16 %v187
    %v409 = vunpack.c.l.b16 %v188
    %v410 = vunpack.c.l.b16 %v189
    %v411 = vunpack.c.h.b16 %v189
    %v412 = vunpack.c.l.b16 %v190
    %v413 = vunpack.c.h.b16 %v190
    %v414 = vunpack.c.l.b16 %v191
    %v415 = vunpack.c.h.b16 %v191
    %v416 = vunpack.c.l.b16 %v192
    %v417 = vunpack.c.h.b16 %v192
    %v418 = vunpack.c.l.b16 %v193
    %v419 = vunpack.c.l.b16 %v194
    %v420 = vunpack.c.h.b16 %v194
    %v421 = vunpack.c.l.b16 %v195
    %v422 = vunpack.c.h.b16 %v195
    %v423 = vunpack.c.l.b16 %v196
    %v424 = vunpack.c.h.b16 %v196
    %v425 = vunpack.c.l.b16 %v197
    %v426 = vunpack.c.h.b16 %v197
    %v427 = vunpack.c.l.b16 %v198
    %v428 = vunpack.c.l.b16 %v199
    %v429 = vunpack.c.h.b16 %v199
    %v430 = vunpack.c.l.b16 %v200
    %v431 = vunpack.c.h.b16 %v200
    %v432 = vunpack.c.l.b16 %v201
    %v433 = vunpack.c.h.b16 %v201
    %v434 = vunpack.c.l.b16 %v202
    %v435 = vunpack.c.h.b16 %v202
    %v436 = vunpack.c.l.b16 %v203
    %v437 = vunpack.c.l.b16 %v204
    %v438 = vunpack.c.h.b16 %v204
    %v439 = vunpack.c.l.b16 %v205
    %v440 = vunpack.c.h.b16 %v205
    %v441 = vunpack.c.l.b16 %v206
    %v442 = vunpack.c.h.b16 %v206
    %v443 = vunpack.c.l.b16 %v207
    %v444 = vunpack.c.h.b16 %v207
    %v445 = vunpack.c.l.b16 %v208
    %v446 = vunpack.c.l.b16 %v209
    %v447 = vunpack.c.h.b16 %v209
    %v448 = vunpack.c.l.b16 %v210
    %v449 = vunpack.c.h.b16 %v210
    %v450 = vunpack.c.l.b16 %v211
    %v451 = vunpack.c.h.b16 %v211
    %v452 = vunpack.c.l.b16 %v212
    %v453 = vunpack.c.h.b16 %v212
    %v454 = vunpack.c.l.b16 %v213
    %v455 = vunpack.c.l.b16 %v214
    %v456 = vunpack.c.h.b16 %v214
    %v457 = vunpack.c.l.b16 %v215
    %v458 = vunpack.c.h.b16 %v215
    %v459 = vunpack.c.l.b16 %v216
    %v460 = vunpack.c.h.b16 %v216
    %v461 = vunpack.c.l.b16 %v217
    %v462 = vunpack.c.h.b16 %v217
    %v463 = vunpack.c.l.b16 %v218
    %v464 = vunpack.c.l.b16 %v219
    %v465 = vunpack.c.h.b16 %v219
    %v466 = vunpack.c.l.b16 %v220
    %v467 = vunpack.c.h.b16 %v220
    %v468 = vunpack.c.l.b16 %v221
    %v469 = vunpack.c.h.b16 %v221
    %v470 = vunpack.c.l.b16 %v222
    %v471 = vunpack.c.h.b16 %v222
    %v472 = vunpack.c.l.b16 %v223
    %v473 = vunpack.c.l.b16 %v224
    %v474 = vunpack.c.h.b16 %v224
    %v475 = vunpack.c.l.b16 %v225
    %v476 = vunpack.c.h.b16 %v225
    %v477 = vunpack.c.l.b16 %v226
    %v478 = vunpack.c.h.b16 %v226
    %v479 = vunpack.c.l.b16 %v227
    %v480 = vunpack.c.h.b16 %v227
    %v481 = vunpack.c.l.b16 %v228
    %v482 = vunpack.c.l.b16 %v229
    %v483 = vunpack.c.h.b16 %v229
    %v484 = vunpack.c.l.b16 %v230
    %v485 = vunpack.c.h.b16 %v230
    %v486 = vunpack.c.l.b16 %v231
    %v487 = vunpack.c.h.b16 %v231
    %v488 = vunpack.c.l.b16 %v232
    %v489 = vunpack.c.h.b16 %v232
    %v490 = vunpack.c.l.b16 %v233
    %v491 = vunpack.c.l.b16 %v234
    %v492 = vunpack.c.h.b16 %v234
    %v493 = vunpack.c.l.b16 %v235
    %v494 = vunpack.c.h.b16 %v235
    %v495 = vunpack.c.l.b16 %v236
    %v496 = vunpack.c.h.b16 %v236
    %v497 = vunpack.c.l.b16 %v237
    %v498 = vunpack.c.h.b16 %v237
    %v499 = vunpack.c.l.b16 %v238
    %v500 = vunpack.c.l.b16 %v239
    %v501 = vunpack.c.h.b16 %v239
    %v502 = vunpack.c.l.b16 %v240
    %v503 = vunpack.c.h.b16 %v240
    %v504 = vunpack.c.l.b16 %v241
    %v505 = vunpack.c.h.b16 %v241
    %v506 = vunpack.c.l.b16 %v242
    %v507 = vunpack.c.h.b16 %v242
    %v508 = vunpack.c.l.b16 %v243
    %v509 = vunpack.c.l.b16 %v244
    %v510 = vunpack.c.h.b16 %v244
    %v511 = vunpack.c.l.b16 %v245
    %v512 = vunpack.c.h.b16 %v245
    %v513 = vunpack.c.l.b16 %v246
    %v514 = vunpack.c.h.b16 %v246
    %v515 = vunpack.c.l.b16 %v247
    %v516 = vunpack.c.h.b16 %v247
    %v517 = vunpack.c.l.b16 %v248
    %v518 = vunpack.c.l.b16 %v249
    %v519 = vunpack.c.h.b16 %v249
    %v520 = vunpack.c.l.b16 %v250
    %v521 = vunpack.c.h.b16 %v250
    %v522 = vunpack.c.l.b16 %v251
    %v523 = vunpack.c.h.b16 %v251
    %v524 = vunpack.c.l.b16 %v252
    %v525 = vunpack.c.h.b16 %v252
    %v526 = vunpack.c.l.b16 %v253
    %v527 = vpack.c.b16 %v392, %v383
    %v528 = vpack.c.b16 %v393, %v384
    %v529 = vpack.c.b16 %v394, %v385
    %v530 = vpack.c.b16 %v395, %v386
    %v531 = vpack.c.b16 %v396, %v387
    %v532 = vpack.c.b16 %v397, %v388
    %v533 = vpack.c.b16 %v398, %v389
    %v534 = vpack.c.b16 %v399, %v390
    %v535 = vpack.c.b16 %v400, %v391
    %v536 = vpack.c.b16 %v410, %v401
    %v537 = vpack.c.b16 %v411, %v402
    %v538 = vpack.c.b16 %v412, %v403
    %v539 = vpack.c.b16 %v413, %v404
    %v540 = vpack.c.b16 %v414, %v405
    %v541 = vpack.c.b16 %v415, %v406
    %v542 = vpack.c.b16 %v416, %v407
    %v543 = vpack.c.b16 %v417, %v408
    %v544 = vpack.c.b16 %v418, %v409
    %v545 = vpack.c.b16 %v428, %v419
    %v546 = vpack.c.b16 %v429, %v420
    %v547 = vpack.c.b16 %v430, %v421
    %v548 = vpack.c.b16 %v431, %v422
    %v549 = vpack.c.b16 %v432, %v423
    %v550 = vpack.c.b16 %v433, %v424
    %v551 = vpack.c.b16 %v434, %v425
    %v552 = vpack.c.b16 %v435, %v426
    %v553 = vpack.c.b16 %v436, %v427
    %v554 = vpack.c.b16 %v446, %v437
    %v555 = vpack.c.b16 %v447, %v438
    %v556 = vpack.c.b16 %v448, %v439
    %v557 = vpack.c.b16 %v449, %v440
    %v558 = vpack.c.b16 %v450, %v441
    %v559 = vpack.c.b16 %v451, %v442
    %v560 = vpack.c.b16 %v452, %v443
    %v561 = vpack.c.b16 %v453, %v444
    %v562 = vpack.c.b16 %v454, %v445
    %v563 = vpack.c.b16 %v464, %v455
    %v564 = vpack.c.b16 %v465, %v456
    %v565 = vpack.c.b16 %v466, %v457
    %v566 = vpack.c.b16 %v467, %v458
    %v567 = vpack.c.b16 %v468, %v459
    %v568 = vpack.c.b16 %v469, %v460
    %v569 = vpack.c.b16 %v470, %v461
    %v570 = vpack.c.b16 %v471, %v462
    %v571 = vpack.c.b16 %v472, %v463
    %v572 = vpack.c.b16 %v482, %v473
    %v573 = vpack.c.b16 %v483, %v474
    %v574 = vpack.c.b16 %v484, %v475
    %v575 = vpack.c.b16 %v485, %v476
    %v576 = vpack.c.b16 %v486, %v477
    %v577 = vpack.c.b16 %v487, %v478
    %v578 = vpack.c.b16 %v488, %v479
    %v579 = vpack.c.b16 %v489, %v480
    %v580 = vpack.c.b16 %v490, %v481
    %v581 = vpack.c.b16 %v500, %v491
    %v582 = vpack.c.b16 %v501, %v492
    %v583 = vpack.c.b16 %v502, %v493
    %v584 = vpack.c.b16 %v503, %v494
    %v585 = vpack.c.b16 %v504, %v495
    %v586 = vpack.c.b16 %v505, %v496
    %v587 = vpack.c.b16 %v506, %v497
    %v588 = vpack.c.b16 %v507, %v498
    %v589 = vpack.c.b16 %v508, %v499
    %v590 = vpack.c.b16 %v518, %v509
    %v591 = vpack.c.b16 %v519, %v510
    %v592 = vpack.c.b16 %v520, %v511
    %v593 = vpack.c.b16 %v521, %v512
    %v594 = vpack.c.b16 %v522, %v513
    %v595 = vpack.c.b16 %v523, %v514
    %v596 = vpack.c.b16 %v524, %v515
    %v597 = vpack.c.b16 %v525, %v516
    %v598 = vpack.c.b16 %v526, %v517
    %671 = vmatprep.subr.bf16.mxu0 %v528
    %672 = vmatpush1.bf16.msra.mxu0 %v527
    %673 = vmatprep.subr.bf16.mxu0 %v537
    %674 = vmatpush1.bf16.msra.mxu0 %v536
    %675 = vmatprep.subr.bf16.mxu0 %v546
    %676 = vmatpush1.bf16.msra.mxu0 %v545
    %677 = vmatprep.subr.bf16.mxu0 %v555
    %678 = vmatpush1.bf16.msra.mxu0 %v554
    %679 = vmatprep.subr.bf16.mxu0 %v564
    %680 = vmatpush1.bf16.msra.mxu0 %v563
    %681 = vmatprep.subr.bf16.mxu0 %v573
    %682 = vmatpush1.bf16.msra.mxu0 %v572
    %683 = vmatprep.subr.bf16.mxu0 %v582
    %684 = vmatpush1.bf16.msra.mxu0 %v581
    %685 = vmatprep.subr.bf16.mxu0 %v591
    %686 = vmatpush1.bf16.msra.mxu0 %v590
    %687 = vmatprep.subr.bf16.mxu0 0
    %688 = vmatpush1.bf16.msra.mxu0 0
    %689 = vmatprep.subr.bf16.mxu0 0
    %690 = vmatpush1.bf16.msra.mxu0 0
    %691 = vmatprep.subr.bf16.mxu0 0
    %692 = vmatpush1.bf16.msra.mxu0 0
    %693 = vmatprep.subr.bf16.mxu0 0
    %694 = vmatpush1.bf16.msra.mxu0 0
    %695 = vmatprep.subr.bf16.mxu0 0
    %696 = vmatpush1.bf16.msra.mxu0 0
    %697 = vmatprep.subr.bf16.mxu0 0
    %698 = vmatpush1.bf16.msra.mxu0 0
    %699 = vmatprep.subr.bf16.mxu0 0
    %700 = vmatpush1.bf16.msra.mxu0 0
    %701 = vmatprep.subr.bf16.mxu0 0
    %702 = vmatpush1.bf16.msra.mxu0 0
    %703 = vmatprep.mubr.bf16.mxu0 0
    %704 = vmatmul.mubr.bf16.gmra.mrb[0].mxu0 %v173
    %v705 = vpop.f32.mrb[0].mxu0
    %v706 = vadd.f32 %v261, %v705
    %v707 = vpop.f32.mrb[0].mxu0
    %v708 = vadd.f32 %v265, %v707
    %v709 = vpop.f32.mrb[0].mxu0
    %v710 = vadd.f32 %v261, %v709
    %v711 = vpop.f32.mrb[0].mxu0
    %v712 = vadd.f32 %v265, %v711
    %713 = vdwg.mxu0
    %714 = vmatprep.subr.bf16.mxu0 %v530
    %715 = vmatpush1.bf16.msra.mxu0 %v529
    %716 = vmatprep.subr.bf16.mxu0 %v539
    %717 = vmatpush1.bf16.msra.mxu0 %v538
    %718 = vmatprep.subr.bf16.mxu0 %v548
    %719 = vmatpush1.bf16.msra.mxu0 %v547
    %720 = vmatprep.subr.bf16.mxu0 %v557
    %721 = vmatpush1.bf16.msra.mxu0 %v556
    %722 = vmatprep.subr.bf16.mxu0 %v566
    %723 = vmatpush1.bf16.msra.mxu0 %v565
    %724 = vmatprep.subr.bf16.mxu0 %v575
    %725 = vmatpush1.bf16.msra.mxu0 %v574
    %726 = vmatprep.subr.bf16.mxu0 %v584
    %727 = vmatpush1.bf16.msra.mxu0 %v583
    %728 = vmatprep.subr.bf16.mxu0 %v593
    %729 = vmatpush1.bf16.msra.mxu0 %v592
    %730 = vmatprep.subr.bf16.mxu0 0
    %731 = vmatpush1.bf16.msra.mxu0 0
    %732 = vmatprep.subr.bf16.mxu0 0
    %733 = vmatpush1.bf16.msra.mxu0 0
    %734 = vmatprep.subr.bf16.mxu0 0
    %735 = vmatpush1.bf16.msra.mxu0 0
    %736 = vmatprep.subr.bf16.mxu0 0
    %737 = vmatpush1.bf16.msra.mxu0 0
    %738 = vmatprep.subr.bf16.mxu0 0
    %739 = vmatpush1.bf16.msra.mxu0 0
    %740 = vmatprep.subr.bf16.mxu0 0
    %741 = vmatpush1.bf16.msra.mxu0 0
    %742 = vmatprep.subr.bf16.mxu0 0
    %743 = vmatpush1.bf16.msra.mxu0 0
    %744 = vmatprep.subr.bf16.mxu0 0
    %745 = vmatpush1.bf16.msra.mxu0 0
    %746 = vmatprep.mubr.bf16.mxu0 0
    %747 = vmatmul.mubr.bf16.gmra.mrb[0].mxu0 %v173
    %v748 = vpop.f32.mrb[0].mxu0
    %v749 = vadd.f32 %v269, %v748
    %v750 = vpop.f32.mrb[0].mxu0
    %v751 = vadd.f32 %v273, %v750
    %v752 = vpop.f32.mrb[0].mxu0
    %v753 = vadd.f32 %v269, %v752
    %v754 = vpop.f32.mrb[0].mxu0
    %v755 = vadd.f32 %v273, %v754
    %756 = vdwg.mxu0
    %757 = vmatprep.subr.bf16.mxu0 %v532
    %758 = vmatpush1.bf16.msra.mxu0 %v531
    %759 = vmatprep.subr.bf16.mxu0 %v541
    %760 = vmatpush1.bf16.msra.mxu0 %v540
    %761 = vmatprep.subr.bf16.mxu0 %v550
    %762 = vmatpush1.bf16.msra.mxu0 %v549
    %763 = vmatprep.subr.bf16.mxu0 %v559
    %764 = vmatpush1.bf16.msra.mxu0 %v558
    %765 = vmatprep.subr.bf16.mxu0 %v568
    %766 = vmatpush1.bf16.msra.mxu0 %v567
    %767 = vmatprep.subr.bf16.mxu0 %v577
    %768 = vmatpush1.bf16.msra.mxu0 %v576
    %769 = vmatprep.subr.bf16.mxu0 %v586
    %770 = vmatpush1.bf16.msra.mxu0 %v585
    %771 = vmatprep.subr.bf16.mxu0 %v595
    %772 = vmatpush1.bf16.msra.mxu0 %v594
    %773 = vmatprep.subr.bf16.mxu0 0
    %774 = vmatpush1.bf16.msra.mxu0 0
    %775 = vmatprep.subr.bf16.mxu0 0
    %776 = vmatpush1.bf16.msra.mxu0 0
    %777 = vmatprep.subr.bf16.mxu0 0
    %778 = vmatpush1.bf16.msra.mxu0 0
    %779 = vmatprep.subr.bf16.mxu0 0
    %780 = vmatpush1.bf16.msra.mxu0 0
    %781 = vmatprep.subr.bf16.mxu0 0
    %782 = vmatpush1.bf16.msra.mxu0 0
    %783 = vmatprep.subr.bf16.mxu0 0
    %784 = vmatpush1.bf16.msra.mxu0 0
    %785 = vmatprep.subr.bf16.mxu0 0
    %786 = vmatpush1.bf16.msra.mxu0 0
    %787 = vmatprep.subr.bf16.mxu0 0
    %788 = vmatpush1.bf16.msra.mxu0 0
    %789 = vmatprep.mubr.bf16.mxu0 0
    %790 = vmatmul.mubr.bf16.gmra.mrb[0].mxu0 %v173
    %v791 = vpop.f32.mrb[0].mxu0
    %v792 = vadd.f32 %v277, %v791
    %v793 = vpop.f32.mrb[0].mxu0
    %v794 = vadd.f32 %v281, %v793
    %v795 = vpop.f32.mrb[0].mxu0
    %v796 = vadd.f32 %v277, %v795
    %v797 = vpop.f32.mrb[0].mxu0
    %v798 = vadd.f32 %v281, %v797
    %799 = vdwg.mxu0
    %800 = vmatprep.subr.bf16.mxu0 %v534
    %801 = vmatpush1.bf16.msra.mxu0 %v533
    %802 = vmatprep.subr.bf16.mxu0 %v543
    %803 = vmatpush1.bf16.msra.mxu0 %v542
    %804 = vmatprep.subr.bf16.mxu0 %v552
    %805 = vmatpush1.bf16.msra.mxu0 %v551
    %806 = vmatprep.subr.bf16.mxu0 %v561
    %807 = vmatpush1.bf16.msra.mxu0 %v560
    %808 = vmatprep.subr.bf16.mxu0 %v570
    %809 = vmatpush1.bf16.msra.mxu0 %v569
    %810 = vmatprep.subr.bf16.mxu0 %v579
    %811 = vmatpush1.bf16.msra.mxu0 %v578
    %812 = vmatprep.subr.bf16.mxu0 %v588
    %813 = vmatpush1.bf16.msra.mxu0 %v587
    %814 = vmatprep.subr.bf16.mxu0 %v597
    %815 = vmatpush1.bf16.msra.mxu0 %v596
    %816 = vmatprep.subr.bf16.mxu0 0
    %817 = vmatpush1.bf16.msra.mxu0 0
    %818 = vmatprep.subr.bf16.mxu0 0
    %819 = vmatpush1.bf16.msra.mxu0 0
    %820 = vmatprep.subr.bf16.mxu0 0
    %821 = vmatpush1.bf16.msra.mxu0 0
    %822 = vmatprep.subr.bf16.mxu0 0
    %823 = vmatpush1.bf16.msra.mxu0 0
    %824 = vmatprep.subr.bf16.mxu0 0
    %825 = vmatpush1.bf16.msra.mxu0 0
    %826 = vmatprep.subr.bf16.mxu0 0
    %827 = vmatpush1.bf16.msra.mxu0 0
    %828 = vmatprep.subr.bf16.mxu0 0
    %829 = vmatpush1.bf16.msra.mxu0 0
    %830 = vmatprep.subr.bf16.mxu0 0
    %831 = vmatpush1.bf16.msra.mxu0 0
    %832 = vmatprep.mubr.bf16.mxu0 0
    %833 = vmatmul.mubr.bf16.gmra.mrb[0].mxu0 %v173
    %v834 = vpop.f32.mrb[0].mxu0
    %v835 = vadd.f32 %v285, %v834
    %v836 = vpop.f32.mrb[0].mxu0
    %v837 = vadd.f32 %v289, %v836
    %v838 = vpop.f32.mrb[0].mxu0
    %v839 = vadd.f32 %v285, %v838
    %v840 = vpop.f32.mrb[0].mxu0
    %v841 = vadd.f32 %v289, %v840
    %842 = vdwg.mxu0
    %843 = vmatprep.subr.bf16.mxu0 0
    %844 = vmatpush1.bf16.msra.mxu0 %v535
    %845 = vmatprep.subr.bf16.mxu0 0
    %846 = vmatpush1.bf16.msra.mxu0 %v544
    %847 = vmatprep.subr.bf16.mxu0 0
    %848 = vmatpush1.bf16.msra.mxu0 %v553
    %849 = vmatprep.subr.bf16.mxu0 0
    %850 = vmatpush1.bf16.msra.mxu0 %v562
    %851 = vmatprep.subr.bf16.mxu0 0
    %852 = vmatpush1.bf16.msra.mxu0 %v571
    %853 = vmatprep.subr.bf16.mxu0 0
    %854 = vmatpush1.bf16.msra.mxu0 %v580
    %855 = vmatprep.subr.bf16.mxu0 0
    %856 = vmatpush1.bf16.msra.mxu0 %v589
    %857 = vmatprep.subr.bf16.mxu0 0
    %858 = vmatpush1.bf16.msra.mxu0 %v598
    %859 = vmatprep.subr.bf16.mxu0 0
    %860 = vmatpush1.bf16.msra.mxu0 0
    %861 = vmatprep.subr.bf16.mxu0 0
    %862 = vmatpush1.bf16.msra.mxu0 0
    %863 = vmatprep.subr.bf16.mxu0 0
    %864 = vmatpush1.bf16.msra.mxu0 0
    %865 = vmatprep.subr.bf16.mxu0 0
    %866 = vmatpush1.bf16.msra.mxu0 0
    %867 = vmatprep.subr.bf16.mxu0 0
    %868 = vmatpush1.bf16.msra.mxu0 0
    %869 = vmatprep.subr.bf16.mxu0 0
    %870 = vmatpush1.bf16.msra.mxu0 0
    %871 = vmatprep.subr.bf16.mxu0 0
    %872 = vmatpush1.bf16.msra.mxu0 0
    %873 = vmatprep.subr.bf16.mxu0 0
    %874 = vmatpush1.bf16.msra.mxu0 0
    %875 = vmatprep.mubr.bf16.mxu0 0
    %876 = vmatmul.mubr.bf16.gmra.mrb[0].mxu0 %v173
    %v877 = vpop.f32.mrb[0].mxu0
    %v878 = vadd.f32 %v293, %v877
    %v879 = vpop.f32.mrb[0].mxu0
    %v880 = vpop.f32.mrb[0].mxu0
    %v881 = vadd.f32 %v293, %v880
    %v882 = vpop.f32.mrb[0].mxu0
    %883 = vdwg.mxu0
    %v884 = vmul.f32 %v706, 0.5
    %v885 = vmul.f32 %v708, 0.5
    %v886 = vmul.f32 %v749, 0.5
    %v887 = vmul.f32 %v751, 0.5
    %v888 = vmul.f32 %v792, 0.5
    %v889 = vmul.f32 %v794, 0.5
    %v890 = vmul.f32 %v835, 0.5
    %v891 = vmul.f32 %v837, 0.5
    %v892 = vmul.f32 %v878, 0.5
    %v893 = vmul.f32 %v710, 0.5
    %v894 = vmul.f32 %v712, 0.5
    %v895 = vmul.f32 %v753, 0.5
    %v896 = vmul.f32 %v755, 0.5
    %v897 = vmul.f32 %v796, 0.5
    %v898 = vmul.f32 %v798, 0.5
    %v899 = vmul.f32 %v839, 0.5
    %v900 = vmul.f32 %v841, 0.5
    %v901 = vmul.f32 %v881, 0.5
    %v902 = vmul.f32 %v706, 0.044715
    %v903 = vmul.f32 %v708, 0.044715
    %v904 = vmul.f32 %v749, 0.044715
    %v905 = vmul.f32 %v751, 0.044715
    %v906 = vmul.f32 %v792, 0.044715
    %v907 = vmul.f32 %v794, 0.044715
    %v908 = vmul.f32 %v835, 0.044715
    %v909 = vmul.f32 %v837, 0.044715
    %v910 = vmul.f32 %v878, 0.044715
    %v911 = vmul.f32 %v710, 0.044715
    %v912 = vmul.f32 %v712, 0.044715
    %v913 = vmul.f32 %v753, 0.044715
    %v914 = vmul.f32 %v755, 0.044715
    %v915 = vmul.f32 %v796, 0.044715
    %v916 = vmul.f32 %v798, 0.044715
    %v917 = vmul.f32 %v839, 0.044715
    %v918 = vmul.f32 %v841, 0.044715
    %v919 = vmul.f32 %v881, 0.044715
    %v920 = vmul.f32 %v902, %v706
    %v921 = vmul.f32 %v903, %v708
    %v922 = vmul.f32 %v904, %v749
    %v923 = vmul.f32 %v905, %v751
    %v924 = vmul.f32 %v906, %v792
    %v925 = vmul.f32 %v907, %v794
    %v926 = vmul.f32 %v908, %v835
    %v927 = vmul.f32 %v909, %v837
    %v928 = vmul.f32 %v910, %v878
    %v929 = vmul.f32 %v911, %v710
    %v930 = vmul.f32 %v912, %v712
    %v931 = vmul.f32 %v913, %v753
    %v932 = vmul.f32 %v914, %v755
    %v933 = vmul.f32 %v915, %v796
    %v934 = vmul.f32 %v916, %v798
    %v935 = vmul.f32 %v917, %v839
    %v936 = vmul.f32 %v918, %v841
    %v937 = vmul.f32 %v919, %v881
    %v938 = vmul.f32 %v920, %v706
    %v939 = vmul.f32 %v921, %v708
    %v940 = vmul.f32 %v922, %v749
    %v941 = vmul.f32 %v923, %v751
    %v942 = vmul.f32 %v924, %v792
    %v943 = vmul.f32 %v925, %v794
    %v944 = vmul.f32 %v926, %v835
    %v945 = vmul.f32 %v927, %v837
    %v946 = vmul.f32 %v928, %v878
    %v947 = vmul.f32 %v929, %v710
    %v948 = vmul.f32 %v930, %v712
    %v949 = vmul.f32 %v931, %v753
    %v950 = vmul.f32 %v932, %v755
    %v951 = vmul.f32 %v933, %v796
    %v952 = vmul.f32 %v934, %v798
    %v953 = vmul.f32 %v935, %v839
    %v954 = vmul.f32 %v936, %v841
    %v955 = vmul.f32 %v937, %v881
    %v956 = vadd.f32 %v706, %v938
    %v957 = vadd.f32 %v708, %v939
    %v958 = vadd.f32 %v749, %v940
    %v959 = vadd.f32 %v751, %v941
    %v960 = vadd.f32 %v792, %v942
    %v961 = vadd.f32 %v794, %v943
    %v962 = vadd.f32 %v835, %v944
    %v963 = vadd.f32 %v837, %v945
    %v964 = vadd.f32 %v878, %v946
    %v965 = vadd.f32 %v710, %v947
    %v966 = vadd.f32 %v712, %v948
    %v967 = vadd.f32 %v753, %v949
    %v968 = vadd.f32 %v755, %v950
    %v969 = vadd.f32 %v796, %v951
    %v970 = vadd.f32 %v798, %v952
    %v971 = vadd.f32 %v839, %v953
    %v972 = vadd.f32 %v841, %v954
    %v973 = vadd.f32 %v881, %v955
    %v974 = vmul.f32 %v956, 0.7978846
    %v975 = vmul.f32 %v957, 0.7978846
    %v976 = vmul.f32 %v958, 0.7978846
    %v977 = vmul.f32 %v959, 0.7978846
    %v978 = vmul.f32 %v960, 0.7978846
    %v979 = vmul.f32 %v961, 0.7978846
    %v980 = vmul.f32 %v962, 0.7978846
    %v981 = vmul.f32 %v963, 0.7978846
    %v982 = vmul.f32 %v964, 0.7978846
    %v983 = vmul.f32 %v965, 0.7978846
    %v984 = vmul.f32 %v966, 0.7978846
    %v985 = vmul.f32 %v967, 0.7978846
    %v986 = vmul.f32 %v968, 0.7978846
    %v987 = vmul.f32 %v969, 0.7978846
    %v988 = vmul.f32 %v970, 0.7978846
    %v989 = vmul.f32 %v971, 0.7978846
    %v990 = vmul.f32 %v972, 0.7978846
    %v991 = vmul.f32 %v973, 0.7978846
    %v992 = vtanh.pop %v974
    %v993 = vtanh.pop %v975
    %v994 = vtanh.pop %v976
    %v995 = vtanh.pop %v977
    %v996 = vtanh.pop %v978
    %v997 = vtanh.pop %v979
    %v998 = vtanh.pop %v980
    %v999 = vtanh.pop %v981
    %v1000 = vtanh.pop %v982
    %v1001 = vtanh.pop %v983
    %v1002 = vtanh.pop %v984
    %v1003 = vtanh.pop %v985
    %v1004 = vtanh.pop %v986
    %v1005 = vtanh.pop %v987
    %v1006 = vtanh.pop %v988
    %v1007 = vtanh.pop %v989
    %v1008 = vtanh.pop %v990
    %v1009 = vtanh.pop %v991
    %v1010 = vadd.f32 %v992, 1.0
    %v1011 = vadd.f32 %v993, 1.0
    %v1012 = vadd.f32 %v994, 1.0
    %v1013 = vadd.f32 %v995, 1.0
    %v1014 = vadd.f32 %v996, 1.0
    %v1015 = vadd.f32 %v997, 1.0
    %v1016 = vadd.f32 %v998, 1.0
    %v1017 = vadd.f32 %v999, 1.0
    %v1018 = vadd.f32 %v1000, 1.0
    %v1019 = vadd.f32 %v1001, 1.0
    %v1020 = vadd.f32 %v1002, 1.0
    %v1021 = vadd.f32 %v1003, 1.0
    %v1022 = vadd.f32 %v1004, 1.0
    %v1023 = vadd.f32 %v1005, 1.0
    %v1024 = vadd.f32 %v1006, 1.0
    %v1025 = vadd.f32 %v1007, 1.0
    %v1026 = vadd.f32 %v1008, 1.0
    %v1027 = vadd.f32 %v1009, 1.0
    %v1028 = vmul.f32 %v884, %v1010
    %v1029 = vmul.f32 %v885, %v1011
    %v1030 = vmul.f32 %v886, %v1012
    %v1031 = vmul.f32 %v887, %v1013
    %v1032 = vmul.f32 %v888, %v1014
    %v1033 = vmul.f32 %v889, %v1015
    %v1034 = vmul.f32 %v890, %v1016
    %v1035 = vmul.f32 %v891, %v1017
    %v1036 = vmul.f32 %v892, %v1018
    %v1037 = vmul.f32 %v893, %v1019
    %v1038 = vmul.f32 %v894, %v1020
    %v1039 = vmul.f32 %v895, %v1021
    %v1040 = vmul.f32 %v896, %v1022
    %v1041 = vmul.f32 %v897, %v1023
    %v1042 = vmul.f32 %v898, %v1024
    %v1043 = vmul.f32 %v899, %v1025
    %v1044 = vmul.f32 %v900, %v1026
    %v1045 = vmul.f32 %v901, %v1027
    %v1046 = vpack.c.bf16 %v1037, %v1028
    %v1047 = vpack.c.bf16 %v1038, %v1029
    %v1048 = vpack.c.bf16 %v1039, %v1030
    %v1049 = vpack.c.bf16 %v1040, %v1031
    %v1050 = vpack.c.bf16 %v1041, %v1032
    %v1051 = vpack.c.bf16 %v1042, %v1033
    %v1052 = vpack.c.bf16 %v1043, %v1034
    %v1053 = vpack.c.bf16 %v1044, %v1035
    %v1054 = vpack.c.bf16 %v1045, %v1036
    %v1064 = vunpack.c.l.b16 %v1046
    %v1065 = vunpack.c.l.b16 %v1047
    %v1066 = vunpack.c.l.b16 %v1048
    %v1067 = vunpack.c.l.b16 %v1049
    %v1068 = vunpack.c.l.b16 %v1050
    %v1069 = vunpack.c.l.b16 %v1051
    %v1070 = vunpack.c.l.b16 %v1052
    %v1071 = vunpack.c.l.b16 %v1053
    %v1072 = vunpack.c.l.b16 %v1054
    %v1073 = vunpack.c.h.b16 %v1046
    %v1074 = vunpack.c.h.b16 %v1047
    %v1075 = vunpack.c.h.b16 %v1048
    %v1076 = vunpack.c.h.b16 %v1049
    %v1077 = vunpack.c.h.b16 %v1050
    %v1078 = vunpack.c.h.b16 %v1051
    %v1079 = vunpack.c.h.b16 %v1052
    %v1080 = vunpack.c.h.b16 %v1053
    %v1081 = vunpack.c.h.b16 %v1054
    %v1082 = vpack.c.b16 %v1065, %v1064
    %v1083 = vpack.c.b16 %v1067, %v1066
    %v1084 = vpack.c.b16 %v1069, %v1068
    %v1085 = vpack.c.b16 %v1071, %v1070
    %v1086 = vpack.c.b16 %v1072, %v1072
    %v1087 = vpack.c.b16 %v1074, %v1073
    %v1088 = vpack.c.b16 %v1076, %v1075
    %v1089 = vpack.c.b16 %v1078, %v1077
    %v1090 = vpack.c.b16 %v1080, %v1079
    %v1091 = vpack.c.b16 %v1081, %v1081
    %1102 = vst [vmem:[%s5] sm:$0xff] %v1082
    %1103 = vst [vmem:[%s5 + $0x8] sm:$0xff] %v1083
    %1104 = vst [vmem:[%s5 + $0x10] sm:$0xff] %v1084
    %1105 = vst [vmem:[%s5 + $0x18] sm:$0xff] %v1085
    %1106 = vst [vmem:[%s5 + $0x20] sm:$0xf] %v1086
    %1107 = vst [vmem:[%s5 + $0x24] sm:$0xff] %v1087
    %1108 = vst [vmem:[%s5 + $0x2c] sm:$0xff] %v1088
    %1109 = vst [vmem:[%s5 + $0x34] sm:$0xff] %v1089
    %1110 = vst [vmem:[%s5 + $0x3c] sm:$0xff] %v1090
    %1111 = vst [vmem:[%s5 + $0x44] sm:$0xf] %v1091
    // Predicated region
    $region26: #{deep_generator_forward.4} parent=1 // pred_check
      _
    $region27: #{deep_generator_forward.4} parent=1 // pred_check_branch
      %1113 = sbr.rel (0) target = $region29
    $region28: #{deep_generator_forward.4} parent=1 // pred_region
      _
    $region29: #{deep_generator_forward.4} parent=1 // pred_fallthru
      _
    // Predicated region
    $region30: #{deep_generator_forward.4} parent=1 // pred_check
      _
    $region31: #{deep_generator_forward.4} parent=1 // pred_check_branch
      %1115 = sbr.rel (0) target = $region33
    $region32: #{deep_generator_forward.4} parent=1 // pred_region
      _
    $region33: #{deep_generator_forward.4} parent=1 // pred_fallthru
      _
    %1116 = vsyncpa [#allocation3], 1

// kernel: deep_generator_forward.5
$region0: #{deep_generator_forward.5}
  #allocation0 [shape = 'u32[]', space=smem, size = 0x4, offset = 0x4, fixed_abs, tag = 'smem constant byte address 0x4 - core index']
  #allocation1 [shape = 'u32[144,128]{1,0:T(1,128)}', space=vmem, size = 0x12000, scoped, tag = 'internal scratch']
  %s0 = inlined_call_operand.vmem [shape: bf16[128,1152], index: 0, kind: input, shape index: {}]
  %s1 = inlined_call_operand.vmem [shape: bf16[1152,128], index: 1, kind: input, shape index: {}]
  %s2 = inlined_call_operand.vmem [shape: f32[1,128], index: 2, kind: input, shape index: {}]
  %s3 = inlined_call_operand.vmem [shape: bf16[128,128], index: 3, kind: output, shape index: {}]
  %s4 = sld [smem:[#allocation0]]
  $region45: #{deep_generator_forward.5} parent=0
    _
  %s6 = ssub.s32 1, %s4
  %s7 = scalar_select 0, %s6, %s4
  loop: start=0, step=1, limit=4
  $region2: #{deep_generator_forward.5} parent=0 // loop_pre_header
    _
  $region3: #{deep_generator_forward.5} parent=0 // loop_header
    %s9 = sphi 0, %s13
    %p10 = scmp.ge.s32.totalorder %s9, 4
    %s19 = sphi 0, %s21
    %s22 = sphi 0, %s19
    %s23 = sphi 0, %s22
    %s39 = sphi 0, %s23
    %s43 = sphi 0, %s43
    %s45 = sphi 0, %s43
    %s46 = sphi 0, %s45
    %s60 = sphi 0, %s46
    %s64 = sphi 0, %s64
    %s66 = sphi 0, %s64
    %s67 = sphi 0, %s66
    %s81 = sphi 0, %s67
    %s87 = sphi 0, %s89
    %s90 = sphi 0, %s87
    %s91 = sphi 0, %s90
    %s107 = sphi 0, %s91
  $region4: #{deep_generator_forward.5} parent=0 // loop_header_branch
    %12 = sbr.rel (%p10) target = $region8
  $region5: #{deep_generator_forward.5} parent=0 // loop_body
    %s14 = ssub.s32 %s9, 1
    %s15 = ssub.s32 %s9, 2
    %s16 = sadd.s32 %s9, 1
    %s17 = ssub.s32 %s9, %s16
    %p18 = scmp.eq.s32.totalorder %s17, 0
    %s20 = sadd.s32 %s19, 1
    %s21 = scalar_select %p18, %s19, %s20
    %p24 = pneg %p18
    %p25 = scmp.eq.s32.totalorder %s9, 1
    %p26 = por %p24, %p25
    %p27 = scmp.ne.s32.totalorder %s19, %s22
    %p28 = scmp.eq.s32.totalorder %s9, 0
    %p29 = por %p27, %p28
    %p30 = scmp.ne.s32.totalorder %s19, %s22
    %p31 = scmp.eq.s32.totalorder %s14, 1
    %p32 = por %p30, %p31
    %p33 = scmp.ne.s32.totalorder %s22, %s23
    %p34 = scmp.eq.s32.totalorder %s14, 0
    %p35 = por %p33, %p34
    %p36 = scmp.ne.s32.totalorder %s22, %s23
    %p37 = scmp.eq.s32.totalorder %s15, 1
    %p38 = por %p36, %p37
    %p40 = scmp.ne.s32.totalorder %s23, %s39
    %p41 = scmp.eq.s32.totalorder %s15, 0
    %p42 = por %p40, %p41
    %s44 = sadd.s32 %s43, 1
    %p47 = scmp.eq.s32.totalorder %s9, 1
    %p48 = scmp.ne.s32.totalorder %s43, %s45
    %p49 = scmp.eq.s32.totalorder %s9, 0
    %p50 = por %p48, %p49
    %p51 = scmp.ne.s32.totalorder %s43, %s45
    %p52 = scmp.eq.s32.totalorder %s14, 1
    %p53 = por %p51, %p52
    %p54 = scmp.ne.s32.totalorder %s45, %s46
    %p55 = scmp.eq.s32.totalorder %s14, 0
    %p56 = por %p54, %p55
    %p57 = scmp.ne.s32.totalorder %s45, %s46
    %p58 = scmp.eq.s32.totalorder %s15, 1
    %p59 = por %p57, %p58
    %p61 = scmp.ne.s32.totalorder %s46, %s60
    %p62 = scmp.eq.s32.totalorder %s15, 0
    %p63 = por %p61, %p62
    %s65 = sadd.s32 %s64, 1
    %p68 = scmp.eq.s32.totalorder %s9, 1
    %p69 = scmp.ne.s32.totalorder %s64, %s66
    %p70 = scmp.eq.s32.totalorder %s9, 0
    %p71 = por %p69, %p70
    %p72 = scmp.ne.s32.totalorder %s64, %s66
    %p73 = scmp.eq.s32.totalorder %s14, 1
    %p74 = por %p72, %p73
    %p75 = scmp.ne.s32.totalorder %s66, %s67
    %p76 = scmp.eq.s32.totalorder %s14, 0
    %p77 = por %p75, %p76
    %p78 = scmp.ne.s32.totalorder %s66, %s67
    %p79 = scmp.eq.s32.totalorder %s15, 1
    %p80 = por %p78, %p79
    %p82 = scmp.ne.s32.totalorder %s67, %s81
    %p83 = scmp.eq.s32.totalorder %s15, 0
    %p84 = por %p82, %p83
    %s85 = ssub.s32 %s9, %s16
    %p86 = scmp.eq.s32.totalorder %s85, 0
    %s88 = sadd.s32 %s87, 1
    %s89 = scalar_select %p86, %s87, %s88
    %p92 = pneg %p86
    %p93 = scmp.eq.s32.totalorder %s9, 1
    %p94 = por %p92, %p93
    %p95 = scmp.ne.s32.totalorder %s87, %s90
    %p96 = scmp.eq.s32.totalorder %s9, 0
    %p97 = por %p95, %p96
    %p98 = scmp.ne.s32.totalorder %s87, %s90
    %p99 = scmp.eq.s32.totalorder %s14, 1
    %p100 = por %p98, %p99
    %p101 = scmp.ne.s32.totalorder %s90, %s91
    %p102 = scmp.eq.s32.totalorder %s14, 0
    %p103 = por %p101, %p102
    %p104 = scmp.ne.s32.totalorder %s90, %s91
    %p105 = scmp.eq.s32.totalorder %s15, 1
    %p106 = por %p104, %p105
    %p108 = scmp.ne.s32.totalorder %s91, %s107
    %p109 = scmp.eq.s32.totalorder %s15, 0
    %p110 = por %p108, %p109
    %p111 = scmp.le.s32.totalorder 1, %s9
    %p112 = scmp.lt.s32.totalorder %s9, 3
    %p113 = pnand %p111, %p112
    %p114 = pneg %p113
    // Predicated region
    $region9: #{deep_generator_forward.5} parent=5 // pred_check
      _
    $region10: #{deep_generator_forward.5} parent=5 // pred_check_branch
      %116 = sbr.rel (%p113) target = $region12
    $region11: #{deep_generator_forward.5} parent=5 // pred_region
      %s117 = ssub.s32 %s9, 1
      // Predicated region
      $region13: #{deep_generator_forward.5} parent=11 // pred_check
        %p118 = pneg %p56
      $region14: #{deep_generator_forward.5} parent=11 // pred_check_branch
        %120 = sbr.rel (%p118) target = $region16
      $region15: #{deep_generator_forward.5} parent=11 // pred_region
        _
      $region16: #{deep_generator_forward.5} parent=11 // pred_fallthru
        _
      // Predicated region
      $region17: #{deep_generator_forward.5} parent=11 // pred_check
        %p121 = pneg %p77
      $region18: #{deep_generator_forward.5} parent=11 // pred_check_branch
        %123 = sbr.rel (%p121) target = $region20
      $region19: #{deep_generator_forward.5} parent=11 // pred_region
        _
      $region20: #{deep_generator_forward.5} parent=11 // pred_fallthru
        _
    $region12: #{deep_generator_forward.5} parent=5 // pred_fallthru
      _
    %p124 = scmp.lt.s32.totalorder %s9, 2
    // Predicated region
    $region21: #{deep_generator_forward.5} parent=5 // pred_check
      %p125 = pneg %p124
    $region22: #{deep_generator_forward.5} parent=5 // pred_check_branch
      %127 = sbr.rel (%p125) target = $region24
    $region23: #{deep_generator_forward.5} parent=5 // pred_region
      // Predicated region
      $region25: #{deep_generator_forward.5} parent=23 // pred_check
        %p128 = pneg %p29
      $region26: #{deep_generator_forward.5} parent=23 // pred_check_branch
        %130 = sbr.rel (%p128) target = $region28
      $region27: #{deep_generator_forward.5} parent=23 // pred_region
        %s131 = smul.u32 8, %s9
        %p132 = scmp.lt.s32.totalorder %s131, 15
        %s133 = scalar_select %p132, %s131, 15
        %s134 = smul.addr %s133, 9
        %s135 = smul.addr %s134, 4
        %s136 = scalar_lea.vmem %s0, %s135
        %s137 = smul.u32 8, %s9
      $region28: #{deep_generator_forward.5} parent=23 // pred_fallthru
        _
    $region24: #{deep_generator_forward.5} parent=5 // pred_fallthru
      _
    %p138 = scmp.le.s32.totalorder 1, %s9
    %p139 = scmp.lt.s32.totalorder %s9, 3
    %p140 = pnand %p138, %p139
    %p141 = pneg %p140
    // Predicated region
    $region29: #{deep_generator_forward.5} parent=5 // pred_check
      _
    $region30: #{deep_generator_forward.5} parent=5 // pred_check_branch
      %143 = sbr.rel (%p140) target = $region32
    $region31: #{deep_generator_forward.5} parent=5 // pred_region
      %s144 = ssub.s32 %s9, 1
      %s145 = smul.u32 8, %s14
      %p146 = scmp.lt.s32.totalorder %s145, 15
      %s147 = scalar_select %p146, %s145, 15
      %s148 = smul.addr %s147, 9
      %s149 = smul.addr %s148, 4
      %s150 = scalar_lea.vmem %s0, %s149
      %p151 = pneg %p35
      %p152 = pneg %p32
      %p153 = pneg %p56
      %p154 = pneg %p53
      %p155 = pneg %p77
      %p156 = pneg %p74
      %p157 = pneg %p103
      %p158 = pneg %p100
      %s159 = smul.u32 8, %s14
      %p160 = scmp.lt.s32.totalorder %s159, 15
      %s161 = scalar_select %p160, %s159, 15
      %s162 = smul.addr %s161, 4
      %s163 = scalar_lea.vmem %s3, %s162
      %s164 = smul.u32 8, %s14
      %p165 = scmp.lt.s32.totalorder %s164, 15
      %s166 = scalar_select %p165, %s164, 15
      %s167 = smul.addr %s166, 9
      %s168 = smul.addr %s167, 4
      %s169 = scalar_lea.vmem %s0, %s168
      %s170 = smul.u32 8, %s14
      %s171 = smul.u32 8, %s14
      %p172 = scmp.lt.s32.totalorder %s171, 15
      %s173 = scalar_select %p172, %s171, 15
      %s174 = smul.addr %s173, 4
      %s175 = scalar_lea.vmem %s3, %s174
      %s176 = smul.u32 8, %s14
      %v178 = vld [vmem:[%s169] sm:$0xff]
      %v179 = vld [vmem:[%s169 + $0x8] sm:$0xff]
      %v180 = vld [vmem:[%s169 + $0x10] sm:$0xff]
      %v181 = vld [vmem:[%s169 + $0x18] sm:$0xff]
      %v182 = vld [vmem:[%s169 + $0x20] sm:$0xf]
      %v183 = vld [vmem:[%s169 + $0x24] sm:$0xff]
      %v184 = vld [vmem:[%s169 + $0x2c] sm:$0xff]
      %v185 = vld [vmem:[%s169 + $0x34] sm:$0xff]
      %v186 = vld [vmem:[%s169 + $0x3c] sm:$0xff]
      %v187 = vld [vmem:[%s169 + $0x44] sm:$0xf]
      %v188 = vld [vmem:[%s169 + $0x48] sm:$0xff]
      %v189 = vld [vmem:[%s169 + $0x50] sm:$0xff]
      %v190 = vld [vmem:[%s169 + $0x58] sm:$0xff]
      %v191 = vld [vmem:[%s169 + $0x60] sm:$0xff]
      %v192 = vld [vmem:[%s169 + $0x68] sm:$0xf]
      %v193 = vld [vmem:[%s169 + $0x6c] sm:$0xff]
      %v194 = vld [vmem:[%s169 + $0x74] sm:$0xff]
      %v195 = vld [vmem:[%s169 + $0x7c] sm:$0xff]
      %v196 = vld [vmem:[%s169 + $0x84] sm:$0xff]
      %v197 = vld [vmem:[%s169 + $0x8c] sm:$0xf]
      %v198 = vld [vmem:[%s169 + $0x90] sm:$0xff]
      %v199 = vld [vmem:[%s169 + $0x98] sm:$0xff]
      %v200 = vld [vmem:[%s169 + $0xa0] sm:$0xff]
      %v201 = vld [vmem:[%s169 + $0xa8] sm:$0xff]
      %v202 = vld [vmem:[%s169 + $0xb0] sm:$0xf]
      %v203 = vld [vmem:[%s169 + $0xb4] sm:$0xff]
      %v204 = vld [vmem:[%s169 + $0xbc] sm:$0xff]
      %v205 = vld [vmem:[%s169 + $0xc4] sm:$0xff]
      %v206 = vld [vmem:[%s169 + $0xcc] sm:$0xff]
      %v207 = vld [vmem:[%s169 + $0xd4] sm:$0xf]
      %v208 = vld [vmem:[%s169 + $0xd8] sm:$0xff]
      %v209 = vld [vmem:[%s169 + $0xe0] sm:$0xff]
      %v210 = vld [vmem:[%s169 + $0xe8] sm:$0xff]
      %v211 = vld [vmem:[%s169 + $0xf0] sm:$0xff]
      %v212 = vld [vmem:[%s169 + $0xf8] sm:$0xf]
      %v213 = vld [vmem:[%s169 + $0xfc] sm:$0xff]
      %v214 = vld [vmem:[%s169 + $0x104] sm:$0xff]
      %v215 = vld [vmem:[%s169 + $0x10c] sm:$0xff]
      %v216 = vld [vmem:[%s169 + $0x114] sm:$0xff]
      %v217 = vld [vmem:[%s169 + $0x11c] sm:$0xf]
      %v218 = vld [vmem:[%s1] sm:$0xf]
      %v219 = vld [vmem:[%s1 + $0x4] sm:$0xf]
      %v220 = vld [vmem:[%s1 + $0x8] sm:$0xf]
      %v221 = vld [vmem:[%s1 + $0xc] sm:$0xf]
      %v222 = vld [vmem:[%s1 + $0x10] sm:$0xf]
      %v223 = vld [vmem:[%s1 + $0x14] sm:$0xf]
      %v224 = vld [vmem:[%s1 + $0x18] sm:$0xf]
      %v225 = vld [vmem:[%s1 + $0x1c] sm:$0xf]
      %v226 = vld [vmem:[%s1 + $0x20] sm:$0xf]
      %v227 = vld [vmem:[%s1 + $0x24] sm:$0xf]
      %v228 = vld [vmem:[%s1 + $0x28] sm:$0xf]
      %v229 = vld [vmem:[%s1 + $0x2c] sm:$0xf]
      %v230 = vld [vmem:[%s1 + $0x30] sm:$0xf]
      %v231 = vld [vmem:[%s1 + $0x34] sm:$0xf]
      %v232 = vld [vmem:[%s1 + $0x38] sm:$0xf]
      %v233 = vld [vmem:[%s1 + $0x3c] sm:$0xf]
      %v234 = vld [vmem:[%s1 + $0x40] sm:$0xf]
      %v235 = vld [vmem:[%s1 + $0x44] sm:$0xf]
      %v236 = vld [vmem:[%s1 + $0x48] sm:$0xf]
      %v237 = vld [vmem:[%s1 + $0x4c] sm:$0xf]
      %v238 = vld [vmem:[%s1 + $0x50] sm:$0xf]
      %v239 = vld [vmem:[%s1 + $0x54] sm:$0xf]
      %v240 = vld [vmem:[%s1 + $0x58] sm:$0xf]
      %v241 = vld [vmem:[%s1 + $0x5c] sm:$0xf]
      %v242 = vld [vmem:[%s1 + $0x60] sm:$0xf]
      %v243 = vld [vmem:[%s1 + $0x64] sm:$0xf]
      %v244 = vld [vmem:[%s1 + $0x68] sm:$0xf]
      %v245 = vld [vmem:[%s1 + $0x6c] sm:$0xf]
      %v246 = vld [vmem:[%s1 + $0x70] sm:$0xf]
      %v247 = vld [vmem:[%s1 + $0x74] sm:$0xf]
      %v248 = vld [vmem:[%s1 + $0x78] sm:$0xf]
      %v249 = vld [vmem:[%s1 + $0x7c] sm:$0xf]
      %v250 = vld [vmem:[%s1 + $0x80] sm:$0xf]
      %v251 = vld [vmem:[%s1 + $0x84] sm:$0xf]
      %v252 = vld [vmem:[%s1 + $0x88] sm:$0xf]
      %v253 = vld [vmem:[%s1 + $0x8c] sm:$0xf]
      %v254 = vld [vmem:[%s1 + $0x90] sm:$0xf]
      %v255 = vld [vmem:[%s1 + $0x94] sm:$0xf]
      %v256 = vld [vmem:[%s1 + $0x98] sm:$0xf]
      %v257 = vld [vmem:[%s1 + $0x9c] sm:$0xf]
      %v258 = vld [vmem:[%s1 + $0xa0] sm:$0xf]
      %v259 = vld [vmem:[%s1 + $0xa4] sm:$0xf]
      %v260 = vld [vmem:[%s1 + $0xa8] sm:$0xf]
      %v261 = vld [vmem:[%s1 + $0xac] sm:$0xf]
      %v262 = vld [vmem:[%s1 + $0xb0] sm:$0xf]
      %v263 = vld [vmem:[%s1 + $0xb4] sm:$0xf]
      %v264 = vld [vmem:[%s1 + $0xb8] sm:$0xf]
      %v265 = vld [vmem:[%s1 + $0xbc] sm:$0xf]
      %v266 = vld [vmem:[%s1 + $0xc0] sm:$0xf]
      %v267 = vld [vmem:[%s1 + $0xc4] sm:$0xf]
      %v268 = vld [vmem:[%s1 + $0xc8] sm:$0xf]
      %v269 = vld [vmem:[%s1 + $0xcc] sm:$0xf]
      %v270 = vld [vmem:[%s1 + $0xd0] sm:$0xf]
      %v271 = vld [vmem:[%s1 + $0xd4] sm:$0xf]
      %v272 = vld [vmem:[%s1 + $0xd8] sm:$0xf]
      %v273 = vld [vmem:[%s1 + $0xdc] sm:$0xf]
      %v274 = vld [vmem:[%s1 + $0xe0] sm:$0xf]
      %v275 = vld [vmem:[%s1 + $0xe4] sm:$0xf]
      %v276 = vld [vmem:[%s1 + $0xe8] sm:$0xf]
      %v277 = vld [vmem:[%s1 + $0xec] sm:$0xf]
      %v278 = vld [vmem:[%s1 + $0xf0] sm:$0xf]
      %v279 = vld [vmem:[%s1 + $0xf4] sm:$0xf]
      %v280 = vld [vmem:[%s1 + $0xf8] sm:$0xf]
      %v281 = vld [vmem:[%s1 + $0xfc] sm:$0xf]
      %v282 = vld [vmem:[%s1 + $0x100] sm:$0xf]
      %v283 = vld [vmem:[%s1 + $0x104] sm:$0xf]
      %v284 = vld [vmem:[%s1 + $0x108] sm:$0xf]
      %v285 = vld [vmem:[%s1 + $0x10c] sm:$0xf]
      %v286 = vld [vmem:[%s1 + $0x110] sm:$0xf]
      %v287 = vld [vmem:[%s1 + $0x114] sm:$0xf]
      %v288 = vld [vmem:[%s1 + $0x118] sm:$0xf]
      %v289 = vld [vmem:[%s1 + $0x11c] sm:$0xf]
      %v290 = vld [vmem:[%s1 + $0x120] sm:$0xf]
      %v291 = vld [vmem:[%s1 + $0x124] sm:$0xf]
      %v292 = vld [vmem:[%s1 + $0x128] sm:$0xf]
      %v293 = vld [vmem:[%s1 + $0x12c] sm:$0xf]
      %v294 = vld [vmem:[%s1 + $0x130] sm:$0xf]
      %v295 = vld [vmem:[%s1 + $0x134] sm:$0xf]
      %v296 = vld [vmem:[%s1 + $0x138] sm:$0xf]
      %v297 = vld [vmem:[%s1 + $0x13c] sm:$0xf]
      %v298 = vld [vmem:[%s1 + $0x140] sm:$0xf]
      %v299 = vld [vmem:[%s1 + $0x144] sm:$0xf]
      %v300 = vld [vmem:[%s1 + $0x148] sm:$0xf]
      %v301 = vld [vmem:[%s1 + $0x14c] sm:$0xf]
      %v302 = vld [vmem:[%s1 + $0x150] sm:$0xf]
      %v303 = vld [vmem:[%s1 + $0x154] sm:$0xf]
      %v304 = vld [vmem:[%s1 + $0x158] sm:$0xf]
      %v305 = vld [vmem:[%s1 + $0x15c] sm:$0xf]
      %v306 = vld [vmem:[%s1 + $0x160] sm:$0xf]
      %v307 = vld [vmem:[%s1 + $0x164] sm:$0xf]
      %v308 = vld [vmem:[%s1 + $0x168] sm:$0xf]
      %v309 = vld [vmem:[%s1 + $0x16c] sm:$0xf]
      %v310 = vld [vmem:[%s1 + $0x170] sm:$0xf]
      %v311 = vld [vmem:[%s1 + $0x174] sm:$0xf]
      %v312 = vld [vmem:[%s1 + $0x178] sm:$0xf]
      %v313 = vld [vmem:[%s1 + $0x17c] sm:$0xf]
      %v314 = vld [vmem:[%s1 + $0x180] sm:$0xf]
      %v315 = vld [vmem:[%s1 + $0x184] sm:$0xf]
      %v316 = vld [vmem:[%s1 + $0x188] sm:$0xf]
      %v317 = vld [vmem:[%s1 + $0x18c] sm:$0xf]
      %v318 = vld [vmem:[%s1 + $0x190] sm:$0xf]
      %v319 = vld [vmem:[%s1 + $0x194] sm:$0xf]
      %v320 = vld [vmem:[%s1 + $0x198] sm:$0xf]
      %v321 = vld [vmem:[%s1 + $0x19c] sm:$0xf]
      %v322 = vld [vmem:[%s1 + $0x1a0] sm:$0xf]
      %v323 = vld [vmem:[%s1 + $0x1a4] sm:$0xf]
      %v324 = vld [vmem:[%s1 + $0x1a8] sm:$0xf]
      %v325 = vld [vmem:[%s1 + $0x1ac] sm:$0xf]
      %v326 = vld [vmem:[%s1 + $0x1b0] sm:$0xf]
      %v327 = vld [vmem:[%s1 + $0x1b4] sm:$0xf]
      %v328 = vld [vmem:[%s1 + $0x1b8] sm:$0xf]
      %v329 = vld [vmem:[%s1 + $0x1bc] sm:$0xf]
      %v330 = vld [vmem:[%s1 + $0x1c0] sm:$0xf]
      %v331 = vld [vmem:[%s1 + $0x1c4] sm:$0xf]
      %v332 = vld [vmem:[%s1 + $0x1c8] sm:$0xf]
      %v333 = vld [vmem:[%s1 + $0x1cc] sm:$0xf]
      %v334 = vld [vmem:[%s1 + $0x1d0] sm:$0xf]
      %v335 = vld [vmem:[%s1 + $0x1d4] sm:$0xf]
      %v336 = vld [vmem:[%s1 + $0x1d8] sm:$0xf]
      %v337 = vld [vmem:[%s1 + $0x1dc] sm:$0xf]
      %v338 = vld [vmem:[%s1 + $0x1e0] sm:$0xf]
      %v339 = vld [vmem:[%s1 + $0x1e4] sm:$0xf]
      %v340 = vld [vmem:[%s1 + $0x1e8] sm:$0xf]
      %v341 = vld [vmem:[%s1 + $0x1ec] sm:$0xf]
      %v342 = vld [vmem:[%s1 + $0x1f0] sm:$0xf]
      %v343 = vld [vmem:[%s1 + $0x1f4] sm:$0xf]
      %v344 = vld [vmem:[%s1 + $0x1f8] sm:$0xf]
      %v345 = vld [vmem:[%s1 + $0x1fc] sm:$0xf]
      %v346 = vld [vmem:[%s1 + $0x200] sm:$0xf]
      %v347 = vld [vmem:[%s1 + $0x204] sm:$0xf]
      %v348 = vld [vmem:[%s1 + $0x208] sm:$0xf]
      %v349 = vld [vmem:[%s1 + $0x20c] sm:$0xf]
      %v350 = vld [vmem:[%s1 + $0x210] sm:$0xf]
      %v351 = vld [vmem:[%s1 + $0x214] sm:$0xf]
      %v352 = vld [vmem:[%s1 + $0x218] sm:$0xf]
      %v353 = vld [vmem:[%s1 + $0x21c] sm:$0xf]
      %v354 = vld [vmem:[%s1 + $0x220] sm:$0xf]
      %v355 = vld [vmem:[%s1 + $0x224] sm:$0xf]
      %v356 = vld [vmem:[%s1 + $0x228] sm:$0xf]
      %v357 = vld [vmem:[%s1 + $0x22c] sm:$0xf]
      %v358 = vld [vmem:[%s1 + $0x230] sm:$0xf]
      %v359 = vld [vmem:[%s1 + $0x234] sm:$0xf]
      %v360 = vld [vmem:[%s1 + $0x238] sm:$0xf]
      %v361 = vld [vmem:[%s1 + $0x23c] sm:$0xf]
      %v362 = vld [vmem:[%s2] sm:$0x1]
      %v364 = vlaneseq
      %v365 = vshrl.u32 %v364, 7
      %v366 = vsub.s32 0, %v365
      %v367 = vrot.slane %v362, %v366
      %v409 = vunpack.c.l.b16 %v178
      %v410 = vunpack.c.h.b16 %v178
      %v411 = vunpack.c.l.b16 %v179
      %v412 = vunpack.c.h.b16 %v179
      %v413 = vunpack.c.l.b16 %v180
      %v414 = vunpack.c.h.b16 %v180
      %v415 = vunpack.c.l.b16 %v181
      %v416 = vunpack.c.h.b16 %v181
      %v417 = vunpack.c.l.b16 %v182
      %v418 = vunpack.c.l.b16 %v183
      %v419 = vunpack.c.h.b16 %v183
      %v420 = vunpack.c.l.b16 %v184
      %v421 = vunpack.c.h.b16 %v184
      %v422 = vunpack.c.l.b16 %v185
      %v423 = vunpack.c.h.b16 %v185
      %v424 = vunpack.c.l.b16 %v186
      %v425 = vunpack.c.h.b16 %v186
      %v426 = vunpack.c.l.b16 %v187
      %v427 = vunpack.c.l.b16 %v188
      %v428 = vunpack.c.h.b16 %v188
      %v429 = vunpack.c.l.b16 %v189
      %v430 = vunpack.c.h.b16 %v189
      %v431 = vunpack.c.l.b16 %v190
      %v432 = vunpack.c.h.b16 %v190
      %v433 = vunpack.c.l.b16 %v191
      %v434 = vunpack.c.h.b16 %v191
      %v435 = vunpack.c.l.b16 %v192
      %v436 = vunpack.c.l.b16 %v193
      %v437 = vunpack.c.h.b16 %v193
      %v438 = vunpack.c.l.b16 %v194
      %v439 = vunpack.c.h.b16 %v194
      %v440 = vunpack.c.l.b16 %v195
      %v441 = vunpack.c.h.b16 %v195
      %v442 = vunpack.c.l.b16 %v196
      %v443 = vunpack.c.h.b16 %v196
      %v444 = vunpack.c.l.b16 %v197
      %v445 = vunpack.c.l.b16 %v198
      %v446 = vunpack.c.h.b16 %v198
      %v447 = vunpack.c.l.b16 %v199
      %v448 = vunpack.c.h.b16 %v199
      %v449 = vunpack.c.l.b16 %v200
      %v450 = vunpack.c.h.b16 %v200
      %v451 = vunpack.c.l.b16 %v201
      %v452 = vunpack.c.h.b16 %v201
      %v453 = vunpack.c.l.b16 %v202
      %v454 = vunpack.c.l.b16 %v203
      %v455 = vunpack.c.h.b16 %v203
      %v456 = vunpack.c.l.b16 %v204
      %v457 = vunpack.c.h.b16 %v204
      %v458 = vunpack.c.l.b16 %v205
      %v459 = vunpack.c.h.b16 %v205
      %v460 = vunpack.c.l.b16 %v206
      %v461 = vunpack.c.h.b16 %v206
      %v462 = vunpack.c.l.b16 %v207
      %v463 = vunpack.c.l.b16 %v208
      %v464 = vunpack.c.h.b16 %v208
      %v465 = vunpack.c.l.b16 %v209
      %v466 = vunpack.c.h.b16 %v209
      %v467 = vunpack.c.l.b16 %v210
      %v468 = vunpack.c.h.b16 %v210
      %v469 = vunpack.c.l.b16 %v211
      %v470 = vunpack.c.h.b16 %v211
      %v471 = vunpack.c.l.b16 %v212
      %v472 = vunpack.c.l.b16 %v213
      %v473 = vunpack.c.h.b16 %v213
      %v474 = vunpack.c.l.b16 %v214
      %v475 = vunpack.c.h.b16 %v214
      %v476 = vunpack.c.l.b16 %v215
      %v477 = vunpack.c.h.b16 %v215
      %v478 = vunpack.c.l.b16 %v216
      %v479 = vunpack.c.h.b16 %v216
      %v480 = vunpack.c.l.b16 %v217
      %v481 = vpack.c.b16 %v418, %v409
      %v482 = vpack.c.b16 %v419, %v410
      %v483 = vpack.c.b16 %v420, %v411
      %v484 = vpack.c.b16 %v421, %v412
      %v485 = vpack.c.b16 %v422, %v413
      %v486 = vpack.c.b16 %v423, %v414
      %v487 = vpack.c.b16 %v424, %v415
      %v488 = vpack.c.b16 %v425, %v416
      %v489 = vpack.c.b16 %v426, %v417
      %v490 = vpack.c.b16 %v436, %v427
      %v491 = vpack.c.b16 %v437, %v428
      %v492 = vpack.c.b16 %v438, %v429
      %v493 = vpack.c.b16 %v439, %v430
      %v494 = vpack.c.b16 %v440, %v431
      %v495 = vpack.c.b16 %v441, %v432
      %v496 = vpack.c.b16 %v442, %v433
      %v497 = vpack.c.b16 %v443, %v434
      %v498 = vpack.c.b16 %v444, %v435
      %v499 = vpack.c.b16 %v454, %v445
      %v500 = vpack.c.b16 %v455, %v446
      %v501 = vpack.c.b16 %v456, %v447
      %v502 = vpack.c.b16 %v457, %v448
      %v503 = vpack.c.b16 %v458, %v449
      %v504 = vpack.c.b16 %v459, %v450
      %v505 = vpack.c.b16 %v460, %v451
      %v506 = vpack.c.b16 %v461, %v452
      %v507 = vpack.c.b16 %v462, %v453
      %v508 = vpack.c.b16 %v472, %v463
      %v509 = vpack.c.b16 %v473, %v464
      %v510 = vpack.c.b16 %v474, %v465
      %v511 = vpack.c.b16 %v475, %v466
      %v512 = vpack.c.b16 %v476, %v467
      %v513 = vpack.c.b16 %v477, %v468
      %v514 = vpack.c.b16 %v478, %v469
      %v515 = vpack.c.b16 %v479, %v470
      %v516 = vpack.c.b16 %v480, %v471
      %v697 = vunpack.c.l.b16 %v218
      %v698 = vunpack.c.l.b16 %v219
      %v699 = vunpack.c.l.b16 %v220
      %v700 = vunpack.c.l.b16 %v221
      %v701 = vunpack.c.l.b16 %v222
      %v702 = vunpack.c.l.b16 %v223
      %v703 = vunpack.c.l.b16 %v224
      %v704 = vunpack.c.l.b16 %v225
      %v705 = vunpack.c.l.b16 %v226
      %v706 = vunpack.c.l.b16 %v227
      %v707 = vunpack.c.l.b16 %v228
      %v708 = vunpack.c.l.b16 %v229
      %v709 = vunpack.c.l.b16 %v230
      %v710 = vunpack.c.l.b16 %v231
      %v711 = vunpack.c.l.b16 %v232
      %v712 = vunpack.c.l.b16 %v233
      %v713 = vunpack.c.l.b16 %v234
      %v714 = vunpack.c.l.b16 %v235
      %v715 = vunpack.c.l.b16 %v236
      %v716 = vunpack.c.l.b16 %v237
      %v717 = vunpack.c.l.b16 %v238
      %v718 = vunpack.c.l.b16 %v239
      %v719 = vunpack.c.l.b16 %v240
      %v720 = vunpack.c.l.b16 %v241
      %v721 = vunpack.c.l.b16 %v242
      %v722 = vunpack.c.l.b16 %v243
      %v723 = vunpack.c.l.b16 %v244
      %v724 = vunpack.c.l.b16 %v245
      %v725 = vunpack.c.l.b16 %v246
      %v726 = vunpack.c.l.b16 %v247
      %v727 = vunpack.c.l.b16 %v248
      %v728 = vunpack.c.l.b16 %v249
      %v729 = vunpack.c.l.b16 %v250
      %v730 = vunpack.c.l.b16 %v251
      %v731 = vunpack.c.l.b16 %v252
      %v732 = vunpack.c.l.b16 %v253
      %v733 = vunpack.c.l.b16 %v254
      %v734 = vunpack.c.l.b16 %v255
      %v735 = vunpack.c.l.b16 %v256
      %v736 = vunpack.c.l.b16 %v257
      %v737 = vunpack.c.l.b16 %v258
      %v738 = vunpack.c.l.b16 %v259
      %v739 = vunpack.c.l.b16 %v260
      %v740 = vunpack.c.l.b16 %v261
      %v741 = vunpack.c.l.b16 %v262
      %v742 = vunpack.c.l.b16 %v263
      %v743 = vunpack.c.l.b16 %v264
      %v744 = vunpack.c.l.b16 %v265
      %v745 = vunpack.c.l.b16 %v266
      %v746 = vunpack.c.l.b16 %v267
      %v747 = vunpack.c.l.b16 %v268
      %v748 = vunpack.c.l.b16 %v269
      %v749 = vunpack.c.l.b16 %v270
      %v750 = vunpack.c.l.b16 %v271
      %v751 = vunpack.c.l.b16 %v272
      %v752 = vunpack.c.l.b16 %v273
      %v753 = vunpack.c.l.b16 %v274
      %v754 = vunpack.c.l.b16 %v275
      %v755 = vunpack.c.l.b16 %v276
      %v756 = vunpack.c.l.b16 %v277
      %v757 = vunpack.c.l.b16 %v278
      %v758 = vunpack.c.l.b16 %v279
      %v759 = vunpack.c.l.b16 %v280
      %v760 = vunpack.c.l.b16 %v281
      %v761 = vunpack.c.l.b16 %v282
      %v762 = vunpack.c.l.b16 %v283
      %v763 = vunpack.c.l.b16 %v284
      %v764 = vunpack.c.l.b16 %v285
      %v765 = vunpack.c.l.b16 %v286
      %v766 = vunpack.c.l.b16 %v287
      %v767 = vunpack.c.l.b16 %v288
      %v768 = vunpack.c.l.b16 %v289
      %v769 = vunpack.c.l.b16 %v290
      %v770 = vunpack.c.l.b16 %v291
      %v771 = vunpack.c.l.b16 %v292
      %v772 = vunpack.c.l.b16 %v293
      %v773 = vunpack.c.l.b16 %v294
      %v774 = vunpack.c.l.b16 %v295
      %v775 = vunpack.c.l.b16 %v296
      %v776 = vunpack.c.l.b16 %v297
      %v777 = vunpack.c.l.b16 %v298
      %v778 = vunpack.c.l.b16 %v299
      %v779 = vunpack.c.l.b16 %v300
      %v780 = vunpack.c.l.b16 %v301
      %v781 = vunpack.c.l.b16 %v302
      %v782 = vunpack.c.l.b16 %v303
      %v783 = vunpack.c.l.b16 %v304
      %v784 = vunpack.c.l.b16 %v305
      %v785 = vunpack.c.l.b16 %v306
      %v786 = vunpack.c.l.b16 %v307
      %v787 = vunpack.c.l.b16 %v308
      %v788 = vunpack.c.l.b16 %v309
      %v789 = vunpack.c.l.b16 %v310
      %v790 = vunpack.c.l.b16 %v311
      %v791 = vunpack.c.l.b16 %v312
      %v792 = vunpack.c.l.b16 %v313
      %v793 = vunpack.c.l.b16 %v314
      %v794 = vunpack.c.l.b16 %v315
      %v795 = vunpack.c.l.b16 %v316
      %v796 = vunpack.c.l.b16 %v317
      %v797 = vunpack.c.l.b16 %v318
      %v798 = vunpack.c.l.b16 %v319
      %v799 = vunpack.c.l.b16 %v320
      %v800 = vunpack.c.l.b16 %v321
      %v801 = vunpack.c.l.b16 %v322
      %v802 = vunpack.c.l.b16 %v323
      %v803 = vunpack.c.l.b16 %v324
      %v804 = vunpack.c.l.b16 %v325
      %v805 = vunpack.c.l.b16 %v326
      %v806 = vunpack.c.l.b16 %v327
      %v807 = vunpack.c.l.b16 %v328
      %v808 = vunpack.c.l.b16 %v329
      %v809 = vunpack.c.l.b16 %v330
      %v810 = vunpack.c.l.b16 %v331
      %v811 = vunpack.c.l.b16 %v332
      %v812 = vunpack.c.l.b16 %v333
      %v813 = vunpack.c.l.b16 %v334
      %v814 = vunpack.c.l.b16 %v335
      %v815 = vunpack.c.l.b16 %v336
      %v816 = vunpack.c.l.b16 %v337
      %v817 = vunpack.c.l.b16 %v338
      %v818 = vunpack.c.l.b16 %v339
      %v819 = vunpack.c.l.b16 %v340
      %v820 = vunpack.c.l.b16 %v341
      %v821 = vunpack.c.l.b16 %v342
      %v822 = vunpack.c.l.b16 %v343
      %v823 = vunpack.c.l.b16 %v344
      %v824 = vunpack.c.l.b16 %v345
      %v825 = vunpack.c.l.b16 %v346
      %v826 = vunpack.c.l.b16 %v347
      %v827 = vunpack.c.l.b16 %v348
      %v828 = vunpack.c.l.b16 %v349
      %v829 = vunpack.c.l.b16 %v350
      %v830 = vunpack.c.l.b16 %v351
      %v831 = vunpack.c.l.b16 %v352
      %v832 = vunpack.c.l.b16 %v353
      %v833 = vunpack.c.l.b16 %v354
      %v834 = vunpack.c.l.b16 %v355
      %v835 = vunpack.c.l.b16 %v356
      %v836 = vunpack.c.l.b16 %v357
      %v837 = vunpack.c.l.b16 %v358
      %v838 = vunpack.c.l.b16 %v359
      %v839 = vunpack.c.l.b16 %v360
      %v840 = vunpack.c.l.b16 %v361
      %v841 = vpack.c.b16 %v698, %v697
      %v842 = vpack.c.b16 %v700, %v699
      %v843 = vpack.c.b16 %v702, %v701
      %v844 = vpack.c.b16 %v704, %v703
      %v845 = vpack.c.b16 %v706, %v705
      %v846 = vpack.c.b16 %v708, %v707
      %v847 = vpack.c.b16 %v710, %v709
      %v848 = vpack.c.b16 %v712, %v711
      %v849 = vpack.c.b16 %v714, %v713
      %v850 = vpack.c.b16 %v716, %v715
      %v851 = vpack.c.b16 %v718, %v717
      %v852 = vpack.c.b16 %v720, %v719
      %v853 = vpack.c.b16 %v722, %v721
      %v854 = vpack.c.b16 %v724, %v723
      %v855 = vpack.c.b16 %v726, %v725
      %v856 = vpack.c.b16 %v728, %v727
      %v857 = vpack.c.b16 %v730, %v729
      %v858 = vpack.c.b16 %v732, %v731
      %v859 = vpack.c.b16 %v734, %v733
      %v860 = vpack.c.b16 %v736, %v735
      %v861 = vpack.c.b16 %v738, %v737
      %v862 = vpack.c.b16 %v740, %v739
      %v863 = vpack.c.b16 %v742, %v741
      %v864 = vpack.c.b16 %v744, %v743
      %v865 = vpack.c.b16 %v746, %v745
      %v866 = vpack.c.b16 %v748, %v747
      %v867 = vpack.c.b16 %v750, %v749
      %v868 = vpack.c.b16 %v752, %v751
      %v869 = vpack.c.b16 %v754, %v753
      %v870 = vpack.c.b16 %v756, %v755
      %v871 = vpack.c.b16 %v758, %v757
      %v872 = vpack.c.b16 %v760, %v759
      %v873 = vpack.c.b16 %v762, %v761
      %v874 = vpack.c.b16 %v764, %v763
      %v875 = vpack.c.b16 %v766, %v765
      %v876 = vpack.c.b16 %v768, %v767
      %v877 = vpack.c.b16 %v770, %v769
      %v878 = vpack.c.b16 %v772, %v771
      %v879 = vpack.c.b16 %v774, %v773
      %v880 = vpack.c.b16 %v776, %v775
      %v881 = vpack.c.b16 %v778, %v777
      %v882 = vpack.c.b16 %v780, %v779
      %v883 = vpack.c.b16 %v782, %v781
      %v884 = vpack.c.b16 %v784, %v783
      %v885 = vpack.c.b16 %v786, %v785
      %v886 = vpack.c.b16 %v788, %v787
      %v887 = vpack.c.b16 %v790, %v789
      %v888 = vpack.c.b16 %v792, %v791
      %v889 = vpack.c.b16 %v794, %v793
      %v890 = vpack.c.b16 %v796, %v795
      %v891 = vpack.c.b16 %v798, %v797
      %v892 = vpack.c.b16 %v800, %v799
      %v893 = vpack.c.b16 %v802, %v801
      %v894 = vpack.c.b16 %v804, %v803
      %v895 = vpack.c.b16 %v806, %v805
      %v896 = vpack.c.b16 %v808, %v807
      %v897 = vpack.c.b16 %v810, %v809
      %v898 = vpack.c.b16 %v812, %v811
      %v899 = vpack.c.b16 %v814, %v813
      %v900 = vpack.c.b16 %v816, %v815
      %v901 = vpack.c.b16 %v818, %v817
      %v902 = vpack.c.b16 %v820, %v819
      %v903 = vpack.c.b16 %v822, %v821
      %v904 = vpack.c.b16 %v824, %v823
      %v905 = vpack.c.b16 %v826, %v825
      %v906 = vpack.c.b16 %v828, %v827
      %v907 = vpack.c.b16 %v830, %v829
      %v908 = vpack.c.b16 %v832, %v831
      %v909 = vpack.c.b16 %v834, %v833
      %v910 = vpack.c.b16 %v836, %v835
      %v911 = vpack.c.b16 %v838, %v837
      %v912 = vpack.c.b16 %v840, %v839
      %985 = vmatprep.subr.bf16.mxu0 0
      %986 = vmatpush1.bf16.msra.mxu0 %v841
      %987 = vmatprep.subr.bf16.mxu0 0
      %988 = vmatpush1.bf16.msra.mxu0 %v842
      %989 = vmatprep.subr.bf16.mxu0 0
      %990 = vmatpush1.bf16.msra.mxu0 %v843
      %991 = vmatprep.subr.bf16.mxu0 0
      %992 = vmatpush1.bf16.msra.mxu0 %v844
      %993 = vmatprep.subr.bf16.mxu0 0
      %994 = vmatpush1.bf16.msra.mxu0 %v845
      %995 = vmatprep.subr.bf16.mxu0 0
      %996 = vmatpush1.bf16.msra.mxu0 %v846
      %997 = vmatprep.subr.bf16.mxu0 0
      %998 = vmatpush1.bf16.msra.mxu0 %v847
      %999 = vmatprep.subr.bf16.mxu0 0
      %1000 = vmatpush1.bf16.msra.mxu0 %v848
      %1001 = vmatprep.subr.bf16.mxu0 0
      %1002 = vmatpush1.bf16.msra.mxu0 %v849
      %1003 = vmatprep.subr.bf16.mxu0 0
      %1004 = vmatpush1.bf16.msra.mxu0 %v850
      %1005 = vmatprep.subr.bf16.mxu0 0
      %1006 = vmatpush1.bf16.msra.mxu0 %v851
      %1007 = vmatprep.subr.bf16.mxu0 0
      %1008 = vmatpush1.bf16.msra.mxu0 %v852
      %1009 = vmatprep.subr.bf16.mxu0 0
      %1010 = vmatpush1.bf16.msra.mxu0 %v853
      %1011 = vmatprep.subr.bf16.mxu0 0
      %1012 = vmatpush1.bf16.msra.mxu0 %v854
      %1013 = vmatprep.subr.bf16.mxu0 0
      %1014 = vmatpush1.bf16.msra.mxu0 %v855
      %1015 = vmatprep.subr.bf16.mxu0 0
      %1016 = vmatpush1.bf16.msra.mxu0 %v856
      %1017 = vmatprep.mubr.bf16.mxu0 %v482
      %1018 = vmatmul.mubr.bf16.gmra.mrb[0].mxu0 %v481
      %v1019 = vpop.f32.mrb[0].mxu0
      %v1020 = vadd.f32 %v367, %v1019
      %v1021 = vpop.f32.mrb[0].mxu0
      %v1022 = vpop.f32.mrb[0].mxu0
      %v1023 = vadd.f32 %v367, %v1022
      %v1024 = vpop.f32.mrb[0].mxu0
      %1025 = vmatprep.mubr.bf16.mxu0 %v491
      %1026 = vmatmul.mubr.bf16.gmra.mrb[0].mxu0 %v490
      %v1027 = vpop.f32.mrb[0].mxu0
      %v1028 = vadd.f32 %v367, %v1027
      %v1029 = vpop.f32.mrb[0].mxu0
      %v1030 = vpop.f32.mrb[0].mxu0
      %v1031 = vadd.f32 %v367, %v1030
      %v1032 = vpop.f32.mrb[0].mxu0
      %1033 = vmatprep.mubr.bf16.mxu0 %v500
      %1034 = vmatmul.mubr.bf16.gmra.mrb[0].mxu0 %v499
      %v1035 = vpop.f32.mrb[0].mxu0
      %v1036 = vadd.f32 %v367, %v1035
      %v1037 = vpop.f32.mrb[0].mxu0
      %v1038 = vpop.f32.mrb[0].mxu0
      %v1039 = vadd.f32 %v367, %v1038
      %v1040 = vpop.f32.mrb[0].mxu0
      %1041 = vmatprep.mubr.bf16.mxu0 %v509
      %1042 = vmatmul.mubr.bf16.gmra.mrb[0].mxu0 %v508
      %v1043 = vpop.f32.mrb[0].mxu0
      %v1044 = vadd.f32 %v367, %v1043
      %v1045 = vpop.f32.mrb[0].mxu0
      %v1046 = vpop.f32.mrb[0].mxu0
      %v1047 = vadd.f32 %v367, %v1046
      %v1048 = vpop.f32.mrb[0].mxu0
      %1049 = vdwg.mxu0
      %1050 = vmatprep.subr.bf16.mxu0 0
      %1051 = vmatpush1.bf16.msra.mxu0 %v857
      %1052 = vmatprep.subr.bf16.mxu0 0
      %1053 = vmatpush1.bf16.msra.mxu0 %v858
      %1054 = vmatprep.subr.bf16.mxu0 0
      %1055 = vmatpush1.bf16.msra.mxu0 %v859
      %1056 = vmatprep.subr.bf16.mxu0 0
      %1057 = vmatpush1.bf16.msra.mxu0 %v860
      %1058 = vmatprep.subr.bf16.mxu0 0
      %1059 = vmatpush1.bf16.msra.mxu0 %v861
      %1060 = vmatprep.subr.bf16.mxu0 0
      %1061 = vmatpush1.bf16.msra.mxu0 %v862
      %1062 = vmatprep.subr.bf16.mxu0 0
      %1063 = vmatpush1.bf16.msra.mxu0 %v863
      %1064 = vmatprep.subr.bf16.mxu0 0
      %1065 = vmatpush1.bf16.msra.mxu0 %v864
      %1066 = vmatprep.subr.bf16.mxu0 0
      %1067 = vmatpush1.bf16.msra.mxu0 %v865
      %1068 = vmatprep.subr.bf16.mxu0 0
      %1069 = vmatpush1.bf16.msra.mxu0 %v866
      %1070 = vmatprep.subr.bf16.mxu0 0
      %1071 = vmatpush1.bf16.msra.mxu0 %v867
      %1072 = vmatprep.subr.bf16.mxu0 0
      %1073 = vmatpush1.bf16.msra.mxu0 %v868
      %1074 = vmatprep.subr.bf16.mxu0 0
      %1075 = vmatpush1.bf16.msra.mxu0 %v869
      %1076 = vmatprep.subr.bf16.mxu0 0
      %1077 = vmatpush1.bf16.msra.mxu0 %v870
      %1078 = vmatprep.subr.bf16.mxu0 0
      %1079 = vmatpush1.bf16.msra.mxu0 %v871
      %1080 = vmatprep.subr.bf16.mxu0 0
      %1081 = vmatpush1.bf16.msra.mxu0 %v872
      %1082 = vmatprep.mubr.bf16.mxu0 %v484
      %1083 = vmatmul.mubr.bf16.gmra.mrb[0].mxu0 %v483
      %v1084 = vpop.f32.mrb[0].mxu0
      %v1085 = vadd.f32 %v1020, %v1084
      %v1086 = vpop.f32.mrb[0].mxu0
      %v1087 = vpop.f32.mrb[0].mxu0
      %v1088 = vadd.f32 %v1023, %v1087
      %v1089 = vpop.f32.mrb[0].mxu0
      %1090 = vmatprep.mubr.bf16.mxu0 %v493
      %1091 = vmatmul.mubr.bf16.gmra.mrb[0].mxu0 %v492
      %v1092 = vpop.f32.mrb[0].mxu0
      %v1093 = vadd.f32 %v1028, %v1092
      %v1094 = vpop.f32.mrb[0].mxu0
      %v1095 = vpop.f32.mrb[0].mxu0
      %v1096 = vadd.f32 %v1031, %v1095
      %v1097 = vpop.f32.mrb[0].mxu0
      %1098 = vmatprep.mubr.bf16.mxu0 %v502
      %1099 = vmatmul.mubr.bf16.gmra.mrb[0].mxu0 %v501
      %v1100 = vpop.f32.mrb[0].mxu0
      %v1101 = vadd.f32 %v1036, %v1100
      %v1102 = vpop.f32.mrb[0].mxu0
      %v1103 = vpop.f32.mrb[0].mxu0
      %v1104 = vadd.f32 %v1039, %v1103
      %v1105 = vpop.f32.mrb[0].mxu0
      %1106 = vmatprep.mubr.bf16.mxu0 %v511
      %1107 = vmatmul.mubr.bf16.gmra.mrb[0].mxu0 %v510
      %v1108 = vpop.f32.mrb[0].mxu0
      %v1109 = vadd.f32 %v1044, %v1108
      %v1110 = vpop.f32.mrb[0].mxu0
      %v1111 = vpop.f32.mrb[0].mxu0
      %v1112 = vadd.f32 %v1047, %v1111
      %v1113 = vpop.f32.mrb[0].mxu0
      %1114 = vdwg.mxu0
      %1115 = vmatprep.subr.bf16.mxu0 0
      %1116 = vmatpush1.bf16.msra.mxu0 %v873
      %1117 = vmatprep.subr.bf16.mxu0 0
      %1118 = vmatpush1.bf16.msra.mxu0 %v874
      %1119 = vmatprep.subr.bf16.mxu0 0
      %1120 = vmatpush1.bf16.msra.mxu0 %v875
      %1121 = vmatprep.subr.bf16.mxu0 0
      %1122 = vmatpush1.bf16.msra.mxu0 %v876
      %1123 = vmatprep.subr.bf16.mxu0 0
      %1124 = vmatpush1.bf16.msra.mxu0 %v877
      %1125 = vmatprep.subr.bf16.mxu0 0
      %1126 = vmatpush1.bf16.msra.mxu0 %v878
      %1127 = vmatprep.subr.bf16.mxu0 0
      %1128 = vmatpush1.bf16.msra.mxu0 %v879
      %1129 = vmatprep.subr.bf16.mxu0 0
      %1130 = vmatpush1.bf16.msra.mxu0 %v880
      %1131 = vmatprep.subr.bf16.mxu0 0
      %1132 = vmatpush1.bf16.msra.mxu0 %v881
      %1133 = vmatprep.subr.bf16.mxu0 0
      %1134 = vmatpush1.bf16.msra.mxu0 %v882
      %1135 = vmatprep.subr.bf16.mxu0 0
      %1136 = vmatpush1.bf16.msra.mxu0 %v883
      %1137 = vmatprep.subr.bf16.mxu0 0
      %1138 = vmatpush1.bf16.msra.mxu0 %v884
      %1139 = vmatprep.subr.bf16.mxu0 0
      %1140 = vmatpush1.bf16.msra.mxu0 %v885
      %1141 = vmatprep.subr.bf16.mxu0 0
      %1142 = vmatpush1.bf16.msra.mxu0 %v886
      %1143 = vmatprep.subr.bf16.mxu0 0
      %1144 = vmatpush1.bf16.msra.mxu0 %v887
      %1145 = vmatprep.subr.bf16.mxu0 0
      %1146 = vmatpush1.bf16.msra.mxu0 %v888
      %1147 = vmatprep.mubr.bf16.mxu0 %v486
      %1148 = vmatmul.mubr.bf16.gmra.mrb[0].mxu0 %v485
      %v1149 = vpop.f32.mrb[0].mxu0
      %v1150 = vadd.f32 %v1085, %v1149
      %v1151 = vpop.f32.mrb[0].mxu0
      %v1152 = vpop.f32.mrb[0].mxu0
      %v1153 = vadd.f32 %v1088, %v1152
      %v1154 = vpop.f32.mrb[0].mxu0
      %1155 = vmatprep.mubr.bf16.mxu0 %v495
      %1156 = vmatmul.mubr.bf16.gmra.mrb[0].mxu0 %v494
      %v1157 = vpop.f32.mrb[0].mxu0
      %v1158 = vadd.f32 %v1093, %v1157
      %v1159 = vpop.f32.mrb[0].mxu0
      %v1160 = vpop.f32.mrb[0].mxu0
      %v1161 = vadd.f32 %v1096, %v1160
      %v1162 = vpop.f32.mrb[0].mxu0
      %1163 = vmatprep.mubr.bf16.mxu0 %v504
      %1164 = vmatmul.mubr.bf16.gmra.mrb[0].mxu0 %v503
      %v1165 = vpop.f32.mrb[0].mxu0
      %v1166 = vadd.f32 %v1101, %v1165
      %v1167 = vpop.f32.mrb[0].mxu0
      %v1168 = vpop.f32.mrb[0].mxu0
      %v1169 = vadd.f32 %v1104, %v1168
      %v1170 = vpop.f32.mrb[0].mxu0
      %1171 = vmatprep.mubr.bf16.mxu0 %v513
      %1172 = vmatmul.mubr.bf16.gmra.mrb[0].mxu0 %v512
      %v1173 = vpop.f32.mrb[0].mxu0
      %v1174 = vadd.f32 %v1109, %v1173
      %v1175 = vpop.f32.mrb[0].mxu0
      %v1176 = vpop.f32.mrb[0].mxu0
      %v1177 = vadd.f32 %v1112, %v1176
      %v1178 = vpop.f32.mrb[0].mxu0
      %1179 = vdwg.mxu0
      %1180 = vmatprep.subr.bf16.mxu0 0
      %1181 = vmatpush1.bf16.msra.mxu0 %v889
      %1182 = vmatprep.subr.bf16.mxu0 0
      %1183 = vmatpush1.bf16.msra.mxu0 %v890
      %1184 = vmatprep.subr.bf16.mxu0 0
      %1185 = vmatpush1.bf16.msra.mxu0 %v891
      %1186 = vmatprep.subr.bf16.mxu0 0
      %1187 = vmatpush1.bf16.msra.mxu0 %v892
      %1188 = vmatprep.subr.bf16.mxu0 0
      %1189 = vmatpush1.bf16.msra.mxu0 %v893
      %1190 = vmatprep.subr.bf16.mxu0 0
      %1191 = vmatpush1.bf16.msra.mxu0 %v894
      %1192 = vmatprep.subr.bf16.mxu0 0
      %1193 = vmatpush1.bf16.msra.mxu0 %v895
      %1194 = vmatprep.subr.bf16.mxu0 0
      %1195 = vmatpush1.bf16.msra.mxu0 %v896
      %1196 = vmatprep.subr.bf16.mxu0 0
      %1197 = vmatpush1.bf16.msra.mxu0 %v897
      %1198 = vmatprep.subr.bf16.mxu0 0
      %1199 = vmatpush1.bf16.msra.mxu0 %v898
      %1200 = vmatprep.subr.bf16.mxu0 0
      %1201 = vmatpush1.bf16.msra.mxu0 %v899
      %1202 = vmatprep.subr.bf16.mxu0 0
      %1203 = vmatpush1.bf16.msra.mxu0 %v900
      %1204 = vmatprep.subr.bf16.mxu0 0
      %1205 = vmatpush1.bf16.msra.mxu0 %v901
      %1206 = vmatprep.subr.bf16.mxu0 0
      %1207 = vmatpush1.bf16.msra.mxu0 %v902
      %1208 = vmatprep.subr.bf16.mxu0 0
      %1209 = vmatpush1.bf16.msra.mxu0 %v903
      %1210 = vmatprep.subr.bf16.mxu0 0
      %1211 = vmatpush1.bf16.msra.mxu0 %v904
      %1212 = vmatprep.mubr.bf16.mxu0 %v488
      %1213 = vmatmul.mubr.bf16.gmra.mrb[0].mxu0 %v487
      %v1214 = vpop.f32.mrb[0].mxu0
      %v1215 = vadd.f32 %v1150, %v1214
      %v1216 = vpop.f32.mrb[0].mxu0
      %v1217 = vpop.f32.mrb[0].mxu0
      %v1218 = vadd.f32 %v1153, %v1217
      %v1219 = vpop.f32.mrb[0].mxu0
      %1220 = vmatprep.mubr.bf16.mxu0 %v497
      %1221 = vmatmul.mubr.bf16.gmra.mrb[0].mxu0 %v496
      %v1222 = vpop.f32.mrb[0].mxu0
      %v1223 = vadd.f32 %v1158, %v1222
      %v1224 = vpop.f32.mrb[0].mxu0
      %v1225 = vpop.f32.mrb[0].mxu0
      %v1226 = vadd.f32 %v1161, %v1225
      %v1227 = vpop.f32.mrb[0].mxu0
      %1228 = vmatprep.mubr.bf16.mxu0 %v506
      %1229 = vmatmul.mubr.bf16.gmra.mrb[0].mxu0 %v505
      %v1230 = vpop.f32.mrb[0].mxu0
      %v1231 = vadd.f32 %v1166, %v1230
      %v1232 = vpop.f32.mrb[0].mxu0
      %v1233 = vpop.f32.mrb[0].mxu0
      %v1234 = vadd.f32 %v1169, %v1233
      %v1235 = vpop.f32.mrb[0].mxu0
      %1236 = vmatprep.mubr.bf16.mxu0 %v515
      %1237 = vmatmul.mubr.bf16.gmra.mrb[0].mxu0 %v514
      %v1238 = vpop.f32.mrb[0].mxu0
      %v1239 = vadd.f32 %v1174, %v1238
      %v1240 = vpop.f32.mrb[0].mxu0
      %v1241 = vpop.f32.mrb[0].mxu0
      %v1242 = vadd.f32 %v1177, %v1241
      %v1243 = vpop.f32.mrb[0].mxu0
      %1244 = vdwg.mxu0
      %1245 = vmatprep.subr.bf16.mxu0 0
      %1246 = vmatpush1.bf16.msra.mxu0 %v905
      %1247 = vmatprep.subr.bf16.mxu0 0
      %1248 = vmatpush1.bf16.msra.mxu0 %v906
      %1249 = vmatprep.subr.bf16.mxu0 0
      %1250 = vmatpush1.bf16.msra.mxu0 %v907
      %1251 = vmatprep.subr.bf16.mxu0 0
      %1252 = vmatpush1.bf16.msra.mxu0 %v908
      %1253 = vmatprep.subr.bf16.mxu0 0
      %1254 = vmatpush1.bf16.msra.mxu0 %v909
      %1255 = vmatprep.subr.bf16.mxu0 0
      %1256 = vmatpush1.bf16.msra.mxu0 %v910
      %1257 = vmatprep.subr.bf16.mxu0 0
      %1258 = vmatpush1.bf16.msra.mxu0 %v911
      %1259 = vmatprep.subr.bf16.mxu0 0
      %1260 = vmatpush1.bf16.msra.mxu0 %v912
      %1261 = vmatprep.subr.bf16.mxu0 0
      %1262 = vmatpush1.bf16.msra.mxu0 0
      %1263 = vmatprep.subr.bf16.mxu0 0
      %1264 = vmatpush1.bf16.msra.mxu0 0
      %1265 = vmatprep.subr.bf16.mxu0 0
      %1266 = vmatpush1.bf16.msra.mxu0 0
      %1267 = vmatprep.subr.bf16.mxu0 0
      %1268 = vmatpush1.bf16.msra.mxu0 0
      %1269 = vmatprep.subr.bf16.mxu0 0
      %1270 = vmatpush1.bf16.msra.mxu0 0
      %1271 = vmatprep.subr.bf16.mxu0 0
      %1272 = vmatpush1.bf16.msra.mxu0 0
      %1273 = vmatprep.subr.bf16.mxu0 0
      %1274 = vmatpush1.bf16.msra.mxu0 0
      %1275 = vmatprep.subr.bf16.mxu0 0
      %1276 = vmatpush1.bf16.msra.mxu0 0
      %1277 = vmatprep.mubr.bf16.mxu0 0
      %1278 = vmatmul.mubr.bf16.gmra.mrb[0].mxu0 %v489
      %v1279 = vpop.f32.mrb[0].mxu0
      %v1280 = vadd.f32 %v1215, %v1279
      %v1281 = vpop.f32.mrb[0].mxu0
      %v1282 = vpop.f32.mrb[0].mxu0
      %v1283 = vadd.f32 %v1218, %v1282
      %v1284 = vpop.f32.mrb[0].mxu0
      %1285 = vmatprep.mubr.bf16.mxu0 0
      %1286 = vmatmul.mubr.bf16.gmra.mrb[0].mxu0 %v498
      %v1287 = vpop.f32.mrb[0].mxu0
      %v1288 = vadd.f32 %v1223, %v1287
      %v1289 = vpop.f32.mrb[0].mxu0
      %v1290 = vpop.f32.mrb[0].mxu0
      %v1291 = vadd.f32 %v1226, %v1290
      %v1292 = vpop.f32.mrb[0].mxu0
      %1293 = vmatprep.mubr.bf16.mxu0 0
      %1294 = vmatmul.mubr.bf16.gmra.mrb[0].mxu0 %v507
      %v1295 = vpop.f32.mrb[0].mxu0
      %v1296 = vadd.f32 %v1231, %v1295
      %v1297 = vpop.f32.mrb[0].mxu0
      %v1298 = vpop.f32.mrb[0].mxu0
      %v1299 = vadd.f32 %v1234, %v1298
      %v1300 = vpop.f32.mrb[0].mxu0
      %1301 = vmatprep.mubr.bf16.mxu0 0
      %1302 = vmatmul.mubr.bf16.gmra.mrb[0].mxu0 %v516
      %v1303 = vpop.f32.mrb[0].mxu0
      %v1304 = vadd.f32 %v1239, %v1303
      %v1305 = vpop.f32.mrb[0].mxu0
      %v1306 = vpop.f32.mrb[0].mxu0
      %v1307 = vadd.f32 %v1242, %v1306
      %v1308 = vpop.f32.mrb[0].mxu0
      %1309 = vdwg.mxu0
      %v1310 = vmul.f32 %v1280, 0.5
      %v1311 = vmul.f32 %v1283, 0.5
      %v1312 = vmul.f32 %v1288, 0.5
      %v1313 = vmul.f32 %v1291, 0.5
      %v1314 = vmul.f32 %v1296, 0.5
      %v1315 = vmul.f32 %v1299, 0.5
      %v1316 = vmul.f32 %v1304, 0.5
      %v1317 = vmul.f32 %v1307, 0.5
      %v1318 = vmul.f32 %v1280, 0.044715
      %v1319 = vmul.f32 %v1283, 0.044715
      %v1320 = vmul.f32 %v1288, 0.044715
      %v1321 = vmul.f32 %v1291, 0.044715
      %v1322 = vmul.f32 %v1296, 0.044715
      %v1323 = vmul.f32 %v1299, 0.044715
      %v1324 = vmul.f32 %v1304, 0.044715
      %v1325 = vmul.f32 %v1307, 0.044715
      %v1326 = vmul.f32 %v1318, %v1280
      %v1327 = vmul.f32 %v1319, %v1283
      %v1328 = vmul.f32 %v1320, %v1288
      %v1329 = vmul.f32 %v1321, %v1291
      %v1330 = vmul.f32 %v1322, %v1296
      %v1331 = vmul.f32 %v1323, %v1299
      %v1332 = vmul.f32 %v1324, %v1304
      %v1333 = vmul.f32 %v1325, %v1307
      %v1334 = vmul.f32 %v1326, %v1280
      %v1335 = vmul.f32 %v1327, %v1283
      %v1336 = vmul.f32 %v1328, %v1288
      %v1337 = vmul.f32 %v1329, %v1291
      %v1338 = vmul.f32 %v1330, %v1296
      %v1339 = vmul.f32 %v1331, %v1299
      %v1340 = vmul.f32 %v1332, %v1304
      %v1341 = vmul.f32 %v1333, %v1307
      %v1342 = vadd.f32 %v1280, %v1334
      %v1343 = vadd.f32 %v1283, %v1335
      %v1344 = vadd.f32 %v1288, %v1336
      %v1345 = vadd.f32 %v1291, %v1337
      %v1346 = vadd.f32 %v1296, %v1338
      %v1347 = vadd.f32 %v1299, %v1339
      %v1348 = vadd.f32 %v1304, %v1340
      %v1349 = vadd.f32 %v1307, %v1341
      %v1350 = vmul.f32 %v1342, 0.7978846
      %v1351 = vmul.f32 %v1343, 0.7978846
      %v1352 = vmul.f32 %v1344, 0.7978846
      %v1353 = vmul.f32 %v1345, 0.7978846
      %v1354 = vmul.f32 %v1346, 0.7978846
      %v1355 = vmul.f32 %v1347, 0.7978846
      %v1356 = vmul.f32 %v1348, 0.7978846
      %v1357 = vmul.f32 %v1349, 0.7978846
      %v1358 = vtanh.pop %v1350
      %v1359 = vtanh.pop %v1351
      %v1360 = vtanh.pop %v1352
      %v1361 = vtanh.pop %v1353
      %v1362 = vtanh.pop %v1354
      %v1363 = vtanh.pop %v1355
      %v1364 = vtanh.pop %v1356
      %v1365 = vtanh.pop %v1357
      %v1366 = vadd.f32 %v1358, 1.0
      %v1367 = vadd.f32 %v1359, 1.0
      %v1368 = vadd.f32 %v1360, 1.0
      %v1369 = vadd.f32 %v1361, 1.0
      %v1370 = vadd.f32 %v1362, 1.0
      %v1371 = vadd.f32 %v1363, 1.0
      %v1372 = vadd.f32 %v1364, 1.0
      %v1373 = vadd.f32 %v1365, 1.0
      %v1374 = vmul.f32 %v1310, %v1366
      %v1375 = vmul.f32 %v1311, %v1367
      %v1376 = vmul.f32 %v1312, %v1368
      %v1377 = vmul.f32 %v1313, %v1369
      %v1378 = vmul.f32 %v1314, %v1370
      %v1379 = vmul.f32 %v1315, %v1371
      %v1380 = vmul.f32 %v1316, %v1372
      %v1381 = vmul.f32 %v1317, %v1373
      %v1382 = vpack.c.bf16 %v1375, %v1374
      %v1383 = vpack.c.bf16 %v1377, %v1376
      %v1384 = vpack.c.bf16 %v1379, %v1378
      %v1385 = vpack.c.bf16 %v1381, %v1380
      %v1390 = vunpack.c.l.b16 %v1382
      %v1391 = vunpack.c.h.b16 %v1382
      %v1392 = vunpack.c.l.b16 %v1383
      %v1393 = vunpack.c.h.b16 %v1383
      %v1394 = vunpack.c.l.b16 %v1384
      %v1395 = vunpack.c.h.b16 %v1384
      %v1396 = vunpack.c.l.b16 %v1385
      %v1397 = vunpack.c.h.b16 %v1385
      %v1398 = vpack.c.b16 %v1390, %v1390
      %v1399 = vpack.c.b16 %v1391, %v1391
      %v1400 = vpack.c.b16 %v1392, %v1392
      %v1401 = vpack.c.b16 %v1393, %v1393
      %v1402 = vpack.c.b16 %v1394, %v1394
      %v1403 = vpack.c.b16 %v1395, %v1395
      %v1404 = vpack.c.b16 %v1396, %v1396
      %v1405 = vpack.c.b16 %v1397, %v1397
      %1414 = vst [vmem:[%s175] sm:$0xf] %v1398
      %1415 = vst [vmem:[%s175 + $0x4] sm:$0xf] %v1399
      %1416 = vst [vmem:[%s175 + $0x8] sm:$0xf] %v1400
      %1417 = vst [vmem:[%s175 + $0xc] sm:$0xf] %v1401
      %1418 = vst [vmem:[%s175 + $0x10] sm:$0xf] %v1402
      %1419 = vst [vmem:[%s175 + $0x14] sm:$0xf] %v1403
      %1420 = vst [vmem:[%s175 + $0x18] sm:$0xf] %v1404
      %1421 = vst [vmem:[%s175 + $0x1c] sm:$0xf] %v1405
      %s1422 = smul.u32 8, %s14
      %p1423 = scmp.lt.s32.totalorder %s1422, 15
      %s1424 = scalar_select %p1423, %s1422, 15
      %s1425 = smul.addr %s1424, 4
      %s1426 = scalar_lea.vmem %s3, %s1425
      // Predicated region
      $region33: #{deep_generator_forward.5} parent=31 // pred_check
        %p1427 = pneg %p100
      $region34: #{deep_generator_forward.5} parent=31 // pred_check_branch
        %1429 = sbr.rel (%p1427) target = $region36
      $region35: #{deep_generator_forward.5} parent=31 // pred_region
        %s1430 = smul.u32 8, %s14
      $region36: #{deep_generator_forward.5} parent=31 // pred_fallthru
        _
    $region32: #{deep_generator_forward.5} parent=5 // pred_fallthru
      _
    %p1431 = scmp.le.s32.totalorder 2, %s9
    // Predicated region
    $region37: #{deep_generator_forward.5} parent=5 // pred_check
      %p1432 = pneg %p1431
    $region38: #{deep_generator_forward.5} parent=5 // pred_check_branch
      %1434 = sbr.rel (%p1432) target = $region40
    $region39: #{deep_generator_forward.5} parent=5 // pred_region
      %s1435 = ssub.s32 %s9, 2
      // Predicated region
      $region41: #{deep_generator_forward.5} parent=39 // pred_check
        %p1436 = pneg %p106
      $region42: #{deep_generator_forward.5} parent=39 // pred_check_branch
        %1438 = sbr.rel (%p1436) target = $region44
      $region43: #{deep_generator_forward.5} parent=39 // pred_region
        %s1439 = smul.u32 8, %s15
        %p1440 = scmp.lt.s32.totalorder %s1439, 15
        %s1441 = scalar_select %p1440, %s1439, 15
        %s1442 = smul.addr %s1441, 4
        %s1443 = scalar_lea.vmem %s3, %s1442
      $region44: #{deep_generator_forward.5} parent=39 // pred_fallthru
        _
    $region40: #{deep_generator_forward.5} parent=5 // pred_fallthru
      _
  $region6: #{deep_generator_forward.5} parent=0 // loop_footer
    %s13 = sadd.s32 1, %s9
  $region7: #{deep_generator_forward.5} parent=0 // loop_footer_branch
    %8 = sbr.rel target = $region3
  $region8: #{deep_generator_forward.5} parent=0 // loop_exit
    _

// kernel: deep_generator_forward.6
$region0: #{deep_generator_forward.6}
  #allocation0 [shape = 'u32[]', space=smem, size = 0x4, offset = 0x4, fixed_abs, tag = 'smem constant byte address 0x4 - core index']
  #allocation1 [shape = 'u32[144,128]{1,0:T(1,128)}', space=vmem, size = 0x12000, scoped, tag = 'internal scratch']
  %s0 = inlined_call_operand.vmem [shape: bf16[416,576], index: 0, kind: input, shape index: {}]
  %s1 = inlined_call_operand.vmem [shape: bf16[576,128], index: 1, kind: input, shape index: {}]
  %s2 = inlined_call_operand.vmem [shape: f32[1,128], index: 2, kind: input, shape index: {}]
  %s3 = inlined_call_operand.vmem [shape: bf16[416,128], index: 3, kind: output, shape index: {}]
  %s4 = sld [smem:[#allocation0]]
  $region45: #{deep_generator_forward.6} parent=0
    _
  %s6 = ssub.s32 1, %s4
  %s7 = scalar_select 0, %s6, %s4
  loop: start=0, step=1, limit=4
  $region2: #{deep_generator_forward.6} parent=0 // loop_pre_header
    _
  $region3: #{deep_generator_forward.6} parent=0 // loop_header
    %s9 = sphi 0, %s13
    %p10 = scmp.ge.s32.totalorder %s9, 4
    %s19 = sphi 0, %s21
    %s22 = sphi 0, %s19
    %s23 = sphi 0, %s22
    %s39 = sphi 0, %s23
    %s43 = sphi 0, %s43
    %s45 = sphi 0, %s43
    %s46 = sphi 0, %s45
    %s60 = sphi 0, %s46
    %s64 = sphi 0, %s64
    %s66 = sphi 0, %s64
    %s67 = sphi 0, %s66
    %s81 = sphi 0, %s67
    %s87 = sphi 0, %s89
    %s90 = sphi 0, %s87
    %s91 = sphi 0, %s90
    %s107 = sphi 0, %s91
  $region4: #{deep_generator_forward.6} parent=0 // loop_header_branch
    %12 = sbr.rel (%p10) target = $region8
  $region5: #{deep_generator_forward.6} parent=0 // loop_body
    %s14 = ssub.s32 %s9, 1
    %s15 = ssub.s32 %s9, 2
    %s16 = sadd.s32 %s9, 1
    %s17 = ssub.s32 %s9, %s16
    %p18 = scmp.eq.s32.totalorder %s17, 0
    %s20 = sadd.s32 %s19, 1
    %s21 = scalar_select %p18, %s19, %s20
    %p24 = pneg %p18
    %p25 = scmp.eq.s32.totalorder %s9, 1
    %p26 = por %p24, %p25
    %p27 = scmp.ne.s32.totalorder %s19, %s22
    %p28 = scmp.eq.s32.totalorder %s9, 0
    %p29 = por %p27, %p28
    %p30 = scmp.ne.s32.totalorder %s19, %s22
    %p31 = scmp.eq.s32.totalorder %s14, 1
    %p32 = por %p30, %p31
    %p33 = scmp.ne.s32.totalorder %s22, %s23
    %p34 = scmp.eq.s32.totalorder %s14, 0
    %p35 = por %p33, %p34
    %p36 = scmp.ne.s32.totalorder %s22, %s23
    %p37 = scmp.eq.s32.totalorder %s15, 1
    %p38 = por %p36, %p37
    %p40 = scmp.ne.s32.totalorder %s23, %s39
    %p41 = scmp.eq.s32.totalorder %s15, 0
    %p42 = por %p40, %p41
    %s44 = sadd.s32 %s43, 1
    %p47 = scmp.eq.s32.totalorder %s9, 1
    %p48 = scmp.ne.s32.totalorder %s43, %s45
    %p49 = scmp.eq.s32.totalorder %s9, 0
    %p50 = por %p48, %p49
    %p51 = scmp.ne.s32.totalorder %s43, %s45
    %p52 = scmp.eq.s32.totalorder %s14, 1
    %p53 = por %p51, %p52
    %p54 = scmp.ne.s32.totalorder %s45, %s46
    %p55 = scmp.eq.s32.totalorder %s14, 0
    %p56 = por %p54, %p55
    %p57 = scmp.ne.s32.totalorder %s45, %s46
    %p58 = scmp.eq.s32.totalorder %s15, 1
    %p59 = por %p57, %p58
    %p61 = scmp.ne.s32.totalorder %s46, %s60
    %p62 = scmp.eq.s32.totalorder %s15, 0
    %p63 = por %p61, %p62
    %s65 = sadd.s32 %s64, 1
    %p68 = scmp.eq.s32.totalorder %s9, 1
    %p69 = scmp.ne.s32.totalorder %s64, %s66
    %p70 = scmp.eq.s32.totalorder %s9, 0
    %p71 = por %p69, %p70
    %p72 = scmp.ne.s32.totalorder %s64, %s66
    %p73 = scmp.eq.s32.totalorder %s14, 1
    %p74 = por %p72, %p73
    %p75 = scmp.ne.s32.totalorder %s66, %s67
    %p76 = scmp.eq.s32.totalorder %s14, 0
    %p77 = por %p75, %p76
    %p78 = scmp.ne.s32.totalorder %s66, %s67
    %p79 = scmp.eq.s32.totalorder %s15, 1
    %p80 = por %p78, %p79
    %p82 = scmp.ne.s32.totalorder %s67, %s81
    %p83 = scmp.eq.s32.totalorder %s15, 0
    %p84 = por %p82, %p83
    %s85 = ssub.s32 %s9, %s16
    %p86 = scmp.eq.s32.totalorder %s85, 0
    %s88 = sadd.s32 %s87, 1
    %s89 = scalar_select %p86, %s87, %s88
    %p92 = pneg %p86
    %p93 = scmp.eq.s32.totalorder %s9, 1
    %p94 = por %p92, %p93
    %p95 = scmp.ne.s32.totalorder %s87, %s90
    %p96 = scmp.eq.s32.totalorder %s9, 0
    %p97 = por %p95, %p96
    %p98 = scmp.ne.s32.totalorder %s87, %s90
    %p99 = scmp.eq.s32.totalorder %s14, 1
    %p100 = por %p98, %p99
    %p101 = scmp.ne.s32.totalorder %s90, %s91
    %p102 = scmp.eq.s32.totalorder %s14, 0
    %p103 = por %p101, %p102
    %p104 = scmp.ne.s32.totalorder %s90, %s91
    %p105 = scmp.eq.s32.totalorder %s15, 1
    %p106 = por %p104, %p105
    %p108 = scmp.ne.s32.totalorder %s91, %s107
    %p109 = scmp.eq.s32.totalorder %s15, 0
    %p110 = por %p108, %p109
    %p111 = scmp.le.s32.totalorder 1, %s9
    %p112 = scmp.lt.s32.totalorder %s9, 3
    %p113 = pnand %p111, %p112
    %p114 = pneg %p113
    // Predicated region
    $region9: #{deep_generator_forward.6} parent=5 // pred_check
      _
    $region10: #{deep_generator_forward.6} parent=5 // pred_check_branch
      %116 = sbr.rel (%p113) target = $region12
    $region11: #{deep_generator_forward.6} parent=5 // pred_region
      %s117 = ssub.s32 %s9, 1
      // Predicated region
      $region13: #{deep_generator_forward.6} parent=11 // pred_check
        %p118 = pneg %p56
      $region14: #{deep_generator_forward.6} parent=11 // pred_check_branch
        %120 = sbr.rel (%p118) target = $region16
      $region15: #{deep_generator_forward.6} parent=11 // pred_region
        _
      $region16: #{deep_generator_forward.6} parent=11 // pred_fallthru
        _
      // Predicated region
      $region17: #{deep_generator_forward.6} parent=11 // pred_check
        %p121 = pneg %p77
      $region18: #{deep_generator_forward.6} parent=11 // pred_check_branch
        %123 = sbr.rel (%p121) target = $region20
      $region19: #{deep_generator_forward.6} parent=11 // pred_region
        _
      $region20: #{deep_generator_forward.6} parent=11 // pred_fallthru
        _
    $region12: #{deep_generator_forward.6} parent=5 // pred_fallthru
      _
    %p124 = scmp.lt.s32.totalorder %s9, 2
    // Predicated region
    $region21: #{deep_generator_forward.6} parent=5 // pred_check
      %p125 = pneg %p124
    $region22: #{deep_generator_forward.6} parent=5 // pred_check_branch
      %127 = sbr.rel (%p125) target = $region24
    $region23: #{deep_generator_forward.6} parent=5 // pred_region
      // Predicated region
      $region25: #{deep_generator_forward.6} parent=23 // pred_check
        %p128 = pneg %p29
      $region26: #{deep_generator_forward.6} parent=23 // pred_check_branch
        %130 = sbr.rel (%p128) target = $region28
      $region27: #{deep_generator_forward.6} parent=23 // pred_region
        %s131 = smul.u32 26, %s9
        %p132 = scmp.lt.s32.totalorder %s131, 51
        %s133 = scalar_select %p132, %s131, 51
        %s134 = smul.addr %s133, 5
        %s135 = smul.addr %s134, 4
        %s136 = scalar_lea.vmem %s0, %s135
        %s137 = smul.u32 26, %s9
      $region28: #{deep_generator_forward.6} parent=23 // pred_fallthru
        _
    $region24: #{deep_generator_forward.6} parent=5 // pred_fallthru
      _
    %p138 = scmp.le.s32.totalorder 1, %s9
    %p139 = scmp.lt.s32.totalorder %s9, 3
    %p140 = pnand %p138, %p139
    %p141 = pneg %p140
    // Predicated region
    $region29: #{deep_generator_forward.6} parent=5 // pred_check
      _
    $region30: #{deep_generator_forward.6} parent=5 // pred_check_branch
      %143 = sbr.rel (%p140) target = $region32
    $region31: #{deep_generator_forward.6} parent=5 // pred_region
      %s144 = ssub.s32 %s9, 1
      %s145 = smul.u32 26, %s14
      %p146 = scmp.lt.s32.totalorder %s145, 51
      %s147 = scalar_select %p146, %s145, 51
      %s148 = smul.addr %s147, 5
      %s149 = smul.addr %s148, 4
      %s150 = scalar_lea.vmem %s0, %s149
      %p151 = pneg %p35
      %p152 = pneg %p32
      %p153 = pneg %p56
      %p154 = pneg %p53
      %p155 = pneg %p77
      %p156 = pneg %p74
      %p157 = pneg %p103
      %p158 = pneg %p100
      %s159 = smul.u32 26, %s14
      %p160 = scmp.lt.s32.totalorder %s159, 51
      %s161 = scalar_select %p160, %s159, 51
      %s162 = smul.addr %s161, 4
      %s163 = scalar_lea.vmem %s3, %s162
      %s164 = smul.u32 26, %s14
      %p165 = scmp.lt.s32.totalorder %s164, 51
      %s166 = scalar_select %p165, %s164, 51
      %s167 = smul.addr %s166, 5
      %s168 = smul.addr %s167, 4
      %s169 = scalar_lea.vmem %s0, %s168
      %s170 = smul.u32 26, %s14
      %s171 = smul.u32 26, %s14
      %p172 = scmp.lt.s32.totalorder %s171, 51
      %s173 = scalar_select %p172, %s171, 51
      %s174 = smul.addr %s173, 4
      %s175 = scalar_lea.vmem %s3, %s174
      %s176 = smul.u32 26, %s14
      %v178 = vld [vmem:[%s169] sm:$0xff]
      %v179 = vld [vmem:[%s169 + $0x8] sm:$0xff]
      %v180 = vld [vmem:[%s169 + $0x10] sm:$0xf]
      %v181 = vld [vmem:[%s169 + $0x14] sm:$0xff]
      %v182 = vld [vmem:[%s169 + $0x1c] sm:$0xff]
      %v183 = vld [vmem:[%s169 + $0x24] sm:$0xf]
      %v184 = vld [vmem:[%s169 + $0x28] sm:$0xff]
      %v185 = vld [vmem:[%s169 + $0x30] sm:$0xff]
      %v186 = vld [vmem:[%s169 + $0x38] sm:$0xf]
      %v187 = vld [vmem:[%s169 + $0x3c] sm:$0xff]
      %v188 = vld [vmem:[%s169 + $0x44] sm:$0xff]
      %v189 = vld [vmem:[%s169 + $0x4c] sm:$0xf]
      %v190 = vld [vmem:[%s169 + $0x50] sm:$0xff]
      %v191 = vld [vmem:[%s169 + $0x58] sm:$0xff]
      %v192 = vld [vmem:[%s169 + $0x60] sm:$0xf]
      %v193 = vld [vmem:[%s169 + $0x64] sm:$0xff]
      %v194 = vld [vmem:[%s169 + $0x6c] sm:$0xff]
      %v195 = vld [vmem:[%s169 + $0x74] sm:$0xf]
      %v196 = vld [vmem:[%s169 + $0x78] sm:$0xff]
      %v197 = vld [vmem:[%s169 + $0x80] sm:$0xff]
      %v198 = vld [vmem:[%s169 + $0x88] sm:$0xf]
      %v199 = vld [vmem:[%s169 + $0x8c] sm:$0xff]
      %v200 = vld [vmem:[%s169 + $0x94] sm:$0xff]
      %v201 = vld [vmem:[%s169 + $0x9c] sm:$0xf]
      %v202 = vld [vmem:[%s169 + $0xa0] sm:$0xff]
      %v203 = vld [vmem:[%s169 + $0xa8] sm:$0xff]
      %v204 = vld [vmem:[%s169 + $0xb0] sm:$0xf]
      %v205 = vld [vmem:[%s169 + $0xb4] sm:$0xff]
      %v206 = vld [vmem:[%s169 + $0xbc] sm:$0xff]
      %v207 = vld [vmem:[%s169 + $0xc4] sm:$0xf]
      %v208 = vld [vmem:[%s169 + $0xc8] sm:$0xff]
      %v209 = vld [vmem:[%s169 + $0xd0] sm:$0xff]
      %v210 = vld [vmem:[%s169 + $0xd8] sm:$0xf]
      %v211 = vld [vmem:[%s169 + $0xdc] sm:$0xff]
      %v212 = vld [vmem:[%s169 + $0xe4] sm:$0xff]
      %v213 = vld [vmem:[%s169 + $0xec] sm:$0xf]
      %v214 = vld [vmem:[%s169 + $0xf0] sm:$0xff]
      %v215 = vld [vmem:[%s169 + $0xf8] sm:$0xff]
      %v216 = vld [vmem:[%s169 + $0x100] sm:$0xf]
      %v217 = vld [vmem:[%s169 + $0x104] sm:$0xff]
      %v218 = vld [vmem:[%s169 + $0x10c] sm:$0xff]
      %v219 = vld [vmem:[%s169 + $0x114] sm:$0xf]
      %v220 = vld [vmem:[%s169 + $0x118] sm:$0xff]
      %v221 = vld [vmem:[%s169 + $0x120] sm:$0xff]
      %v222 = vld [vmem:[%s169 + $0x128] sm:$0xf]
      %v223 = vld [vmem:[%s169 + $0x12c] sm:$0xff]
      %v224 = vld [vmem:[%s169 + $0x134] sm:$0xff]
      %v225 = vld [vmem:[%s169 + $0x13c] sm:$0xf]
      %v226 = vld [vmem:[%s169 + $0x140] sm:$0xff]
      %v227 = vld [vmem:[%s169 + $0x148] sm:$0xff]
      %v228 = vld [vmem:[%s169 + $0x150] sm:$0xf]
      %v229 = vld [vmem:[%s169 + $0x154] sm:$0xff]
      %v230 = vld [vmem:[%s169 + $0x15c] sm:$0xff]
      %v231 = vld [vmem:[%s169 + $0x164] sm:$0xf]
      %v232 = vld [vmem:[%s169 + $0x168] sm:$0xff]
      %v233 = vld [vmem:[%s169 + $0x170] sm:$0xff]
      %v234 = vld [vmem:[%s169 + $0x178] sm:$0xf]
      %v235 = vld [vmem:[%s169 + $0x17c] sm:$0xff]
      %v236 = vld [vmem:[%s169 + $0x184] sm:$0xff]
      %v237 = vld [vmem:[%s169 + $0x18c] sm:$0xf]
      %v238 = vld [vmem:[%s169 + $0x190] sm:$0xff]
      %v239 = vld [vmem:[%s169 + $0x198] sm:$0xff]
      %v240 = vld [vmem:[%s169 + $0x1a0] sm:$0xf]
      %v241 = vld [vmem:[%s169 + $0x1a4] sm:$0xff]
      %v242 = vld [vmem:[%s169 + $0x1ac] sm:$0xff]
      %v243 = vld [vmem:[%s169 + $0x1b4] sm:$0xf]
      %v244 = vld [vmem:[%s169 + $0x1b8] sm:$0xff]
      %v245 = vld [vmem:[%s169 + $0x1c0] sm:$0xff]
      %v246 = vld [vmem:[%s169 + $0x1c8] sm:$0xf]
      %v247 = vld [vmem:[%s169 + $0x1cc] sm:$0xff]
      %v248 = vld [vmem:[%s169 + $0x1d4] sm:$0xff]
      %v249 = vld [vmem:[%s169 + $0x1dc] sm:$0xf]
      %v250 = vld [vmem:[%s169 + $0x1e0] sm:$0xff]
      %v251 = vld [vmem:[%s169 + $0x1e8] sm:$0xff]
      %v252 = vld [vmem:[%s169 + $0x1f0] sm:$0xf]
      %v253 = vld [vmem:[%s169 + $0x1f4] sm:$0xff]
      %v254 = vld [vmem:[%s169 + $0x1fc] sm:$0xff]
      %v255 = vld [vmem:[%s169 + $0x204] sm:$0xf]
      %v256 = vld [vmem:[%s1] sm:$0xf]
      %v257 = vld [vmem:[%s1 + $0x4] sm:$0xf]
      %v258 = vld [vmem:[%s1 + $0x8] sm:$0xf]
      %v259 = vld [vmem:[%s1 + $0xc] sm:$0xf]
      %v260 = vld [vmem:[%s1 + $0x10] sm:$0xf]
      %v261 = vld [vmem:[%s1 + $0x14] sm:$0xf]
      %v262 = vld [vmem:[%s1 + $0x18] sm:$0xf]
      %v263 = vld [vmem:[%s1 + $0x1c] sm:$0xf]
      %v264 = vld [vmem:[%s1 + $0x20] sm:$0xf]
      %v265 = vld [vmem:[%s1 + $0x24] sm:$0xf]
      %v266 = vld [vmem:[%s1 + $0x28] sm:$0xf]
      %v267 = vld [vmem:[%s1 + $0x2c] sm:$0xf]
      %v268 = vld [vmem:[%s1 + $0x30] sm:$0xf]
      %v269 = vld [vmem:[%s1 + $0x34] sm:$0xf]
      %v270 = vld [vmem:[%s1 + $0x38] sm:$0xf]
      %v271 = vld [vmem:[%s1 + $0x3c] sm:$0xf]
      %v272 = vld [vmem:[%s1 + $0x40] sm:$0xf]
      %v273 = vld [vmem:[%s1 + $0x44] sm:$0xf]
      %v274 = vld [vmem:[%s1 + $0x48] sm:$0xf]
      %v275 = vld [vmem:[%s1 + $0x4c] sm:$0xf]
      %v276 = vld [vmem:[%s1 + $0x50] sm:$0xf]
      %v277 = vld [vmem:[%s1 + $0x54] sm:$0xf]
      %v278 = vld [vmem:[%s1 + $0x58] sm:$0xf]
      %v279 = vld [vmem:[%s1 + $0x5c] sm:$0xf]
      %v280 = vld [vmem:[%s1 + $0x60] sm:$0xf]
      %v281 = vld [vmem:[%s1 + $0x64] sm:$0xf]
      %v282 = vld [vmem:[%s1 + $0x68] sm:$0xf]
      %v283 = vld [vmem:[%s1 + $0x6c] sm:$0xf]
      %v284 = vld [vmem:[%s1 + $0x70] sm:$0xf]
      %v285 = vld [vmem:[%s1 + $0x74] sm:$0xf]
      %v286 = vld [vmem:[%s1 + $0x78] sm:$0xf]
      %v287 = vld [vmem:[%s1 + $0x7c] sm:$0xf]
      %v288 = vld [vmem:[%s1 + $0x80] sm:$0xf]
      %v289 = vld [vmem:[%s1 + $0x84] sm:$0xf]
      %v290 = vld [vmem:[%s1 + $0x88] sm:$0xf]
      %v291 = vld [vmem:[%s1 + $0x8c] sm:$0xf]
      %v292 = vld [vmem:[%s1 + $0x90] sm:$0xf]
      %v293 = vld [vmem:[%s1 + $0x94] sm:$0xf]
      %v294 = vld [vmem:[%s1 + $0x98] sm:$0xf]
      %v295 = vld [vmem:[%s1 + $0x9c] sm:$0xf]
      %v296 = vld [vmem:[%s1 + $0xa0] sm:$0xf]
      %v297 = vld [vmem:[%s1 + $0xa4] sm:$0xf]
      %v298 = vld [vmem:[%s1 + $0xa8] sm:$0xf]
      %v299 = vld [vmem:[%s1 + $0xac] sm:$0xf]
      %v300 = vld [vmem:[%s1 + $0xb0] sm:$0xf]
      %v301 = vld [vmem:[%s1 + $0xb4] sm:$0xf]
      %v302 = vld [vmem:[%s1 + $0xb8] sm:$0xf]
      %v303 = vld [vmem:[%s1 + $0xbc] sm:$0xf]
      %v304 = vld [vmem:[%s1 + $0xc0] sm:$0xf]
      %v305 = vld [vmem:[%s1 + $0xc4] sm:$0xf]
      %v306 = vld [vmem:[%s1 + $0xc8] sm:$0xf]
      %v307 = vld [vmem:[%s1 + $0xcc] sm:$0xf]
      %v308 = vld [vmem:[%s1 + $0xd0] sm:$0xf]
      %v309 = vld [vmem:[%s1 + $0xd4] sm:$0xf]
      %v310 = vld [vmem:[%s1 + $0xd8] sm:$0xf]
      %v311 = vld [vmem:[%s1 + $0xdc] sm:$0xf]
      %v312 = vld [vmem:[%s1 + $0xe0] sm:$0xf]
      %v313 = vld [vmem:[%s1 + $0xe4] sm:$0xf]
      %v314 = vld [vmem:[%s1 + $0xe8] sm:$0xf]
      %v315 = vld [vmem:[%s1 + $0xec] sm:$0xf]
      %v316 = vld [vmem:[%s1 + $0xf0] sm:$0xf]
      %v317 = vld [vmem:[%s1 + $0xf4] sm:$0xf]
      %v318 = vld [vmem:[%s1 + $0xf8] sm:$0xf]
      %v319 = vld [vmem:[%s1 + $0xfc] sm:$0xf]
      %v320 = vld [vmem:[%s1 + $0x100] sm:$0xf]
      %v321 = vld [vmem:[%s1 + $0x104] sm:$0xf]
      %v322 = vld [vmem:[%s1 + $0x108] sm:$0xf]
      %v323 = vld [vmem:[%s1 + $0x10c] sm:$0xf]
      %v324 = vld [vmem:[%s1 + $0x110] sm:$0xf]
      %v325 = vld [vmem:[%s1 + $0x114] sm:$0xf]
      %v326 = vld [vmem:[%s1 + $0x118] sm:$0xf]
      %v327 = vld [vmem:[%s1 + $0x11c] sm:$0xf]
      %v328 = vld [vmem:[%s2] sm:$0x1]
      %v330 = vlaneseq
      %v331 = vshrl.u32 %v330, 7
      %v332 = vsub.s32 0, %v331
      %v333 = vrot.slane %v328, %v332
      %v413 = vunpack.c.l.b16 %v178
      %v414 = vunpack.c.h.b16 %v178
      %v415 = vunpack.c.l.b16 %v179
      %v416 = vunpack.c.h.b16 %v179
      %v417 = vunpack.c.l.b16 %v180
      %v418 = vunpack.c.l.b16 %v181
      %v419 = vunpack.c.h.b16 %v181
      %v420 = vunpack.c.l.b16 %v182
      %v421 = vunpack.c.h.b16 %v182
      %v422 = vunpack.c.l.b16 %v183
      %v423 = vunpack.c.l.b16 %v184
      %v424 = vunpack.c.h.b16 %v184
      %v425 = vunpack.c.l.b16 %v185
      %v426 = vunpack.c.h.b16 %v185
      %v427 = vunpack.c.l.b16 %v186
      %v428 = vunpack.c.l.b16 %v187
      %v429 = vunpack.c.h.b16 %v187
      %v430 = vunpack.c.l.b16 %v188
      %v431 = vunpack.c.h.b16 %v188
      %v432 = vunpack.c.l.b16 %v189
      %v433 = vunpack.c.l.b16 %v190
      %v434 = vunpack.c.h.b16 %v190
      %v435 = vunpack.c.l.b16 %v191
      %v436 = vunpack.c.h.b16 %v191
      %v437 = vunpack.c.l.b16 %v192
      %v438 = vunpack.c.l.b16 %v193
      %v439 = vunpack.c.h.b16 %v193
      %v440 = vunpack.c.l.b16 %v194
      %v441 = vunpack.c.h.b16 %v194
      %v442 = vunpack.c.l.b16 %v195
      %v443 = vunpack.c.l.b16 %v196
      %v444 = vunpack.c.h.b16 %v196
      %v445 = vunpack.c.l.b16 %v197
      %v446 = vunpack.c.h.b16 %v197
      %v447 = vunpack.c.l.b16 %v198
      %v448 = vunpack.c.l.b16 %v199
      %v449 = vunpack.c.h.b16 %v199
      %v450 = vunpack.c.l.b16 %v200
      %v451 = vunpack.c.h.b16 %v200
      %v452 = vunpack.c.l.b16 %v201
      %v453 = vunpack.c.l.b16 %v202
      %v454 = vunpack.c.h.b16 %v202
      %v455 = vunpack.c.l.b16 %v203
      %v456 = vunpack.c.h.b16 %v203
      %v457 = vunpack.c.l.b16 %v204
      %v458 = vunpack.c.l.b16 %v205
      %v459 = vunpack.c.h.b16 %v205
      %v460 = vunpack.c.l.b16 %v206
      %v461 = vunpack.c.h.b16 %v206
      %v462 = vunpack.c.l.b16 %v207
      %v463 = vunpack.c.l.b16 %v208
      %v464 = vunpack.c.h.b16 %v208
      %v465 = vunpack.c.l.b16 %v209
      %v466 = vunpack.c.h.b16 %v209
      %v467 = vunpack.c.l.b16 %v210
      %v468 = vunpack.c.l.b16 %v211
      %v469 = vunpack.c.h.b16 %v211
      %v470 = vunpack.c.l.b16 %v212
      %v471 = vunpack.c.h.b16 %v212
      %v472 = vunpack.c.l.b16 %v213
      %v473 = vunpack.c.l.b16 %v214
      %v474 = vunpack.c.h.b16 %v214
      %v475 = vunpack.c.l.b16 %v215
      %v476 = vunpack.c.h.b16 %v215
      %v477 = vunpack.c.l.b16 %v216
      %v478 = vunpack.c.l.b16 %v217
      %v479 = vunpack.c.h.b16 %v217
      %v480 = vunpack.c.l.b16 %v218
      %v481 = vunpack.c.h.b16 %v218
      %v482 = vunpack.c.l.b16 %v219
      %v483 = vunpack.c.l.b16 %v220
      %v484 = vunpack.c.h.b16 %v220
      %v485 = vunpack.c.l.b16 %v221
      %v486 = vunpack.c.h.b16 %v221
      %v487 = vunpack.c.l.b16 %v222
      %v488 = vunpack.c.l.b16 %v223
      %v489 = vunpack.c.h.b16 %v223
      %v490 = vunpack.c.l.b16 %v224
      %v491 = vunpack.c.h.b16 %v224
      %v492 = vunpack.c.l.b16 %v225
      %v493 = vunpack.c.l.b16 %v226
      %v494 = vunpack.c.h.b16 %v226
      %v495 = vunpack.c.l.b16 %v227
      %v496 = vunpack.c.h.b16 %v227
      %v497 = vunpack.c.l.b16 %v228
      %v498 = vunpack.c.l.b16 %v229
      %v499 = vunpack.c.h.b16 %v229
      %v500 = vunpack.c.l.b16 %v230
      %v501 = vunpack.c.h.b16 %v230
      %v502 = vunpack.c.l.b16 %v231
      %v503 = vunpack.c.l.b16 %v232
      %v504 = vunpack.c.h.b16 %v232
      %v505 = vunpack.c.l.b16 %v233
      %v506 = vunpack.c.h.b16 %v233
      %v507 = vunpack.c.l.b16 %v234
      %v508 = vunpack.c.l.b16 %v235
      %v509 = vunpack.c.h.b16 %v235
      %v510 = vunpack.c.l.b16 %v236
      %v511 = vunpack.c.h.b16 %v236
      %v512 = vunpack.c.l.b16 %v237
      %v513 = vunpack.c.l.b16 %v238
      %v514 = vunpack.c.h.b16 %v238
      %v515 = vunpack.c.l.b16 %v239
      %v516 = vunpack.c.h.b16 %v239
      %v517 = vunpack.c.l.b16 %v240
      %v518 = vunpack.c.l.b16 %v241
      %v519 = vunpack.c.h.b16 %v241
      %v520 = vunpack.c.l.b16 %v242
      %v521 = vunpack.c.h.b16 %v242
      %v522 = vunpack.c.l.b16 %v243
      %v523 = vunpack.c.l.b16 %v244
      %v524 = vunpack.c.h.b16 %v244
      %v525 = vunpack.c.l.b16 %v245
      %v526 = vunpack.c.h.b16 %v245
      %v527 = vunpack.c.l.b16 %v246
      %v528 = vunpack.c.l.b16 %v247
      %v529 = vunpack.c.h.b16 %v247
      %v530 = vunpack.c.l.b16 %v248
      %v531 = vunpack.c.h.b16 %v248
      %v532 = vunpack.c.l.b16 %v249
      %v533 = vunpack.c.l.b16 %v250
      %v534 = vunpack.c.h.b16 %v250
      %v535 = vunpack.c.l.b16 %v251
      %v536 = vunpack.c.h.b16 %v251
      %v537 = vunpack.c.l.b16 %v252
      %v538 = vunpack.c.l.b16 %v253
      %v539 = vunpack.c.h.b16 %v253
      %v540 = vunpack.c.l.b16 %v254
      %v541 = vunpack.c.h.b16 %v254
      %v542 = vunpack.c.l.b16 %v255
      %v543 = vpack.c.b16 %v418, %v413
      %v544 = vpack.c.b16 %v419, %v414
      %v545 = vpack.c.b16 %v420, %v415
      %v546 = vpack.c.b16 %v421, %v416
      %v547 = vpack.c.b16 %v422, %v417
      %v548 = vpack.c.b16 %v428, %v423
      %v549 = vpack.c.b16 %v429, %v424
      %v550 = vpack.c.b16 %v430, %v425
      %v551 = vpack.c.b16 %v431, %v426
      %v552 = vpack.c.b16 %v432, %v427
      %v553 = vpack.c.b16 %v438, %v433
      %v554 = vpack.c.b16 %v439, %v434
      %v555 = vpack.c.b16 %v440, %v435
      %v556 = vpack.c.b16 %v441, %v436
      %v557 = vpack.c.b16 %v442, %v437
      %v558 = vpack.c.b16 %v448, %v443
      %v559 = vpack.c.b16 %v449, %v444
      %v560 = vpack.c.b16 %v450, %v445
      %v561 = vpack.c.b16 %v451, %v446
      %v562 = vpack.c.b16 %v452, %v447
      %v563 = vpack.c.b16 %v458, %v453
      %v564 = vpack.c.b16 %v459, %v454
      %v565 = vpack.c.b16 %v460, %v455
      %v566 = vpack.c.b16 %v461, %v456
      %v567 = vpack.c.b16 %v462, %v457
      %v568 = vpack.c.b16 %v468, %v463
      %v569 = vpack.c.b16 %v469, %v464
      %v570 = vpack.c.b16 %v470, %v465
      %v571 = vpack.c.b16 %v471, %v466
      %v572 = vpack.c.b16 %v472, %v467
      %v573 = vpack.c.b16 %v478, %v473
      %v574 = vpack.c.b16 %v479, %v474
      %v575 = vpack.c.b16 %v480, %v475
      %v576 = vpack.c.b16 %v481, %v476
      %v577 = vpack.c.b16 %v482, %v477
      %v578 = vpack.c.b16 %v488, %v483
      %v579 = vpack.c.b16 %v489, %v484
      %v580 = vpack.c.b16 %v490, %v485
      %v581 = vpack.c.b16 %v491, %v486
      %v582 = vpack.c.b16 %v492, %v487
      %v583 = vpack.c.b16 %v498, %v493
      %v584 = vpack.c.b16 %v499, %v494
      %v585 = vpack.c.b16 %v500, %v495
      %v586 = vpack.c.b16 %v501, %v496
      %v587 = vpack.c.b16 %v502, %v497
      %v588 = vpack.c.b16 %v508, %v503
      %v589 = vpack.c.b16 %v509, %v504
      %v590 = vpack.c.b16 %v510, %v505
      %v591 = vpack.c.b16 %v511, %v506
      %v592 = vpack.c.b16 %v512, %v507
      %v593 = vpack.c.b16 %v518, %v513
      %v594 = vpack.c.b16 %v519, %v514
      %v595 = vpack.c.b16 %v520, %v515
      %v596 = vpack.c.b16 %v521, %v516
      %v597 = vpack.c.b16 %v522, %v517
      %v598 = vpack.c.b16 %v528, %v523
      %v599 = vpack.c.b16 %v529, %v524
      %v600 = vpack.c.b16 %v530, %v525
      %v601 = vpack.c.b16 %v531, %v526
      %v602 = vpack.c.b16 %v532, %v527
      %v603 = vpack.c.b16 %v538, %v533
      %v604 = vpack.c.b16 %v539, %v534
      %v605 = vpack.c.b16 %v540, %v535
      %v606 = vpack.c.b16 %v541, %v536
      %v607 = vpack.c.b16 %v542, %v537
      %v732 = vunpack.c.l.b16 %v256
      %v733 = vunpack.c.l.b16 %v257
      %v734 = vunpack.c.l.b16 %v258
      %v735 = vunpack.c.l.b16 %v259
      %v736 = vunpack.c.l.b16 %v260
      %v737 = vunpack.c.l.b16 %v261
      %v738 = vunpack.c.l.b16 %v262
      %v739 = vunpack.c.l.b16 %v263
      %v740 = vunpack.c.l.b16 %v264
      %v741 = vunpack.c.l.b16 %v265
      %v742 = vunpack.c.l.b16 %v266
      %v743 = vunpack.c.l.b16 %v267
      %v744 = vunpack.c.l.b16 %v268
      %v745 = vunpack.c.l.b16 %v269
      %v746 = vunpack.c.l.b16 %v270
      %v747 = vunpack.c.l.b16 %v271
      %v748 = vunpack.c.l.b16 %v272
      %v749 = vunpack.c.l.b16 %v273
      %v750 = vunpack.c.l.b16 %v274
      %v751 = vunpack.c.l.b16 %v275
      %v752 = vunpack.c.l.b16 %v276
      %v753 = vunpack.c.l.b16 %v277
      %v754 = vunpack.c.l.b16 %v278
      %v755 = vunpack.c.l.b16 %v279
      %v756 = vunpack.c.l.b16 %v280
      %v757 = vunpack.c.l.b16 %v281
      %v758 = vunpack.c.l.b16 %v282
      %v759 = vunpack.c.l.b16 %v283
      %v760 = vunpack.c.l.b16 %v284
      %v761 = vunpack.c.l.b16 %v285
      %v762 = vunpack.c.l.b16 %v286
      %v763 = vunpack.c.l.b16 %v287
      %v764 = vunpack.c.l.b16 %v288
      %v765 = vunpack.c.l.b16 %v289
      %v766 = vunpack.c.l.b16 %v290
      %v767 = vunpack.c.l.b16 %v291
      %v768 = vunpack.c.l.b16 %v292
      %v769 = vunpack.c.l.b16 %v293
      %v770 = vunpack.c.l.b16 %v294
      %v771 = vunpack.c.l.b16 %v295
      %v772 = vunpack.c.l.b16 %v296
      %v773 = vunpack.c.l.b16 %v297
      %v774 = vunpack.c.l.b16 %v298
      %v775 = vunpack.c.l.b16 %v299
      %v776 = vunpack.c.l.b16 %v300
      %v777 = vunpack.c.l.b16 %v301
      %v778 = vunpack.c.l.b16 %v302
      %v779 = vunpack.c.l.b16 %v303
      %v780 = vunpack.c.l.b16 %v304
      %v781 = vunpack.c.l.b16 %v305
      %v782 = vunpack.c.l.b16 %v306
      %v783 = vunpack.c.l.b16 %v307
      %v784 = vunpack.c.l.b16 %v308
      %v785 = vunpack.c.l.b16 %v309
      %v786 = vunpack.c.l.b16 %v310
      %v787 = vunpack.c.l.b16 %v311
      %v788 = vunpack.c.l.b16 %v312
      %v789 = vunpack.c.l.b16 %v313
      %v790 = vunpack.c.l.b16 %v314
      %v791 = vunpack.c.l.b16 %v315
      %v792 = vunpack.c.l.b16 %v316
      %v793 = vunpack.c.l.b16 %v317
      %v794 = vunpack.c.l.b16 %v318
      %v795 = vunpack.c.l.b16 %v319
      %v796 = vunpack.c.l.b16 %v320
      %v797 = vunpack.c.l.b16 %v321
      %v798 = vunpack.c.l.b16 %v322
      %v799 = vunpack.c.l.b16 %v323
      %v800 = vunpack.c.l.b16 %v324
      %v801 = vunpack.c.l.b16 %v325
      %v802 = vunpack.c.l.b16 %v326
      %v803 = vunpack.c.l.b16 %v327
      %v804 = vpack.c.b16 %v733, %v732
      %v805 = vpack.c.b16 %v735, %v734
      %v806 = vpack.c.b16 %v737, %v736
      %v807 = vpack.c.b16 %v739, %v738
      %v808 = vpack.c.b16 %v741, %v740
      %v809 = vpack.c.b16 %v743, %v742
      %v810 = vpack.c.b16 %v745, %v744
      %v811 = vpack.c.b16 %v747, %v746
      %v812 = vpack.c.b16 %v749, %v748
      %v813 = vpack.c.b16 %v751, %v750
      %v814 = vpack.c.b16 %v753, %v752
      %v815 = vpack.c.b16 %v755, %v754
      %v816 = vpack.c.b16 %v757, %v756
      %v817 = vpack.c.b16 %v759, %v758
      %v818 = vpack.c.b16 %v761, %v760
      %v819 = vpack.c.b16 %v763, %v762
      %v820 = vpack.c.b16 %v765, %v764
      %v821 = vpack.c.b16 %v767, %v766
      %v822 = vpack.c.b16 %v769, %v768
      %v823 = vpack.c.b16 %v771, %v770
      %v824 = vpack.c.b16 %v773, %v772
      %v825 = vpack.c.b16 %v775, %v774
      %v826 = vpack.c.b16 %v777, %v776
      %v827 = vpack.c.b16 %v779, %v778
      %v828 = vpack.c.b16 %v781, %v780
      %v829 = vpack.c.b16 %v783, %v782
      %v830 = vpack.c.b16 %v785, %v784
      %v831 = vpack.c.b16 %v787, %v786
      %v832 = vpack.c.b16 %v789, %v788
      %v833 = vpack.c.b16 %v791, %v790
      %v834 = vpack.c.b16 %v793, %v792
      %v835 = vpack.c.b16 %v795, %v794
      %v836 = vpack.c.b16 %v797, %v796
      %v837 = vpack.c.b16 %v799, %v798
      %v838 = vpack.c.b16 %v801, %v800
      %v839 = vpack.c.b16 %v803, %v802
      %vm876 = vcmask 523264
      %v878 = vsel %vm876, %v547, 0
      %v881 = vsel %vm876, %v552, 0
      %v884 = vsel %vm876, %v557, 0
      %v887 = vsel %vm876, %v562, 0
      %v890 = vsel %vm876, %v567, 0
      %v893 = vsel %vm876, %v572, 0
      %v896 = vsel %vm876, %v577, 0
      %v899 = vsel %vm876, %v582, 0
      %v902 = vsel %vm876, %v587, 0
      %v905 = vsel %vm876, %v592, 0
      %v908 = vsel %vm876, %v597, 0
      %v911 = vsel %vm876, %v602, 0
      %v914 = vsel %vm876, %v607, 0
      %916 = vmatprep.subr.bf16.mxu0 0
      %917 = vmatpush1.bf16.msra.mxu0 %v804
      %918 = vmatprep.subr.bf16.mxu0 0
      %919 = vmatpush1.bf16.msra.mxu0 %v805
      %920 = vmatprep.subr.bf16.mxu0 0
      %921 = vmatpush1.bf16.msra.mxu0 %v806
      %922 = vmatprep.subr.bf16.mxu0 0
      %923 = vmatpush1.bf16.msra.mxu0 %v807
      %924 = vmatprep.subr.bf16.mxu0 0
      %925 = vmatpush1.bf16.msra.mxu0 %v808
      %926 = vmatprep.subr.bf16.mxu0 0
      %927 = vmatpush1.bf16.msra.mxu0 %v809
      %928 = vmatprep.subr.bf16.mxu0 0
      %929 = vmatpush1.bf16.msra.mxu0 %v810
      %930 = vmatprep.subr.bf16.mxu0 0
      %931 = vmatpush1.bf16.msra.mxu0 %v811
      %932 = vmatprep.subr.bf16.mxu0 0
      %933 = vmatpush1.bf16.msra.mxu0 %v812
      %934 = vmatprep.subr.bf16.mxu0 0
      %935 = vmatpush1.bf16.msra.mxu0 %v813
      %936 = vmatprep.subr.bf16.mxu0 0
      %937 = vmatpush1.bf16.msra.mxu0 %v814
      %938 = vmatprep.subr.bf16.mxu0 0
      %939 = vmatpush1.bf16.msra.mxu0 %v815
      %940 = vmatprep.subr.bf16.mxu0 0
      %941 = vmatpush1.bf16.msra.mxu0 %v816
      %942 = vmatprep.subr.bf16.mxu0 0
      %943 = vmatpush1.bf16.msra.mxu0 %v817
      %944 = vmatprep.subr.bf16.mxu0 0
      %945 = vmatpush1.bf16.msra.mxu0 %v818
      %946 = vmatprep.subr.bf16.mxu0 0
      %947 = vmatpush1.bf16.msra.mxu0 %v819
      %948 = vmatprep.mubr.bf16.mxu0 %v544
      %949 = vmatmul.mubr.bf16.gmra.mrb[0].mxu0 %v543
      %v950 = vpop.f32.mrb[0].mxu0
      %v951 = vadd.f32 %v333, %v950
      %v952 = vpop.f32.mrb[0].mxu0
      %v953 = vpop.f32.mrb[0].mxu0
      %v954 = vadd.f32 %v333, %v953
      %v955 = vpop.f32.mrb[0].mxu0
      %956 = vmatprep.mubr.bf16.mxu0 %v549
      %957 = vmatmul.mubr.bf16.gmra.mrb[0].mxu0 %v548
      %v958 = vpop.f32.mrb[0].mxu0
      %v959 = vadd.f32 %v333, %v958
      %v960 = vpop.f32.mrb[0].mxu0
      %v961 = vpop.f32.mrb[0].mxu0
      %v962 = vadd.f32 %v333, %v961
      %v963 = vpop.f32.mrb[0].mxu0
      %964 = vmatprep.mubr.bf16.mxu0 %v554
      %965 = vmatmul.mubr.bf16.gmra.mrb[0].mxu0 %v553
      %v966 = vpop.f32.mrb[0].mxu0
      %v967 = vadd.f32 %v333, %v966
      %v968 = vpop.f32.mrb[0].mxu0
      %v969 = vpop.f32.mrb[0].mxu0
      %v970 = vadd.f32 %v333, %v969
      %v971 = vpop.f32.mrb[0].mxu0
      %972 = vmatprep.mubr.bf16.mxu0 %v559
      %973 = vmatmul.mubr.bf16.gmra.mrb[0].mxu0 %v558
      %v974 = vpop.f32.mrb[0].mxu0
      %v975 = vadd.f32 %v333, %v974
      %v976 = vpop.f32.mrb[0].mxu0
      %v977 = vpop.f32.mrb[0].mxu0
      %v978 = vadd.f32 %v333, %v977
      %v979 = vpop.f32.mrb[0].mxu0
      %980 = vmatprep.mubr.bf16.mxu0 %v564
      %981 = vmatmul.mubr.bf16.gmra.mrb[0].mxu0 %v563
      %v982 = vpop.f32.mrb[0].mxu0
      %v983 = vadd.f32 %v333, %v982
      %v984 = vpop.f32.mrb[0].mxu0
      %v985 = vpop.f32.mrb[0].mxu0
      %v986 = vadd.f32 %v333, %v985
      %v987 = vpop.f32.mrb[0].mxu0
      %988 = vmatprep.mubr.bf16.mxu0 %v569
      %989 = vmatmul.mubr.bf16.gmra.mrb[0].mxu0 %v568
      %v990 = vpop.f32.mrb[0].mxu0
      %v991 = vadd.f32 %v333, %v990
      %v992 = vpop.f32.mrb[0].mxu0
      %v993 = vpop.f32.mrb[0].mxu0
      %v994 = vadd.f32 %v333, %v993
      %v995 = vpop.f32.mrb[0].mxu0
      %996 = vmatprep.mubr.bf16.mxu0 %v574
      %997 = vmatmul.mubr.bf16.gmra.mrb[0].mxu0 %v573
      %v998 = vpop.f32.mrb[0].mxu0
      %v999 = vadd.f32 %v333, %v998
      %v1000 = vpop.f32.mrb[0].mxu0
      %v1001 = vpop.f32.mrb[0].mxu0
      %v1002 = vadd.f32 %v333, %v1001
      %v1003 = vpop.f32.mrb[0].mxu0
      %1004 = vmatprep.mubr.bf16.mxu0 %v579
      %1005 = vmatmul.mubr.bf16.gmra.mrb[0].mxu0 %v578
      %v1006 = vpop.f32.mrb[0].mxu0
      %v1007 = vadd.f32 %v333, %v1006
      %v1008 = vpop.f32.mrb[0].mxu0
      %v1009 = vpop.f32.mrb[0].mxu0
      %v1010 = vadd.f32 %v333, %v1009
      %v1011 = vpop.f32.mrb[0].mxu0
      %1012 = vmatprep.mubr.bf16.mxu0 %v584
      %1013 = vmatmul.mubr.bf16.gmra.mrb[0].mxu0 %v583
      %v1014 = vpop.f32.mrb[0].mxu0
      %v1015 = vadd.f32 %v333, %v1014
      %v1016 = vpop.f32.mrb[0].mxu0
      %v1017 = vpop.f32.mrb[0].mxu0
      %v1018 = vadd.f32 %v333, %v1017
      %v1019 = vpop.f32.mrb[0].mxu0
      %1020 = vmatprep.mubr.bf16.mxu0 %v589
      %1021 = vmatmul.mubr.bf16.gmra.mrb[0].mxu0 %v588
      %v1022 = vpop.f32.mrb[0].mxu0
      %v1023 = vadd.f32 %v333, %v1022
      %v1024 = vpop.f32.mrb[0].mxu0
      %v1025 = vpop.f32.mrb[0].mxu0
      %v1026 = vadd.f32 %v333, %v1025
      %v1027 = vpop.f32.mrb[0].mxu0
      %1028 = vmatprep.mubr.bf16.mxu0 %v594
      %1029 = vmatmul.mubr.bf16.gmra.mrb[0].mxu0 %v593
      %v1030 = vpop.f32.mrb[0].mxu0
      %v1031 = vadd.f32 %v333, %v1030
      %v1032 = vpop.f32.mrb[0].mxu0
      %v1033 = vpop.f32.mrb[0].mxu0
      %v1034 = vadd.f32 %v333, %v1033
      %v1035 = vpop.f32.mrb[0].mxu0
      %1036 = vmatprep.mubr.bf16.mxu0 %v599
      %1037 = vmatmul.mubr.bf16.gmra.mrb[0].mxu0 %v598
      %v1038 = vpop.f32.mrb[0].mxu0
      %v1039 = vadd.f32 %v333, %v1038
      %v1040 = vpop.f32.mrb[0].mxu0
      %v1041 = vpop.f32.mrb[0].mxu0
      %v1042 = vadd.f32 %v333, %v1041
      %v1043 = vpop.f32.mrb[0].mxu0
      %1044 = vmatprep.mubr.bf16.mxu0 %v604
      %1045 = vmatmul.mubr.bf16.gmra.mrb[0].mxu0 %v603
      %v1046 = vpop.f32.mrb[0].mxu0
      %v1047 = vadd.f32 %v333, %v1046
      %v1048 = vpop.f32.mrb[0].mxu0
      %v1049 = vpop.f32.mrb[0].mxu0
      %v1050 = vadd.f32 %v333, %v1049
      %v1051 = vpop.f32.mrb[0].mxu0
      %1052 = vdwg.mxu0
      %1053 = vmatprep.subr.bf16.mxu0 0
      %1054 = vmatpush1.bf16.msra.mxu0 %v820
      %1055 = vmatprep.subr.bf16.mxu0 0
      %1056 = vmatpush1.bf16.msra.mxu0 %v821
      %1057 = vmatprep.subr.bf16.mxu0 0
      %1058 = vmatpush1.bf16.msra.mxu0 %v822
      %1059 = vmatprep.subr.bf16.mxu0 0
      %1060 = vmatpush1.bf16.msra.mxu0 %v823
      %1061 = vmatprep.subr.bf16.mxu0 0
      %1062 = vmatpush1.bf16.msra.mxu0 %v824
      %1063 = vmatprep.subr.bf16.mxu0 0
      %1064 = vmatpush1.bf16.msra.mxu0 %v825
      %1065 = vmatprep.subr.bf16.mxu0 0
      %1066 = vmatpush1.bf16.msra.mxu0 %v826
      %1067 = vmatprep.subr.bf16.mxu0 0
      %1068 = vmatpush1.bf16.msra.mxu0 %v827
      %1069 = vmatprep.subr.bf16.mxu0 0
      %1070 = vmatpush1.bf16.msra.mxu0 %v828
      %1071 = vmatprep.subr.bf16.mxu0 0
      %1072 = vmatpush1.bf16.msra.mxu0 %v829
      %1073 = vmatprep.subr.bf16.mxu0 0
      %1074 = vmatpush1.bf16.msra.mxu0 %v830
      %1075 = vmatprep.subr.bf16.mxu0 0
      %1076 = vmatpush1.bf16.msra.mxu0 %v831
      %1077 = vmatprep.subr.bf16.mxu0 0
      %1078 = vmatpush1.bf16.msra.mxu0 %v832
      %1079 = vmatprep.subr.bf16.mxu0 0
      %1080 = vmatpush1.bf16.msra.mxu0 %v833
      %1081 = vmatprep.subr.bf16.mxu0 0
      %1082 = vmatpush1.bf16.msra.mxu0 %v834
      %1083 = vmatprep.subr.bf16.mxu0 0
      %1084 = vmatpush1.bf16.msra.mxu0 %v835
      %1085 = vmatprep.mubr.bf16.mxu0 %v546
      %1086 = vmatmul.mubr.bf16.gmra.mrb[0].mxu0 %v545
      %v1087 = vpop.f32.mrb[0].mxu0
      %v1088 = vadd.f32 %v951, %v1087
      %v1089 = vpop.f32.mrb[0].mxu0
      %v1090 = vpop.f32.mrb[0].mxu0
      %v1091 = vadd.f32 %v954, %v1090
      %v1092 = vpop.f32.mrb[0].mxu0
      %1093 = vmatprep.mubr.bf16.mxu0 %v551
      %1094 = vmatmul.mubr.bf16.gmra.mrb[0].mxu0 %v550
      %v1095 = vpop.f32.mrb[0].mxu0
      %v1096 = vadd.f32 %v959, %v1095
      %v1097 = vpop.f32.mrb[0].mxu0
      %v1098 = vpop.f32.mrb[0].mxu0
      %v1099 = vadd.f32 %v962, %v1098
      %v1100 = vpop.f32.mrb[0].mxu0
      %1101 = vmatprep.mubr.bf16.mxu0 %v556
      %1102 = vmatmul.mubr.bf16.gmra.mrb[0].mxu0 %v555
      %v1103 = vpop.f32.mrb[0].mxu0
      %v1104 = vadd.f32 %v967, %v1103
      %v1105 = vpop.f32.mrb[0].mxu0
      %v1106 = vpop.f32.mrb[0].mxu0
      %v1107 = vadd.f32 %v970, %v1106
      %v1108 = vpop.f32.mrb[0].mxu0
      %1109 = vmatprep.mubr.bf16.mxu0 %v561
      %1110 = vmatmul.mubr.bf16.gmra.mrb[0].mxu0 %v560
      %v1111 = vpop.f32.mrb[0].mxu0
      %v1112 = vadd.f32 %v975, %v1111
      %v1113 = vpop.f32.mrb[0].mxu0
      %v1114 = vpop.f32.mrb[0].mxu0
      %v1115 = vadd.f32 %v978, %v1114
      %v1116 = vpop.f32.mrb[0].mxu0
      %1117 = vmatprep.mubr.bf16.mxu0 %v566
      %1118 = vmatmul.mubr.bf16.gmra.mrb[0].mxu0 %v565
      %v1119 = vpop.f32.mrb[0].mxu0
      %v1120 = vadd.f32 %v983, %v1119
      %v1121 = vpop.f32.mrb[0].mxu0
      %v1122 = vpop.f32.mrb[0].mxu0
      %v1123 = vadd.f32 %v986, %v1122
      %v1124 = vpop.f32.mrb[0].mxu0
      %1125 = vmatprep.mubr.bf16.mxu0 %v571
      %1126 = vmatmul.mubr.bf16.gmra.mrb[0].mxu0 %v570
      %v1127 = vpop.f32.mrb[0].mxu0
      %v1128 = vadd.f32 %v991, %v1127
      %v1129 = vpop.f32.mrb[0].mxu0
      %v1130 = vpop.f32.mrb[0].mxu0
      %v1131 = vadd.f32 %v994, %v1130
      %v1132 = vpop.f32.mrb[0].mxu0
      %1133 = vmatprep.mubr.bf16.mxu0 %v576
      %1134 = vmatmul.mubr.bf16.gmra.mrb[0].mxu0 %v575
      %v1135 = vpop.f32.mrb[0].mxu0
      %v1136 = vadd.f32 %v999, %v1135
      %v1137 = vpop.f32.mrb[0].mxu0
      %v1138 = vpop.f32.mrb[0].mxu0
      %v1139 = vadd.f32 %v1002, %v1138
      %v1140 = vpop.f32.mrb[0].mxu0
      %1141 = vmatprep.mubr.bf16.mxu0 %v581
      %1142 = vmatmul.mubr.bf16.gmra.mrb[0].mxu0 %v580
      %v1143 = vpop.f32.mrb[0].mxu0
      %v1144 = vadd.f32 %v1007, %v1143
      %v1145 = vpop.f32.mrb[0].mxu0
      %v1146 = vpop.f32.mrb[0].mxu0
      %v1147 = vadd.f32 %v1010, %v1146
      %v1148 = vpop.f32.mrb[0].mxu0
      %1149 = vmatprep.mubr.bf16.mxu0 %v586
      %1150 = vmatmul.mubr.bf16.gmra.mrb[0].mxu0 %v585
      %v1151 = vpop.f32.mrb[0].mxu0
      %v1152 = vadd.f32 %v1015, %v1151
      %v1153 = vpop.f32.mrb[0].mxu0
      %v1154 = vpop.f32.mrb[0].mxu0
      %v1155 = vadd.f32 %v1018, %v1154
      %v1156 = vpop.f32.mrb[0].mxu0
      %1157 = vmatprep.mubr.bf16.mxu0 %v591
      %1158 = vmatmul.mubr.bf16.gmra.mrb[0].mxu0 %v590
      %v1159 = vpop.f32.mrb[0].mxu0
      %v1160 = vadd.f32 %v1023, %v1159
      %v1161 = vpop.f32.mrb[0].mxu0
      %v1162 = vpop.f32.mrb[0].mxu0
      %v1163 = vadd.f32 %v1026, %v1162
      %v1164 = vpop.f32.mrb[0].mxu0
      %1165 = vmatprep.mubr.bf16.mxu0 %v596
      %1166 = vmatmul.mubr.bf16.gmra.mrb[0].mxu0 %v595
      %v1167 = vpop.f32.mrb[0].mxu0
      %v1168 = vadd.f32 %v1031, %v1167
      %v1169 = vpop.f32.mrb[0].mxu0
      %v1170 = vpop.f32.mrb[0].mxu0
      %v1171 = vadd.f32 %v1034, %v1170
      %v1172 = vpop.f32.mrb[0].mxu0
      %1173 = vmatprep.mubr.bf16.mxu0 %v601
      %1174 = vmatmul.mubr.bf16.gmra.mrb[0].mxu0 %v600
      %v1175 = vpop.f32.mrb[0].mxu0
      %v1176 = vadd.f32 %v1039, %v1175
      %v1177 = vpop.f32.mrb[0].mxu0
      %v1178 = vpop.f32.mrb[0].mxu0
      %v1179 = vadd.f32 %v1042, %v1178
      %v1180 = vpop.f32.mrb[0].mxu0
      %1181 = vmatprep.mubr.bf16.mxu0 %v606
      %1182 = vmatmul.mubr.bf16.gmra.mrb[0].mxu0 %v605
      %v1183 = vpop.f32.mrb[0].mxu0
      %v1184 = vadd.f32 %v1047, %v1183
      %v1185 = vpop.f32.mrb[0].mxu0
      %v1186 = vpop.f32.mrb[0].mxu0
      %v1187 = vadd.f32 %v1050, %v1186
      %v1188 = vpop.f32.mrb[0].mxu0
      %1189 = vdwg.mxu0
      %1190 = vmatprep.subr.bf16.mxu0 0
      %1191 = vmatpush1.bf16.msra.mxu0 %v836
      %1192 = vmatprep.subr.bf16.mxu0 0
      %1193 = vmatpush1.bf16.msra.mxu0 %v837
      %1194 = vmatprep.subr.bf16.mxu0 0
      %1195 = vmatpush1.bf16.msra.mxu0 %v838
      %1196 = vmatprep.subr.bf16.mxu0 0
      %1197 = vmatpush1.bf16.msra.mxu0 %v839
      %1198 = vmatprep.subr.bf16.mxu0 0
      %1199 = vmatpush1.bf16.msra.mxu0 0
      %1200 = vmatprep.subr.bf16.mxu0 0
      %1201 = vmatpush1.bf16.msra.mxu0 0
      %1202 = vmatprep.subr.bf16.mxu0 0
      %1203 = vmatpush1.bf16.msra.mxu0 0
      %1204 = vmatprep.subr.bf16.mxu0 0
      %1205 = vmatpush1.bf16.msra.mxu0 0
      %1206 = vmatprep.subr.bf16.mxu0 0
      %1207 = vmatpush1.bf16.msra.mxu0 0
      %1208 = vmatprep.subr.bf16.mxu0 0
      %1209 = vmatpush1.bf16.msra.mxu0 0
      %1210 = vmatprep.subr.bf16.mxu0 0
      %1211 = vmatpush1.bf16.msra.mxu0 0
      %1212 = vmatprep.subr.bf16.mxu0 0
      %1213 = vmatpush1.bf16.msra.mxu0 0
      %1214 = vmatprep.subr.bf16.mxu0 0
      %1215 = vmatpush1.bf16.msra.mxu0 0
      %1216 = vmatprep.subr.bf16.mxu0 0
      %1217 = vmatpush1.bf16.msra.mxu0 0
      %1218 = vmatprep.subr.bf16.mxu0 0
      %1219 = vmatpush1.bf16.msra.mxu0 0
      %1220 = vmatprep.subr.bf16.mxu0 0
      %1221 = vmatpush1.bf16.msra.mxu0 0
      %1222 = vmatprep.mubr.bf16.mxu0 0
      %1223 = vmatmul.mubr.bf16.gmra.mrb[0].mxu0 %v878
      %v1224 = vpop.f32.mrb[0].mxu0
      %v1225 = vadd.f32 %v1088, %v1224
      %v1226 = vpop.f32.mrb[0].mxu0
      %v1227 = vpop.f32.mrb[0].mxu0
      %v1228 = vadd.f32 %v1091, %v1227
      %v1229 = vpop.f32.mrb[0].mxu0
      %1230 = vmatprep.mubr.bf16.mxu0 0
      %1231 = vmatmul.mubr.bf16.gmra.mrb[0].mxu0 %v881
      %v1232 = vpop.f32.mrb[0].mxu0
      %v1233 = vadd.f32 %v1096, %v1232
      %v1234 = vpop.f32.mrb[0].mxu0
      %v1235 = vpop.f32.mrb[0].mxu0
      %v1236 = vadd.f32 %v1099, %v1235
      %v1237 = vpop.f32.mrb[0].mxu0
      %1238 = vmatprep.mubr.bf16.mxu0 0
      %1239 = vmatmul.mubr.bf16.gmra.mrb[0].mxu0 %v884
      %v1240 = vpop.f32.mrb[0].mxu0
      %v1241 = vadd.f32 %v1104, %v1240
      %v1242 = vpop.f32.mrb[0].mxu0
      %v1243 = vpop.f32.mrb[0].mxu0
      %v1244 = vadd.f32 %v1107, %v1243
      %v1245 = vpop.f32.mrb[0].mxu0
      %1246 = vmatprep.mubr.bf16.mxu0 0
      %1247 = vmatmul.mubr.bf16.gmra.mrb[0].mxu0 %v887
      %v1248 = vpop.f32.mrb[0].mxu0
      %v1249 = vadd.f32 %v1112, %v1248
      %v1250 = vpop.f32.mrb[0].mxu0
      %v1251 = vpop.f32.mrb[0].mxu0
      %v1252 = vadd.f32 %v1115, %v1251
      %v1253 = vpop.f32.mrb[0].mxu0
      %1254 = vmatprep.mubr.bf16.mxu0 0
      %1255 = vmatmul.mubr.bf16.gmra.mrb[0].mxu0 %v890
      %v1256 = vpop.f32.mrb[0].mxu0
      %v1257 = vadd.f32 %v1120, %v1256
      %v1258 = vpop.f32.mrb[0].mxu0
      %v1259 = vpop.f32.mrb[0].mxu0
      %v1260 = vadd.f32 %v1123, %v1259
      %v1261 = vpop.f32.mrb[0].mxu0
      %1262 = vmatprep.mubr.bf16.mxu0 0
      %1263 = vmatmul.mubr.bf16.gmra.mrb[0].mxu0 %v893
      %v1264 = vpop.f32.mrb[0].mxu0
      %v1265 = vadd.f32 %v1128, %v1264
      %v1266 = vpop.f32.mrb[0].mxu0
      %v1267 = vpop.f32.mrb[0].mxu0
      %v1268 = vadd.f32 %v1131, %v1267
      %v1269 = vpop.f32.mrb[0].mxu0
      %1270 = vmatprep.mubr.bf16.mxu0 0
      %1271 = vmatmul.mubr.bf16.gmra.mrb[0].mxu0 %v896
      %v1272 = vpop.f32.mrb[0].mxu0
      %v1273 = vadd.f32 %v1136, %v1272
      %v1274 = vpop.f32.mrb[0].mxu0
      %v1275 = vpop.f32.mrb[0].mxu0
      %v1276 = vadd.f32 %v1139, %v1275
      %v1277 = vpop.f32.mrb[0].mxu0
      %1278 = vmatprep.mubr.bf16.mxu0 0
      %1279 = vmatmul.mubr.bf16.gmra.mrb[0].mxu0 %v899
      %v1280 = vpop.f32.mrb[0].mxu0
      %v1281 = vadd.f32 %v1144, %v1280
      %v1282 = vpop.f32.mrb[0].mxu0
      %v1283 = vpop.f32.mrb[0].mxu0
      %v1284 = vadd.f32 %v1147, %v1283
      %v1285 = vpop.f32.mrb[0].mxu0
      %1286 = vmatprep.mubr.bf16.mxu0 0
      %1287 = vmatmul.mubr.bf16.gmra.mrb[0].mxu0 %v902
      %v1288 = vpop.f32.mrb[0].mxu0
      %v1289 = vadd.f32 %v1152, %v1288
      %v1290 = vpop.f32.mrb[0].mxu0
      %v1291 = vpop.f32.mrb[0].mxu0
      %v1292 = vadd.f32 %v1155, %v1291
      %v1293 = vpop.f32.mrb[0].mxu0
      %1294 = vmatprep.mubr.bf16.mxu0 0
      %1295 = vmatmul.mubr.bf16.gmra.mrb[0].mxu0 %v905
      %v1296 = vpop.f32.mrb[0].mxu0
      %v1297 = vadd.f32 %v1160, %v1296
      %v1298 = vpop.f32.mrb[0].mxu0
      %v1299 = vpop.f32.mrb[0].mxu0
      %v1300 = vadd.f32 %v1163, %v1299
      %v1301 = vpop.f32.mrb[0].mxu0
      %1302 = vmatprep.mubr.bf16.mxu0 0
      %1303 = vmatmul.mubr.bf16.gmra.mrb[0].mxu0 %v908
      %v1304 = vpop.f32.mrb[0].mxu0
      %v1305 = vadd.f32 %v1168, %v1304
      %v1306 = vpop.f32.mrb[0].mxu0
      %v1307 = vpop.f32.mrb[0].mxu0
      %v1308 = vadd.f32 %v1171, %v1307
      %v1309 = vpop.f32.mrb[0].mxu0
      %1310 = vmatprep.mubr.bf16.mxu0 0
      %1311 = vmatmul.mubr.bf16.gmra.mrb[0].mxu0 %v911
      %v1312 = vpop.f32.mrb[0].mxu0
      %v1313 = vadd.f32 %v1176, %v1312
      %v1314 = vpop.f32.mrb[0].mxu0
      %v1315 = vpop.f32.mrb[0].mxu0
      %v1316 = vadd.f32 %v1179, %v1315
      %v1317 = vpop.f32.mrb[0].mxu0
      %1318 = vmatprep.mubr.bf16.mxu0 0
      %1319 = vmatmul.mubr.bf16.gmra.mrb[0].mxu0 %v914
      %v1320 = vpop.f32.mrb[0].mxu0
      %v1321 = vadd.f32 %v1184, %v1320
      %v1322 = vpop.f32.mrb[0].mxu0
      %v1323 = vpop.f32.mrb[0].mxu0
      %v1324 = vadd.f32 %v1187, %v1323
      %v1325 = vpop.f32.mrb[0].mxu0
      %1326 = vdwg.mxu0
      %v1327 = vmul.f32 %v1225, 0.5
      %v1328 = vmul.f32 %v1228, 0.5
      %v1329 = vmul.f32 %v1233, 0.5
      %v1330 = vmul.f32 %v1236, 0.5
      %v1331 = vmul.f32 %v1241, 0.5
      %v1332 = vmul.f32 %v1244, 0.5
      %v1333 = vmul.f32 %v1249, 0.5
      %v1334 = vmul.f32 %v1252, 0.5
      %v1335 = vmul.f32 %v1257, 0.5
      %v1336 = vmul.f32 %v1260, 0.5
      %v1337 = vmul.f32 %v1265, 0.5
      %v1338 = vmul.f32 %v1268, 0.5
      %v1339 = vmul.f32 %v1273, 0.5
      %v1340 = vmul.f32 %v1276, 0.5
      %v1341 = vmul.f32 %v1281, 0.5
      %v1342 = vmul.f32 %v1284, 0.5
      %v1343 = vmul.f32 %v1289, 0.5
      %v1344 = vmul.f32 %v1292, 0.5
      %v1345 = vmul.f32 %v1297, 0.5
      %v1346 = vmul.f32 %v1300, 0.5
      %v1347 = vmul.f32 %v1305, 0.5
      %v1348 = vmul.f32 %v1308, 0.5
      %v1349 = vmul.f32 %v1313, 0.5
      %v1350 = vmul.f32 %v1316, 0.5
      %v1351 = vmul.f32 %v1321, 0.5
      %v1352 = vmul.f32 %v1324, 0.5
      %v1353 = vmul.f32 %v1225, 0.044715
      %v1354 = vmul.f32 %v1228, 0.044715
      %v1355 = vmul.f32 %v1233, 0.044715
      %v1356 = vmul.f32 %v1236, 0.044715
      %v1357 = vmul.f32 %v1241, 0.044715
      %v1358 = vmul.f32 %v1244, 0.044715
      %v1359 = vmul.f32 %v1249, 0.044715
      %v1360 = vmul.f32 %v1252, 0.044715
      %v1361 = vmul.f32 %v1257, 0.044715
      %v1362 = vmul.f32 %v1260, 0.044715
      %v1363 = vmul.f32 %v1265, 0.044715
      %v1364 = vmul.f32 %v1268, 0.044715
      %v1365 = vmul.f32 %v1273, 0.044715
      %v1366 = vmul.f32 %v1276, 0.044715
      %v1367 = vmul.f32 %v1281, 0.044715
      %v1368 = vmul.f32 %v1284, 0.044715
      %v1369 = vmul.f32 %v1289, 0.044715
      %v1370 = vmul.f32 %v1292, 0.044715
      %v1371 = vmul.f32 %v1297, 0.044715
      %v1372 = vmul.f32 %v1300, 0.044715
      %v1373 = vmul.f32 %v1305, 0.044715
      %v1374 = vmul.f32 %v1308, 0.044715
      %v1375 = vmul.f32 %v1313, 0.044715
      %v1376 = vmul.f32 %v1316, 0.044715
      %v1377 = vmul.f32 %v1321, 0.044715
      %v1378 = vmul.f32 %v1324, 0.044715
      %v1379 = vmul.f32 %v1353, %v1225
      %v1380 = vmul.f32 %v1354, %v1228
      %v1381 = vmul.f32 %v1355, %v1233
      %v1382 = vmul.f32 %v1356, %v1236
      %v1383 = vmul.f32 %v1357, %v1241
      %v1384 = vmul.f32 %v1358, %v1244
      %v1385 = vmul.f32 %v1359, %v1249
      %v1386 = vmul.f32 %v1360, %v1252
      %v1387 = vmul.f32 %v1361, %v1257
      %v1388 = vmul.f32 %v1362, %v1260
      %v1389 = vmul.f32 %v1363, %v1265
      %v1390 = vmul.f32 %v1364, %v1268
      %v1391 = vmul.f32 %v1365, %v1273
      %v1392 = vmul.f32 %v1366, %v1276
      %v1393 = vmul.f32 %v1367, %v1281
      %v1394 = vmul.f32 %v1368, %v1284
      %v1395 = vmul.f32 %v1369, %v1289
      %v1396 = vmul.f32 %v1370, %v1292
      %v1397 = vmul.f32 %v1371, %v1297
      %v1398 = vmul.f32 %v1372, %v1300
      %v1399 = vmul.f32 %v1373, %v1305
      %v1400 = vmul.f32 %v1374, %v1308
      %v1401 = vmul.f32 %v1375, %v1313
      %v1402 = vmul.f32 %v1376, %v1316
      %v1403 = vmul.f32 %v1377, %v1321
      %v1404 = vmul.f32 %v1378, %v1324
      %v1405 = vmul.f32 %v1379, %v1225
      %v1406 = vmul.f32 %v1380, %v1228
      %v1407 = vmul.f32 %v1381, %v1233
      %v1408 = vmul.f32 %v1382, %v1236
      %v1409 = vmul.f32 %v1383, %v1241
      %v1410 = vmul.f32 %v1384, %v1244
      %v1411 = vmul.f32 %v1385, %v1249
      %v1412 = vmul.f32 %v1386, %v1252
      %v1413 = vmul.f32 %v1387, %v1257
      %v1414 = vmul.f32 %v1388, %v1260
      %v1415 = vmul.f32 %v1389, %v1265
      %v1416 = vmul.f32 %v1390, %v1268
      %v1417 = vmul.f32 %v1391, %v1273
      %v1418 = vmul.f32 %v1392, %v1276
      %v1419 = vmul.f32 %v1393, %v1281
      %v1420 = vmul.f32 %v1394, %v1284
      %v1421 = vmul.f32 %v1395, %v1289
      %v1422 = vmul.f32 %v1396, %v1292
      %v1423 = vmul.f32 %v1397, %v1297
      %v1424 = vmul.f32 %v1398, %v1300
      %v1425 = vmul.f32 %v1399, %v1305
      %v1426 = vmul.f32 %v1400, %v1308
      %v1427 = vmul.f32 %v1401, %v1313
      %v1428 = vmul.f32 %v1402, %v1316
      %v1429 = vmul.f32 %v1403, %v1321
      %v1430 = vmul.f32 %v1404, %v1324
      %v1431 = vadd.f32 %v1225, %v1405
      %v1432 = vadd.f32 %v1228, %v1406
      %v1433 = vadd.f32 %v1233, %v1407
      %v1434 = vadd.f32 %v1236, %v1408
      %v1435 = vadd.f32 %v1241, %v1409
      %v1436 = vadd.f32 %v1244, %v1410
      %v1437 = vadd.f32 %v1249, %v1411
      %v1438 = vadd.f32 %v1252, %v1412
      %v1439 = vadd.f32 %v1257, %v1413
      %v1440 = vadd.f32 %v1260, %v1414
      %v1441 = vadd.f32 %v1265, %v1415
      %v1442 = vadd.f32 %v1268, %v1416
      %v1443 = vadd.f32 %v1273, %v1417
      %v1444 = vadd.f32 %v1276, %v1418
      %v1445 = vadd.f32 %v1281, %v1419
      %v1446 = vadd.f32 %v1284, %v1420
      %v1447 = vadd.f32 %v1289, %v1421
      %v1448 = vadd.f32 %v1292, %v1422
      %v1449 = vadd.f32 %v1297, %v1423
      %v1450 = vadd.f32 %v1300, %v1424
      %v1451 = vadd.f32 %v1305, %v1425
      %v1452 = vadd.f32 %v1308, %v1426
      %v1453 = vadd.f32 %v1313, %v1427
      %v1454 = vadd.f32 %v1316, %v1428
      %v1455 = vadd.f32 %v1321, %v1429
      %v1456 = vadd.f32 %v1324, %v1430
      %v1457 = vmul.f32 %v1431, 0.7978846
      %v1458 = vmul.f32 %v1432, 0.7978846
      %v1459 = vmul.f32 %v1433, 0.7978846
      %v1460 = vmul.f32 %v1434, 0.7978846
      %v1461 = vmul.f32 %v1435, 0.7978846
      %v1462 = vmul.f32 %v1436, 0.7978846
      %v1463 = vmul.f32 %v1437, 0.7978846
      %v1464 = vmul.f32 %v1438, 0.7978846
      %v1465 = vmul.f32 %v1439, 0.7978846
      %v1466 = vmul.f32 %v1440, 0.7978846
      %v1467 = vmul.f32 %v1441, 0.7978846
      %v1468 = vmul.f32 %v1442, 0.7978846
      %v1469 = vmul.f32 %v1443, 0.7978846
      %v1470 = vmul.f32 %v1444, 0.7978846
      %v1471 = vmul.f32 %v1445, 0.7978846
      %v1472 = vmul.f32 %v1446, 0.7978846
      %v1473 = vmul.f32 %v1447, 0.7978846
      %v1474 = vmul.f32 %v1448, 0.7978846
      %v1475 = vmul.f32 %v1449, 0.7978846
      %v1476 = vmul.f32 %v1450, 0.7978846
      %v1477 = vmul.f32 %v1451, 0.7978846
      %v1478 = vmul.f32 %v1452, 0.7978846
      %v1479 = vmul.f32 %v1453, 0.7978846
      %v1480 = vmul.f32 %v1454, 0.7978846
      %v1481 = vmul.f32 %v1455, 0.7978846
      %v1482 = vmul.f32 %v1456, 0.7978846
      %v1483 = vtanh.pop %v1457
      %v1484 = vtanh.pop %v1458
      %v1485 = vtanh.pop %v1459
      %v1486 = vtanh.pop %v1460
      %v1487 = vtanh.pop %v1461
      %v1488 = vtanh.pop %v1462
      %v1489 = vtanh.pop %v1463
      %v1490 = vtanh.pop %v1464
      %v1491 = vtanh.pop %v1465
      %v1492 = vtanh.pop %v1466
      %v1493 = vtanh.pop %v1467
      %v1494 = vtanh.pop %v1468
      %v1495 = vtanh.pop %v1469
      %v1496 = vtanh.pop %v1470
      %v1497 = vtanh.pop %v1471
      %v1498 = vtanh.pop %v1472
      %v1499 = vtanh.pop %v1473
      %v1500 = vtanh.pop %v1474
      %v1501 = vtanh.pop %v1475
      %v1502 = vtanh.pop %v1476
      %v1503 = vtanh.pop %v1477
      %v1504 = vtanh.pop %v1478
      %v1505 = vtanh.pop %v1479
      %v1506 = vtanh.pop %v1480
      %v1507 = vtanh.pop %v1481
      %v1508 = vtanh.pop %v1482
      %v1509 = vadd.f32 %v1483, 1.0
      %v1510 = vadd.f32 %v1484, 1.0
      %v1511 = vadd.f32 %v1485, 1.0
      %v1512 = vadd.f32 %v1486, 1.0
      %v1513 = vadd.f32 %v1487, 1.0
      %v1514 = vadd.f32 %v1488, 1.0
      %v1515 = vadd.f32 %v1489, 1.0
      %v1516 = vadd.f32 %v1490, 1.0
      %v1517 = vadd.f32 %v1491, 1.0
      %v1518 = vadd.f32 %v1492, 1.0
      %v1519 = vadd.f32 %v1493, 1.0
      %v1520 = vadd.f32 %v1494, 1.0
      %v1521 = vadd.f32 %v1495, 1.0
      %v1522 = vadd.f32 %v1496, 1.0
      %v1523 = vadd.f32 %v1497, 1.0
      %v1524 = vadd.f32 %v1498, 1.0
      %v1525 = vadd.f32 %v1499, 1.0
      %v1526 = vadd.f32 %v1500, 1.0
      %v1527 = vadd.f32 %v1501, 1.0
      %v1528 = vadd.f32 %v1502, 1.0
      %v1529 = vadd.f32 %v1503, 1.0
      %v1530 = vadd.f32 %v1504, 1.0
      %v1531 = vadd.f32 %v1505, 1.0
      %v1532 = vadd.f32 %v1506, 1.0
      %v1533 = vadd.f32 %v1507, 1.0
      %v1534 = vadd.f32 %v1508, 1.0
      %v1535 = vmul.f32 %v1327, %v1509
      %v1536 = vmul.f32 %v1328, %v1510
      %v1537 = vmul.f32 %v1329, %v1511
      %v1538 = vmul.f32 %v1330, %v1512
      %v1539 = vmul.f32 %v1331, %v1513
      %v1540 = vmul.f32 %v1332, %v1514
      %v1541 = vmul.f32 %v1333, %v1515
      %v1542 = vmul.f32 %v1334, %v1516
      %v1543 = vmul.f32 %v1335, %v1517
      %v1544 = vmul.f32 %v1336, %v1518
      %v1545 = vmul.f32 %v1337, %v1519
      %v1546 = vmul.f32 %v1338, %v1520
      %v1547 = vmul.f32 %v1339, %v1521
      %v1548 = vmul.f32 %v1340, %v1522
      %v1549 = vmul.f32 %v1341, %v1523
      %v1550 = vmul.f32 %v1342, %v1524
      %v1551 = vmul.f32 %v1343, %v1525
      %v1552 = vmul.f32 %v1344, %v1526
      %v1553 = vmul.f32 %v1345, %v1527
      %v1554 = vmul.f32 %v1346, %v1528
      %v1555 = vmul.f32 %v1347, %v1529
      %v1556 = vmul.f32 %v1348, %v1530
      %v1557 = vmul.f32 %v1349, %v1531
      %v1558 = vmul.f32 %v1350, %v1532
      %v1559 = vmul.f32 %v1351, %v1533
      %v1560 = vmul.f32 %v1352, %v1534
      %v1561 = vpack.c.bf16 %v1536, %v1535
      %v1562 = vpack.c.bf16 %v1538, %v1537
      %v1563 = vpack.c.bf16 %v1540, %v1539
      %v1564 = vpack.c.bf16 %v1542, %v1541
      %v1565 = vpack.c.bf16 %v1544, %v1543
      %v1566 = vpack.c.bf16 %v1546, %v1545
      %v1567 = vpack.c.bf16 %v1548, %v1547
      %v1568 = vpack.c.bf16 %v1550, %v1549
      %v1569 = vpack.c.bf16 %v1552, %v1551
      %v1570 = vpack.c.bf16 %v1554, %v1553
      %v1571 = vpack.c.bf16 %v1556, %v1555
      %v1572 = vpack.c.bf16 %v1558, %v1557
      %v1573 = vpack.c.bf16 %v1560, %v1559
      %v1587 = vunpack.c.l.b16 %v1561
      %v1588 = vunpack.c.h.b16 %v1561
      %v1589 = vunpack.c.l.b16 %v1562
      %v1590 = vunpack.c.h.b16 %v1562
      %v1591 = vunpack.c.l.b16 %v1563
      %v1592 = vunpack.c.h.b16 %v1563
      %v1593 = vunpack.c.l.b16 %v1564
      %v1594 = vunpack.c.h.b16 %v1564
      %v1595 = vunpack.c.l.b16 %v1565
      %v1596 = vunpack.c.h.b16 %v1565
      %v1597 = vunpack.c.l.b16 %v1566
      %v1598 = vunpack.c.h.b16 %v1566
      %v1599 = vunpack.c.l.b16 %v1567
      %v1600 = vunpack.c.h.b16 %v1567
      %v1601 = vunpack.c.l.b16 %v1568
      %v1602 = vunpack.c.h.b16 %v1568
      %v1603 = vunpack.c.l.b16 %v1569
      %v1604 = vunpack.c.h.b16 %v1569
      %v1605 = vunpack.c.l.b16 %v1570
      %v1606 = vunpack.c.h.b16 %v1570
      %v1607 = vunpack.c.l.b16 %v1571
      %v1608 = vunpack.c.h.b16 %v1571
      %v1609 = vunpack.c.l.b16 %v1572
      %v1610 = vunpack.c.h.b16 %v1572
      %v1611 = vunpack.c.l.b16 %v1573
      %v1612 = vunpack.c.h.b16 %v1573
      %v1613 = vpack.c.b16 %v1587, %v1587
      %v1614 = vpack.c.b16 %v1588, %v1588
      %v1615 = vpack.c.b16 %v1589, %v1589
      %v1616 = vpack.c.b16 %v1590, %v1590
      %v1617 = vpack.c.b16 %v1591, %v1591
      %v1618 = vpack.c.b16 %v1592, %v1592
      %v1619 = vpack.c.b16 %v1593, %v1593
      %v1620 = vpack.c.b16 %v1594, %v1594
      %v1621 = vpack.c.b16 %v1595, %v1595
      %v1622 = vpack.c.b16 %v1596, %v1596
      %v1623 = vpack.c.b16 %v1597, %v1597
      %v1624 = vpack.c.b16 %v1598, %v1598
      %v1625 = vpack.c.b16 %v1599, %v1599
      %v1626 = vpack.c.b16 %v1600, %v1600
      %v1627 = vpack.c.b16 %v1601, %v1601
      %v1628 = vpack.c.b16 %v1602, %v1602
      %v1629 = vpack.c.b16 %v1603, %v1603
      %v1630 = vpack.c.b16 %v1604, %v1604
      %v1631 = vpack.c.b16 %v1605, %v1605
      %v1632 = vpack.c.b16 %v1606, %v1606
      %v1633 = vpack.c.b16 %v1607, %v1607
      %v1634 = vpack.c.b16 %v1608, %v1608
      %v1635 = vpack.c.b16 %v1609, %v1609
      %v1636 = vpack.c.b16 %v1610, %v1610
      %v1637 = vpack.c.b16 %v1611, %v1611
      %v1638 = vpack.c.b16 %v1612, %v1612
      %1665 = vst [vmem:[%s175] sm:$0xf] %v1613
      %1666 = vst [vmem:[%s175 + $0x4] sm:$0xf] %v1614
      %1667 = vst [vmem:[%s175 + $0x8] sm:$0xf] %v1615
      %1668 = vst [vmem:[%s175 + $0xc] sm:$0xf] %v1616
      %1669 = vst [vmem:[%s175 + $0x10] sm:$0xf] %v1617
      %1670 = vst [vmem:[%s175 + $0x14] sm:$0xf] %v1618
      %1671 = vst [vmem:[%s175 + $0x18] sm:$0xf] %v1619
      %1672 = vst [vmem:[%s175 + $0x1c] sm:$0xf] %v1620
      %1673 = vst [vmem:[%s175 + $0x20] sm:$0xf] %v1621
      %1674 = vst [vmem:[%s175 + $0x24] sm:$0xf] %v1622
      %1675 = vst [vmem:[%s175 + $0x28] sm:$0xf] %v1623
      %1676 = vst [vmem:[%s175 + $0x2c] sm:$0xf] %v1624
      %1677 = vst [vmem:[%s175 + $0x30] sm:$0xf] %v1625
      %1678 = vst [vmem:[%s175 + $0x34] sm:$0xf] %v1626
      %1679 = vst [vmem:[%s175 + $0x38] sm:$0xf] %v1627
      %1680 = vst [vmem:[%s175 + $0x3c] sm:$0xf] %v1628
      %1681 = vst [vmem:[%s175 + $0x40] sm:$0xf] %v1629
      %1682 = vst [vmem:[%s175 + $0x44] sm:$0xf] %v1630
      %1683 = vst [vmem:[%s175 + $0x48] sm:$0xf] %v1631
      %1684 = vst [vmem:[%s175 + $0x4c] sm:$0xf] %v1632
      %1685 = vst [vmem:[%s175 + $0x50] sm:$0xf] %v1633
      %1686 = vst [vmem:[%s175 + $0x54] sm:$0xf] %v1634
      %1687 = vst [vmem:[%s175 + $0x58] sm:$0xf] %v1635
      %1688 = vst [vmem:[%s175 + $0x5c] sm:$0xf] %v1636
      %1689 = vst [vmem:[%s175 + $0x60] sm:$0xf] %v1637
      %1690 = vst [vmem:[%s175 + $0x64] sm:$0xf] %v1638
      %s1691 = smul.u32 26, %s14
      %p1692 = scmp.lt.s32.totalorder %s1691, 51
      %s1693 = scalar_select %p1692, %s1691, 51
      %s1694 = smul.addr %s1693, 4
      %s1695 = scalar_lea.vmem %s3, %s1694
      // Predicated region
      $region33: #{deep_generator_forward.6} parent=31 // pred_check
        %p1696 = pneg %p100
      $region34: #{deep_generator_forward.6} parent=31 // pred_check_branch
        %1698 = sbr.rel (%p1696) target = $region36
      $region35: #{deep_generator_forward.6} parent=31 // pred_region
        %s1699 = smul.u32 26, %s14
      $region36: #{deep_generator_forward.6} parent=31 // pred_fallthru
        _
    $region32: #{deep_generator_forward.6} parent=5 // pred_fallthru
      _
    %p1700 = scmp.le.s32.totalorder 2, %s9
    // Predicated region
    $region37: #{deep_generator_forward.6} parent=5 // pred_check
      %p1701 = pneg %p1700
    $region38: #{deep_generator_forward.6} parent=5 // pred_check_branch
      %1703 = sbr.rel (%p1701) target = $region40
    $region39: #{deep_generator_forward.6} parent=5 // pred_region
      %s1704 = ssub.s32 %s9, 2
      // Predicated region
      $region41: #{deep_generator_forward.6} parent=39 // pred_check
        %p1705 = pneg %p106
      $region42: #{deep_generator_forward.6} parent=39 // pred_check_branch
        %1707 = sbr.rel (%p1705) target = $region44
      $region43: #{deep_generator_forward.6} parent=39 // pred_region
        %s1708 = smul.u32 26, %s15
        %p1709 = scmp.lt.s32.totalorder %s1708, 51
        %s1710 = scalar_select %p1709, %s1708, 51
        %s1711 = smul.addr %s1710, 4
        %s1712 = scalar_lea.vmem %s3, %s1711
      $region44: #{deep_generator_forward.6} parent=39 // pred_fallthru
        _
    $region40: #{deep_generator_forward.6} parent=5 // pred_fallthru
      _
  $region6: #{deep_generator_forward.6} parent=0 // loop_footer
    %s13 = sadd.s32 1, %s9
  $region7: #{deep_generator_forward.6} parent=0 // loop_footer_branch
    %8 = sbr.rel target = $region3
  $region8: #{deep_generator_forward.6} parent=0 // loop_exit
    _

// kernel: deep_generator_forward.7
$region0: #{deep_generator_forward.7}
  #allocation0 [shape = 'u32[]', space=smem, size = 0x4, offset = 0x4, fixed_abs, tag = 'smem constant byte address 0x4 - core index']
  #allocation1 [shape = 'u32[144,128]{1,0:T(1,128)}', space=vmem, size = 0x12000, scoped, tag = 'internal scratch']
  %s0 = inlined_call_operand.vmem [shape: bf16[1600,144], index: 0, kind: input, shape index: {}]
  %s1 = inlined_call_operand.vmem [shape: bf16[144,128], index: 1, kind: input, shape index: {}]
  %s2 = inlined_call_operand.vmem [shape: f32[1,128], index: 2, kind: input, shape index: {}]
  %s3 = inlined_call_operand.vmem [shape: f32[1600,128], index: 3, kind: output, shape index: {}]
  %s4 = sld [smem:[#allocation0]]
  $region45: #{deep_generator_forward.7} parent=0
    _
  %s6 = ssub.s32 1, %s4
  %s7 = scalar_select 0, %s6, %s4
  loop: start=0, step=1, limit=6
  $region2: #{deep_generator_forward.7} parent=0 // loop_pre_header
    _
  $region3: #{deep_generator_forward.7} parent=0 // loop_header
    %s9 = sphi 0, %s13
    %p10 = scmp.ge.s32.totalorder %s9, 6
    %s19 = sphi 0, %s21
    %s22 = sphi 0, %s19
    %s23 = sphi 0, %s22
    %s39 = sphi 0, %s23
    %s43 = sphi 0, %s43
    %s45 = sphi 0, %s43
    %s46 = sphi 0, %s45
    %s60 = sphi 0, %s46
    %s64 = sphi 0, %s64
    %s66 = sphi 0, %s64
    %s67 = sphi 0, %s66
    %s81 = sphi 0, %s67
    %s87 = sphi 0, %s89
    %s90 = sphi 0, %s87
    %s91 = sphi 0, %s90
    %s107 = sphi 0, %s91
  $region4: #{deep_generator_forward.7} parent=0 // loop_header_branch
    %12 = sbr.rel (%p10) target = $region8
  $region5: #{deep_generator_forward.7} parent=0 // loop_body
    %s14 = ssub.s32 %s9, 1
    %s15 = ssub.s32 %s9, 2
    %s16 = sadd.s32 %s9, 1
    %s17 = ssub.s32 %s9, %s16
    %p18 = scmp.eq.s32.totalorder %s17, 0
    %s20 = sadd.s32 %s19, 1
    %s21 = scalar_select %p18, %s19, %s20
    %p24 = pneg %p18
    %p25 = scmp.eq.s32.totalorder %s9, 3
    %p26 = por %p24, %p25
    %p27 = scmp.ne.s32.totalorder %s19, %s22
    %p28 = scmp.eq.s32.totalorder %s9, 0
    %p29 = por %p27, %p28
    %p30 = scmp.ne.s32.totalorder %s19, %s22
    %p31 = scmp.eq.s32.totalorder %s14, 3
    %p32 = por %p30, %p31
    %p33 = scmp.ne.s32.totalorder %s22, %s23
    %p34 = scmp.eq.s32.totalorder %s14, 0
    %p35 = por %p33, %p34
    %p36 = scmp.ne.s32.totalorder %s22, %s23
    %p37 = scmp.eq.s32.totalorder %s15, 3
    %p38 = por %p36, %p37
    %p40 = scmp.ne.s32.totalorder %s23, %s39
    %p41 = scmp.eq.s32.totalorder %s15, 0
    %p42 = por %p40, %p41
    %s44 = sadd.s32 %s43, 1
    %p47 = scmp.eq.s32.totalorder %s9, 3
    %p48 = scmp.ne.s32.totalorder %s43, %s45
    %p49 = scmp.eq.s32.totalorder %s9, 0
    %p50 = por %p48, %p49
    %p51 = scmp.ne.s32.totalorder %s43, %s45
    %p52 = scmp.eq.s32.totalorder %s14, 3
    %p53 = por %p51, %p52
    %p54 = scmp.ne.s32.totalorder %s45, %s46
    %p55 = scmp.eq.s32.totalorder %s14, 0
    %p56 = por %p54, %p55
    %p57 = scmp.ne.s32.totalorder %s45, %s46
    %p58 = scmp.eq.s32.totalorder %s15, 3
    %p59 = por %p57, %p58
    %p61 = scmp.ne.s32.totalorder %s46, %s60
    %p62 = scmp.eq.s32.totalorder %s15, 0
    %p63 = por %p61, %p62
    %s65 = sadd.s32 %s64, 1
    %p68 = scmp.eq.s32.totalorder %s9, 3
    %p69 = scmp.ne.s32.totalorder %s64, %s66
    %p70 = scmp.eq.s32.totalorder %s9, 0
    %p71 = por %p69, %p70
    %p72 = scmp.ne.s32.totalorder %s64, %s66
    %p73 = scmp.eq.s32.totalorder %s14, 3
    %p74 = por %p72, %p73
    %p75 = scmp.ne.s32.totalorder %s66, %s67
    %p76 = scmp.eq.s32.totalorder %s14, 0
    %p77 = por %p75, %p76
    %p78 = scmp.ne.s32.totalorder %s66, %s67
    %p79 = scmp.eq.s32.totalorder %s15, 3
    %p80 = por %p78, %p79
    %p82 = scmp.ne.s32.totalorder %s67, %s81
    %p83 = scmp.eq.s32.totalorder %s15, 0
    %p84 = por %p82, %p83
    %s85 = ssub.s32 %s9, %s16
    %p86 = scmp.eq.s32.totalorder %s85, 0
    %s88 = sadd.s32 %s87, 1
    %s89 = scalar_select %p86, %s87, %s88
    %p92 = pneg %p86
    %p93 = scmp.eq.s32.totalorder %s9, 3
    %p94 = por %p92, %p93
    %p95 = scmp.ne.s32.totalorder %s87, %s90
    %p96 = scmp.eq.s32.totalorder %s9, 0
    %p97 = por %p95, %p96
    %p98 = scmp.ne.s32.totalorder %s87, %s90
    %p99 = scmp.eq.s32.totalorder %s14, 3
    %p100 = por %p98, %p99
    %p101 = scmp.ne.s32.totalorder %s90, %s91
    %p102 = scmp.eq.s32.totalorder %s14, 0
    %p103 = por %p101, %p102
    %p104 = scmp.ne.s32.totalorder %s90, %s91
    %p105 = scmp.eq.s32.totalorder %s15, 3
    %p106 = por %p104, %p105
    %p108 = scmp.ne.s32.totalorder %s91, %s107
    %p109 = scmp.eq.s32.totalorder %s15, 0
    %p110 = por %p108, %p109
    %p111 = scmp.le.s32.totalorder 1, %s9
    %p112 = scmp.lt.s32.totalorder %s9, 5
    %p113 = pnand %p111, %p112
    %p114 = pneg %p113
    // Predicated region
    $region9: #{deep_generator_forward.7} parent=5 // pred_check
      _
    $region10: #{deep_generator_forward.7} parent=5 // pred_check_branch
      %116 = sbr.rel (%p113) target = $region12
    $region11: #{deep_generator_forward.7} parent=5 // pred_region
      %s117 = ssub.s32 %s9, 1
      // Predicated region
      $region13: #{deep_generator_forward.7} parent=11 // pred_check
        %p118 = pneg %p56
      $region14: #{deep_generator_forward.7} parent=11 // pred_check_branch
        %120 = sbr.rel (%p118) target = $region16
      $region15: #{deep_generator_forward.7} parent=11 // pred_region
        _
      $region16: #{deep_generator_forward.7} parent=11 // pred_fallthru
        _
      // Predicated region
      $region17: #{deep_generator_forward.7} parent=11 // pred_check
        %p121 = pneg %p77
      $region18: #{deep_generator_forward.7} parent=11 // pred_check_branch
        %123 = sbr.rel (%p121) target = $region20
      $region19: #{deep_generator_forward.7} parent=11 // pred_region
        _
      $region20: #{deep_generator_forward.7} parent=11 // pred_fallthru
        _
    $region12: #{deep_generator_forward.7} parent=5 // pred_fallthru
      _
    %p124 = scmp.lt.s32.totalorder %s9, 4
    // Predicated region
    $region21: #{deep_generator_forward.7} parent=5 // pred_check
      %p125 = pneg %p124
    $region22: #{deep_generator_forward.7} parent=5 // pred_check_branch
      %127 = sbr.rel (%p125) target = $region24
    $region23: #{deep_generator_forward.7} parent=5 // pred_region
      // Predicated region
      $region25: #{deep_generator_forward.7} parent=23 // pred_check
        %p128 = pneg %p29
      $region26: #{deep_generator_forward.7} parent=23 // pred_check_branch
        %130 = sbr.rel (%p128) target = $region28
      $region27: #{deep_generator_forward.7} parent=23 // pred_region
        %s131 = smul.u32 50, %s9
        %p132 = scmp.lt.s32.totalorder %s131, 199
        %s133 = scalar_select %p132, %s131, 199
        %s134 = smul.addr %s133, 2
        %s135 = smul.addr %s134, 4
        %s136 = scalar_lea.vmem %s0, %s135
        %s137 = smul.u32 50, %s9
      $region28: #{deep_generator_forward.7} parent=23 // pred_fallthru
        _
    $region24: #{deep_generator_forward.7} parent=5 // pred_fallthru
      _
    %p138 = scmp.le.s32.totalorder 1, %s9
    %p139 = scmp.lt.s32.totalorder %s9, 5
    %p140 = pnand %p138, %p139
    %p141 = pneg %p140
    // Predicated region
    $region29: #{deep_generator_forward.7} parent=5 // pred_check
      _
    $region30: #{deep_generator_forward.7} parent=5 // pred_check_branch
      %143 = sbr.rel (%p140) target = $region32
    $region31: #{deep_generator_forward.7} parent=5 // pred_region
      %s144 = ssub.s32 %s9, 1
      %s145 = smul.u32 50, %s14
      %p146 = scmp.lt.s32.totalorder %s145, 199
      %s147 = scalar_select %p146, %s145, 199
      %s148 = smul.addr %s147, 2
      %s149 = smul.addr %s148, 4
      %s150 = scalar_lea.vmem %s0, %s149
      %p151 = pneg %p35
      %p152 = pneg %p32
      %p153 = pneg %p56
      %p154 = pneg %p53
      %p155 = pneg %p77
      %p156 = pneg %p74
      %p157 = pneg %p103
      %p158 = pneg %p100
      %s159 = smul.u32 50, %s14
      %p160 = scmp.lt.s32.totalorder %s159, 199
      %s161 = scalar_select %p160, %s159, 199
      %s162 = smul.addr %s161, 8
      %s163 = scalar_lea.vmem %s3, %s162
      %s164 = smul.u32 50, %s14
      %p165 = scmp.lt.s32.totalorder %s164, 199
      %s166 = scalar_select %p165, %s164, 199
      %s167 = smul.addr %s166, 2
      %s168 = smul.addr %s167, 4
      %s169 = scalar_lea.vmem %s0, %s168
      %s170 = smul.u32 50, %s14
      %s171 = smul.u32 50, %s14
      %p172 = scmp.lt.s32.totalorder %s171, 199
      %s173 = scalar_select %p172, %s171, 199
      %s174 = smul.addr %s173, 8
      %s175 = scalar_lea.vmem %s3, %s174
      %s176 = smul.u32 50, %s14
      %v178 = vld [vmem:[%s169] sm:$0xff]
      %v179 = vld [vmem:[%s169 + $0x8] sm:$0xff]
      %v180 = vld [vmem:[%s169 + $0x10] sm:$0xff]
      %v181 = vld [vmem:[%s169 + $0x18] sm:$0xff]
      %v182 = vld [vmem:[%s169 + $0x20] sm:$0xff]
      %v183 = vld [vmem:[%s169 + $0x28] sm:$0xff]
      %v184 = vld [vmem:[%s169 + $0x30] sm:$0xff]
      %v185 = vld [vmem:[%s169 + $0x38] sm:$0xff]
      %v186 = vld [vmem:[%s169 + $0x40] sm:$0xff]
      %v187 = vld [vmem:[%s169 + $0x48] sm:$0xff]
      %v188 = vld [vmem:[%s169 + $0x50] sm:$0xff]
      %v189 = vld [vmem:[%s169 + $0x58] sm:$0xff]
      %v190 = vld [vmem:[%s169 + $0x60] sm:$0xff]
      %v191 = vld [vmem:[%s169 + $0x68] sm:$0xff]
      %v192 = vld [vmem:[%s169 + $0x70] sm:$0xff]
      %v193 = vld [vmem:[%s169 + $0x78] sm:$0xff]
      %v194 = vld [vmem:[%s169 + $0x80] sm:$0xff]
      %v195 = vld [vmem:[%s169 + $0x88] sm:$0xff]
      %v196 = vld [vmem:[%s169 + $0x90] sm:$0xff]
      %v197 = vld [vmem:[%s169 + $0x98] sm:$0xff]
      %v198 = vld [vmem:[%s169 + $0xa0] sm:$0xff]
      %v199 = vld [vmem:[%s169 + $0xa8] sm:$0xff]
      %v200 = vld [vmem:[%s169 + $0xb0] sm:$0xff]
      %v201 = vld [vmem:[%s169 + $0xb8] sm:$0xff]
      %v202 = vld [vmem:[%s169 + $0xc0] sm:$0xff]
      %v203 = vld [vmem:[%s169 + $0xc8] sm:$0xff]
      %v204 = vld [vmem:[%s169 + $0xd0] sm:$0xff]
      %v205 = vld [vmem:[%s169 + $0xd8] sm:$0xff]
      %v206 = vld [vmem:[%s169 + $0xe0] sm:$0xff]
      %v207 = vld [vmem:[%s169 + $0xe8] sm:$0xff]
      %v208 = vld [vmem:[%s169 + $0xf0] sm:$0xff]
      %v209 = vld [vmem:[%s169 + $0xf8] sm:$0xff]
      %v210 = vld [vmem:[%s169 + $0x100] sm:$0xff]
      %v211 = vld [vmem:[%s169 + $0x108] sm:$0xff]
      %v212 = vld [vmem:[%s169 + $0x110] sm:$0xff]
      %v213 = vld [vmem:[%s169 + $0x118] sm:$0xff]
      %v214 = vld [vmem:[%s169 + $0x120] sm:$0xff]
      %v215 = vld [vmem:[%s169 + $0x128] sm:$0xff]
      %v216 = vld [vmem:[%s169 + $0x130] sm:$0xff]
      %v217 = vld [vmem:[%s169 + $0x138] sm:$0xff]
      %v218 = vld [vmem:[%s169 + $0x140] sm:$0xff]
      %v219 = vld [vmem:[%s169 + $0x148] sm:$0xff]
      %v220 = vld [vmem:[%s169 + $0x150] sm:$0xff]
      %v221 = vld [vmem:[%s169 + $0x158] sm:$0xff]
      %v222 = vld [vmem:[%s169 + $0x160] sm:$0xff]
      %v223 = vld [vmem:[%s169 + $0x168] sm:$0xff]
      %v224 = vld [vmem:[%s169 + $0x170] sm:$0xff]
      %v225 = vld [vmem:[%s169 + $0x178] sm:$0xff]
      %v226 = vld [vmem:[%s169 + $0x180] sm:$0xff]
      %v227 = vld [vmem:[%s169 + $0x188] sm:$0xff]
      %v228 = vld [vmem:[%s1] sm:$0xf]
      %v229 = vld [vmem:[%s1 + $0x4] sm:$0xf]
      %v230 = vld [vmem:[%s1 + $0x8] sm:$0xf]
      %v231 = vld [vmem:[%s1 + $0xc] sm:$0xf]
      %v232 = vld [vmem:[%s1 + $0x10] sm:$0xf]
      %v233 = vld [vmem:[%s1 + $0x14] sm:$0xf]
      %v234 = vld [vmem:[%s1 + $0x18] sm:$0xf]
      %v235 = vld [vmem:[%s1 + $0x1c] sm:$0xf]
      %v236 = vld [vmem:[%s1 + $0x20] sm:$0xf]
      %v237 = vld [vmem:[%s1 + $0x24] sm:$0xf]
      %v238 = vld [vmem:[%s1 + $0x28] sm:$0xf]
      %v239 = vld [vmem:[%s1 + $0x2c] sm:$0xf]
      %v240 = vld [vmem:[%s1 + $0x30] sm:$0xf]
      %v241 = vld [vmem:[%s1 + $0x34] sm:$0xf]
      %v242 = vld [vmem:[%s1 + $0x38] sm:$0xf]
      %v243 = vld [vmem:[%s1 + $0x3c] sm:$0xf]
      %v244 = vld [vmem:[%s1 + $0x40] sm:$0xf]
      %v245 = vld [vmem:[%s1 + $0x44] sm:$0xf]
      %v246 = vld [vmem:[%s2] sm:$0x1]
      %v248 = vlaneseq
      %v249 = vshrl.u32 %v248, 7
      %v250 = vsub.s32 0, %v249
      %v251 = vrot.slane %v246, %v250
      %v303 = vunpack.c.l.b16 %v178
      %v304 = vunpack.c.h.b16 %v178
      %v305 = vunpack.c.l.b16 %v179
      %v306 = vunpack.c.h.b16 %v179
      %v307 = vunpack.c.l.b16 %v180
      %v308 = vunpack.c.h.b16 %v180
      %v309 = vunpack.c.l.b16 %v181
      %v310 = vunpack.c.h.b16 %v181
      %v311 = vunpack.c.l.b16 %v182
      %v312 = vunpack.c.h.b16 %v182
      %v313 = vunpack.c.l.b16 %v183
      %v314 = vunpack.c.h.b16 %v183
      %v315 = vunpack.c.l.b16 %v184
      %v316 = vunpack.c.h.b16 %v184
      %v317 = vunpack.c.l.b16 %v185
      %v318 = vunpack.c.h.b16 %v185
      %v319 = vunpack.c.l.b16 %v186
      %v320 = vunpack.c.h.b16 %v186
      %v321 = vunpack.c.l.b16 %v187
      %v322 = vunpack.c.h.b16 %v187
      %v323 = vunpack.c.l.b16 %v188
      %v324 = vunpack.c.h.b16 %v188
      %v325 = vunpack.c.l.b16 %v189
      %v326 = vunpack.c.h.b16 %v189
      %v327 = vunpack.c.l.b16 %v190
      %v328 = vunpack.c.h.b16 %v190
      %v329 = vunpack.c.l.b16 %v191
      %v330 = vunpack.c.h.b16 %v191
      %v331 = vunpack.c.l.b16 %v192
      %v332 = vunpack.c.h.b16 %v192
      %v333 = vunpack.c.l.b16 %v193
      %v334 = vunpack.c.h.b16 %v193
      %v335 = vunpack.c.l.b16 %v194
      %v336 = vunpack.c.h.b16 %v194
      %v337 = vunpack.c.l.b16 %v195
      %v338 = vunpack.c.h.b16 %v195
      %v339 = vunpack.c.l.b16 %v196
      %v340 = vunpack.c.h.b16 %v196
      %v341 = vunpack.c.l.b16 %v197
      %v342 = vunpack.c.h.b16 %v197
      %v343 = vunpack.c.l.b16 %v198
      %v344 = vunpack.c.h.b16 %v198
      %v345 = vunpack.c.l.b16 %v199
      %v346 = vunpack.c.h.b16 %v199
      %v347 = vunpack.c.l.b16 %v200
      %v348 = vunpack.c.h.b16 %v200
      %v349 = vunpack.c.l.b16 %v201
      %v350 = vunpack.c.h.b16 %v201
      %v351 = vunpack.c.l.b16 %v202
      %v352 = vunpack.c.h.b16 %v202
      %v353 = vunpack.c.l.b16 %v203
      %v354 = vunpack.c.h.b16 %v203
      %v355 = vunpack.c.l.b16 %v204
      %v356 = vunpack.c.h.b16 %v204
      %v357 = vunpack.c.l.b16 %v205
      %v358 = vunpack.c.h.b16 %v205
      %v359 = vunpack.c.l.b16 %v206
      %v360 = vunpack.c.h.b16 %v206
      %v361 = vunpack.c.l.b16 %v207
      %v362 = vunpack.c.h.b16 %v207
      %v363 = vunpack.c.l.b16 %v208
      %v364 = vunpack.c.h.b16 %v208
      %v365 = vunpack.c.l.b16 %v209
      %v366 = vunpack.c.h.b16 %v209
      %v367 = vunpack.c.l.b16 %v210
      %v368 = vunpack.c.h.b16 %v210
      %v369 = vunpack.c.l.b16 %v211
      %v370 = vunpack.c.h.b16 %v211
      %v371 = vunpack.c.l.b16 %v212
      %v372 = vunpack.c.h.b16 %v212
      %v373 = vunpack.c.l.b16 %v213
      %v374 = vunpack.c.h.b16 %v213
      %v375 = vunpack.c.l.b16 %v214
      %v376 = vunpack.c.h.b16 %v214
      %v377 = vunpack.c.l.b16 %v215
      %v378 = vunpack.c.h.b16 %v215
      %v379 = vunpack.c.l.b16 %v216
      %v380 = vunpack.c.h.b16 %v216
      %v381 = vunpack.c.l.b16 %v217
      %v382 = vunpack.c.h.b16 %v217
      %v383 = vunpack.c.l.b16 %v218
      %v384 = vunpack.c.h.b16 %v218
      %v385 = vunpack.c.l.b16 %v219
      %v386 = vunpack.c.h.b16 %v219
      %v387 = vunpack.c.l.b16 %v220
      %v388 = vunpack.c.h.b16 %v220
      %v389 = vunpack.c.l.b16 %v221
      %v390 = vunpack.c.h.b16 %v221
      %v391 = vunpack.c.l.b16 %v222
      %v392 = vunpack.c.h.b16 %v222
      %v393 = vunpack.c.l.b16 %v223
      %v394 = vunpack.c.h.b16 %v223
      %v395 = vunpack.c.l.b16 %v224
      %v396 = vunpack.c.h.b16 %v224
      %v397 = vunpack.c.l.b16 %v225
      %v398 = vunpack.c.h.b16 %v225
      %v399 = vunpack.c.l.b16 %v226
      %v400 = vunpack.c.h.b16 %v226
      %v401 = vunpack.c.l.b16 %v227
      %v402 = vunpack.c.h.b16 %v227
      %v403 = vpack.c.b16 %v305, %v303
      %v404 = vpack.c.b16 %v306, %v304
      %v405 = vpack.c.b16 %v309, %v307
      %v406 = vpack.c.b16 %v310, %v308
      %v407 = vpack.c.b16 %v313, %v311
      %v408 = vpack.c.b16 %v314, %v312
      %v409 = vpack.c.b16 %v317, %v315
      %v410 = vpack.c.b16 %v318, %v316
      %v411 = vpack.c.b16 %v321, %v319
      %v412 = vpack.c.b16 %v322, %v320
      %v413 = vpack.c.b16 %v325, %v323
      %v414 = vpack.c.b16 %v326, %v324
      %v415 = vpack.c.b16 %v329, %v327
      %v416 = vpack.c.b16 %v330, %v328
      %v417 = vpack.c.b16 %v333, %v331
      %v418 = vpack.c.b16 %v334, %v332
      %v419 = vpack.c.b16 %v337, %v335
      %v420 = vpack.c.b16 %v338, %v336
      %v421 = vpack.c.b16 %v341, %v339
      %v422 = vpack.c.b16 %v342, %v340
      %v423 = vpack.c.b16 %v345, %v343
      %v424 = vpack.c.b16 %v346, %v344
      %v425 = vpack.c.b16 %v349, %v347
      %v426 = vpack.c.b16 %v350, %v348
      %v427 = vpack.c.b16 %v353, %v351
      %v428 = vpack.c.b16 %v354, %v352
      %v429 = vpack.c.b16 %v357, %v355
      %v430 = vpack.c.b16 %v358, %v356
      %v431 = vpack.c.b16 %v361, %v359
      %v432 = vpack.c.b16 %v362, %v360
      %v433 = vpack.c.b16 %v365, %v363
      %v434 = vpack.c.b16 %v366, %v364
      %v435 = vpack.c.b16 %v369, %v367
      %v436 = vpack.c.b16 %v370, %v368
      %v437 = vpack.c.b16 %v373, %v371
      %v438 = vpack.c.b16 %v374, %v372
      %v439 = vpack.c.b16 %v377, %v375
      %v440 = vpack.c.b16 %v378, %v376
      %v441 = vpack.c.b16 %v381, %v379
      %v442 = vpack.c.b16 %v382, %v380
      %v443 = vpack.c.b16 %v385, %v383
      %v444 = vpack.c.b16 %v386, %v384
      %v445 = vpack.c.b16 %v389, %v387
      %v446 = vpack.c.b16 %v390, %v388
      %v447 = vpack.c.b16 %v393, %v391
      %v448 = vpack.c.b16 %v394, %v392
      %v449 = vpack.c.b16 %v397, %v395
      %v450 = vpack.c.b16 %v398, %v396
      %v451 = vpack.c.b16 %v401, %v399
      %v452 = vpack.c.b16 %v402, %v400
      %v496 = vunpack.c.l.b16 %v228
      %v497 = vunpack.c.l.b16 %v229
      %v498 = vunpack.c.l.b16 %v230
      %v499 = vunpack.c.l.b16 %v231
      %v500 = vunpack.c.l.b16 %v232
      %v501 = vunpack.c.l.b16 %v233
      %v502 = vunpack.c.l.b16 %v234
      %v503 = vunpack.c.l.b16 %v235
      %v504 = vunpack.c.l.b16 %v236
      %v505 = vunpack.c.l.b16 %v237
      %v506 = vunpack.c.l.b16 %v238
      %v507 = vunpack.c.l.b16 %v239
      %v508 = vunpack.c.l.b16 %v240
      %v509 = vunpack.c.l.b16 %v241
      %v510 = vunpack.c.l.b16 %v242
      %v511 = vunpack.c.l.b16 %v243
      %v512 = vunpack.c.l.b16 %v244
      %v513 = vunpack.c.l.b16 %v245
      %v514 = vpack.c.b16 %v497, %v496
      %v515 = vpack.c.b16 %v499, %v498
      %v516 = vpack.c.b16 %v501, %v500
      %v517 = vpack.c.b16 %v503, %v502
      %v518 = vpack.c.b16 %v505, %v504
      %v519 = vpack.c.b16 %v507, %v506
      %v520 = vpack.c.b16 %v509, %v508
      %v521 = vpack.c.b16 %v511, %v510
      %v522 = vpack.c.b16 %v513, %v512
      %vm532 = vcmask 130048
      %v534 = vsel %vm532, %v404, 0
      %v537 = vsel %vm532, %v406, 0
      %v540 = vsel %vm532, %v408, 0
      %v543 = vsel %vm532, %v410, 0
      %v546 = vsel %vm532, %v412, 0
      %v549 = vsel %vm532, %v414, 0
      %v552 = vsel %vm532, %v416, 0
      %v555 = vsel %vm532, %v418, 0
      %v558 = vsel %vm532, %v420, 0
      %v561 = vsel %vm532, %v422, 0
      %v564 = vsel %vm532, %v424, 0
      %v567 = vsel %vm532, %v426, 0
      %v570 = vsel %vm532, %v428, 0
      %v573 = vsel %vm532, %v430, 0
      %v576 = vsel %vm532, %v432, 0
      %v579 = vsel %vm532, %v434, 0
      %v582 = vsel %vm532, %v436, 0
      %v585 = vsel %vm532, %v438, 0
      %v588 = vsel %vm532, %v440, 0
      %v591 = vsel %vm532, %v442, 0
      %v594 = vsel %vm532, %v444, 0
      %v597 = vsel %vm532, %v446, 0
      %v600 = vsel %vm532, %v448, 0
      %v603 = vsel %vm532, %v450, 0
      %v606 = vsel %vm532, %v452, 0
      %608 = vmatprep.subr.bf16.mxu0 0
      %609 = vmatpush1.bf16.msra.mxu0 %v514
      %610 = vmatprep.subr.bf16.mxu0 0
      %611 = vmatpush1.bf16.msra.mxu0 %v515
      %612 = vmatprep.subr.bf16.mxu0 0
      %613 = vmatpush1.bf16.msra.mxu0 %v516
      %614 = vmatprep.subr.bf16.mxu0 0
      %615 = vmatpush1.bf16.msra.mxu0 %v517
      %616 = vmatprep.subr.bf16.mxu0 0
      %617 = vmatpush1.bf16.msra.mxu0 %v518
      %618 = vmatprep.subr.bf16.mxu0 0
      %619 = vmatpush1.bf16.msra.mxu0 %v519
      %620 = vmatprep.subr.bf16.mxu0 0
      %621 = vmatpush1.bf16.msra.mxu0 %v520
      %622 = vmatprep.subr.bf16.mxu0 0
      %623 = vmatpush1.bf16.msra.mxu0 %v521
      %624 = vmatprep.subr.bf16.mxu0 0
      %625 = vmatpush1.bf16.msra.mxu0 %v522
      %626 = vmatprep.subr.bf16.mxu0 0
      %627 = vmatpush1.bf16.msra.mxu0 0
      %628 = vmatprep.subr.bf16.mxu0 0
      %629 = vmatpush1.bf16.msra.mxu0 0
      %630 = vmatprep.subr.bf16.mxu0 0
      %631 = vmatpush1.bf16.msra.mxu0 0
      %632 = vmatprep.subr.bf16.mxu0 0
      %633 = vmatpush1.bf16.msra.mxu0 0
      %634 = vmatprep.subr.bf16.mxu0 0
      %635 = vmatpush1.bf16.msra.mxu0 0
      %636 = vmatprep.subr.bf16.mxu0 0
      %637 = vmatpush1.bf16.msra.mxu0 0
      %638 = vmatprep.subr.bf16.mxu0 0
      %639 = vmatpush1.bf16.msra.mxu0 0
      %640 = vmatprep.mubr.bf16.mxu0 %v534
      %641 = vmatmul.mubr.bf16.gmra.mrb[0].mxu0 %v403
      %v642 = vpop.f32.mrb[0].mxu0
      %v643 = vadd.f32 %v251, %v642
      %v644 = vpop.f32.mrb[0].mxu0
      %v645 = vpop.f32.mrb[0].mxu0
      %v646 = vadd.f32 %v251, %v645
      %v647 = vpop.f32.mrb[0].mxu0
      %648 = vmatprep.mubr.bf16.mxu0 %v537
      %649 = vmatmul.mubr.bf16.gmra.mrb[0].mxu0 %v405
      %v650 = vpop.f32.mrb[0].mxu0
      %v651 = vadd.f32 %v251, %v650
      %v652 = vpop.f32.mrb[0].mxu0
      %v653 = vpop.f32.mrb[0].mxu0
      %v654 = vadd.f32 %v251, %v653
      %v655 = vpop.f32.mrb[0].mxu0
      %656 = vmatprep.mubr.bf16.mxu0 %v540
      %657 = vmatmul.mubr.bf16.gmra.mrb[0].mxu0 %v407
      %v658 = vpop.f32.mrb[0].mxu0
      %v659 = vadd.f32 %v251, %v658
      %v660 = vpop.f32.mrb[0].mxu0
      %v661 = vpop.f32.mrb[0].mxu0
      %v662 = vadd.f32 %v251, %v661
      %v663 = vpop.f32.mrb[0].mxu0
      %664 = vmatprep.mubr.bf16.mxu0 %v543
      %665 = vmatmul.mubr.bf16.gmra.mrb[0].mxu0 %v409
      %v666 = vpop.f32.mrb[0].mxu0
      %v667 = vadd.f32 %v251, %v666
      %v668 = vpop.f32.mrb[0].mxu0
      %v669 = vpop.f32.mrb[0].mxu0
      %v670 = vadd.f32 %v251, %v669
      %v671 = vpop.f32.mrb[0].mxu0
      %672 = vmatprep.mubr.bf16.mxu0 %v546
      %673 = vmatmul.mubr.bf16.gmra.mrb[0].mxu0 %v411
      %v674 = vpop.f32.mrb[0].mxu0
      %v675 = vadd.f32 %v251, %v674
      %v676 = vpop.f32.mrb[0].mxu0
      %v677 = vpop.f32.mrb[0].mxu0
      %v678 = vadd.f32 %v251, %v677
      %v679 = vpop.f32.mrb[0].mxu0
      %680 = vmatprep.mubr.bf16.mxu0 %v549
      %681 = vmatmul.mubr.bf16.gmra.mrb[0].mxu0 %v413
      %v682 = vpop.f32.mrb[0].mxu0
      %v683 = vadd.f32 %v251, %v682
      %v684 = vpop.f32.mrb[0].mxu0
      %v685 = vpop.f32.mrb[0].mxu0
      %v686 = vadd.f32 %v251, %v685
      %v687 = vpop.f32.mrb[0].mxu0
      %688 = vmatprep.mubr.bf16.mxu0 %v552
      %689 = vmatmul.mubr.bf16.gmra.mrb[0].mxu0 %v415
      %v690 = vpop.f32.mrb[0].mxu0
      %v691 = vadd.f32 %v251, %v690
      %v692 = vpop.f32.mrb[0].mxu0
      %v693 = vpop.f32.mrb[0].mxu0
      %v694 = vadd.f32 %v251, %v693
      %v695 = vpop.f32.mrb[0].mxu0
      %696 = vmatprep.mubr.bf16.mxu0 %v555
      %697 = vmatmul.mubr.bf16.gmra.mrb[0].mxu0 %v417
      %v698 = vpop.f32.mrb[0].mxu0
      %v699 = vadd.f32 %v251, %v698
      %v700 = vpop.f32.mrb[0].mxu0
      %v701 = vpop.f32.mrb[0].mxu0
      %v702 = vadd.f32 %v251, %v701
      %v703 = vpop.f32.mrb[0].mxu0
      %704 = vmatprep.mubr.bf16.mxu0 %v558
      %705 = vmatmul.mubr.bf16.gmra.mrb[0].mxu0 %v419
      %v706 = vpop.f32.mrb[0].mxu0
      %v707 = vadd.f32 %v251, %v706
      %v708 = vpop.f32.mrb[0].mxu0
      %v709 = vpop.f32.mrb[0].mxu0
      %v710 = vadd.f32 %v251, %v709
      %v711 = vpop.f32.mrb[0].mxu0
      %712 = vmatprep.mubr.bf16.mxu0 %v561
      %713 = vmatmul.mubr.bf16.gmra.mrb[0].mxu0 %v421
      %v714 = vpop.f32.mrb[0].mxu0
      %v715 = vadd.f32 %v251, %v714
      %v716 = vpop.f32.mrb[0].mxu0
      %v717 = vpop.f32.mrb[0].mxu0
      %v718 = vadd.f32 %v251, %v717
      %v719 = vpop.f32.mrb[0].mxu0
      %720 = vmatprep.mubr.bf16.mxu0 %v564
      %721 = vmatmul.mubr.bf16.gmra.mrb[0].mxu0 %v423
      %v722 = vpop.f32.mrb[0].mxu0
      %v723 = vadd.f32 %v251, %v722
      %v724 = vpop.f32.mrb[0].mxu0
      %v725 = vpop.f32.mrb[0].mxu0
      %v726 = vadd.f32 %v251, %v725
      %v727 = vpop.f32.mrb[0].mxu0
      %728 = vmatprep.mubr.bf16.mxu0 %v567
      %729 = vmatmul.mubr.bf16.gmra.mrb[0].mxu0 %v425
      %v730 = vpop.f32.mrb[0].mxu0
      %v731 = vadd.f32 %v251, %v730
      %v732 = vpop.f32.mrb[0].mxu0
      %v733 = vpop.f32.mrb[0].mxu0
      %v734 = vadd.f32 %v251, %v733
      %v735 = vpop.f32.mrb[0].mxu0
      %736 = vmatprep.mubr.bf16.mxu0 %v570
      %737 = vmatmul.mubr.bf16.gmra.mrb[0].mxu0 %v427
      %v738 = vpop.f32.mrb[0].mxu0
      %v739 = vadd.f32 %v251, %v738
      %v740 = vpop.f32.mrb[0].mxu0
      %v741 = vpop.f32.mrb[0].mxu0
      %v742 = vadd.f32 %v251, %v741
      %v743 = vpop.f32.mrb[0].mxu0
      %744 = vmatprep.mubr.bf16.mxu0 %v573
      %745 = vmatmul.mubr.bf16.gmra.mrb[0].mxu0 %v429
      %v746 = vpop.f32.mrb[0].mxu0
      %v747 = vadd.f32 %v251, %v746
      %v748 = vpop.f32.mrb[0].mxu0
      %v749 = vpop.f32.mrb[0].mxu0
      %v750 = vadd.f32 %v251, %v749
      %v751 = vpop.f32.mrb[0].mxu0
      %752 = vmatprep.mubr.bf16.mxu0 %v576
      %753 = vmatmul.mubr.bf16.gmra.mrb[0].mxu0 %v431
      %v754 = vpop.f32.mrb[0].mxu0
      %v755 = vadd.f32 %v251, %v754
      %v756 = vpop.f32.mrb[0].mxu0
      %v757 = vpop.f32.mrb[0].mxu0
      %v758 = vadd.f32 %v251, %v757
      %v759 = vpop.f32.mrb[0].mxu0
      %760 = vmatprep.mubr.bf16.mxu0 %v579
      %761 = vmatmul.mubr.bf16.gmra.mrb[0].mxu0 %v433
      %v762 = vpop.f32.mrb[0].mxu0
      %v763 = vadd.f32 %v251, %v762
      %v764 = vpop.f32.mrb[0].mxu0
      %v765 = vpop.f32.mrb[0].mxu0
      %v766 = vadd.f32 %v251, %v765
      %v767 = vpop.f32.mrb[0].mxu0
      %768 = vmatprep.mubr.bf16.mxu0 %v582
      %769 = vmatmul.mubr.bf16.gmra.mrb[0].mxu0 %v435
      %v770 = vpop.f32.mrb[0].mxu0
      %v771 = vadd.f32 %v251, %v770
      %v772 = vpop.f32.mrb[0].mxu0
      %v773 = vpop.f32.mrb[0].mxu0
      %v774 = vadd.f32 %v251, %v773
      %v775 = vpop.f32.mrb[0].mxu0
      %776 = vmatprep.mubr.bf16.mxu0 %v585
      %777 = vmatmul.mubr.bf16.gmra.mrb[0].mxu0 %v437
      %v778 = vpop.f32.mrb[0].mxu0
      %v779 = vadd.f32 %v251, %v778
      %v780 = vpop.f32.mrb[0].mxu0
      %v781 = vpop.f32.mrb[0].mxu0
      %v782 = vadd.f32 %v251, %v781
      %v783 = vpop.f32.mrb[0].mxu0
      %784 = vmatprep.mubr.bf16.mxu0 %v588
      %785 = vmatmul.mubr.bf16.gmra.mrb[0].mxu0 %v439
      %v786 = vpop.f32.mrb[0].mxu0
      %v787 = vadd.f32 %v251, %v786
      %v788 = vpop.f32.mrb[0].mxu0
      %v789 = vpop.f32.mrb[0].mxu0
      %v790 = vadd.f32 %v251, %v789
      %v791 = vpop.f32.mrb[0].mxu0
      %792 = vmatprep.mubr.bf16.mxu0 %v591
      %793 = vmatmul.mubr.bf16.gmra.mrb[0].mxu0 %v441
      %v794 = vpop.f32.mrb[0].mxu0
      %v795 = vadd.f32 %v251, %v794
      %v796 = vpop.f32.mrb[0].mxu0
      %v797 = vpop.f32.mrb[0].mxu0
      %v798 = vadd.f32 %v251, %v797
      %v799 = vpop.f32.mrb[0].mxu0
      %800 = vmatprep.mubr.bf16.mxu0 %v594
      %801 = vmatmul.mubr.bf16.gmra.mrb[0].mxu0 %v443
      %v802 = vpop.f32.mrb[0].mxu0
      %v803 = vadd.f32 %v251, %v802
      %v804 = vpop.f32.mrb[0].mxu0
      %v805 = vpop.f32.mrb[0].mxu0
      %v806 = vadd.f32 %v251, %v805
      %v807 = vpop.f32.mrb[0].mxu0
      %808 = vmatprep.mubr.bf16.mxu0 %v597
      %809 = vmatmul.mubr.bf16.gmra.mrb[0].mxu0 %v445
      %v810 = vpop.f32.mrb[0].mxu0
      %v811 = vadd.f32 %v251, %v810
      %v812 = vpop.f32.mrb[0].mxu0
      %v813 = vpop.f32.mrb[0].mxu0
      %v814 = vadd.f32 %v251, %v813
      %v815 = vpop.f32.mrb[0].mxu0
      %816 = vmatprep.mubr.bf16.mxu0 %v600
      %817 = vmatmul.mubr.bf16.gmra.mrb[0].mxu0 %v447
      %v818 = vpop.f32.mrb[0].mxu0
      %v819 = vadd.f32 %v251, %v818
      %v820 = vpop.f32.mrb[0].mxu0
      %v821 = vpop.f32.mrb[0].mxu0
      %v822 = vadd.f32 %v251, %v821
      %v823 = vpop.f32.mrb[0].mxu0
      %824 = vmatprep.mubr.bf16.mxu0 %v603
      %825 = vmatmul.mubr.bf16.gmra.mrb[0].mxu0 %v449
      %v826 = vpop.f32.mrb[0].mxu0
      %v827 = vadd.f32 %v251, %v826
      %v828 = vpop.f32.mrb[0].mxu0
      %v829 = vpop.f32.mrb[0].mxu0
      %v830 = vadd.f32 %v251, %v829
      %v831 = vpop.f32.mrb[0].mxu0
      %832 = vmatprep.mubr.bf16.mxu0 %v606
      %833 = vmatmul.mubr.bf16.gmra.mrb[0].mxu0 %v451
      %v834 = vpop.f32.mrb[0].mxu0
      %v835 = vadd.f32 %v251, %v834
      %v836 = vpop.f32.mrb[0].mxu0
      %v837 = vpop.f32.mrb[0].mxu0
      %v838 = vadd.f32 %v251, %v837
      %v839 = vpop.f32.mrb[0].mxu0
      %840 = vdwg.mxu0
      %v841 = vxor.u32 %v643, 2147483648
      %v842 = vxor.u32 %v646, 2147483648
      %v843 = vxor.u32 %v651, 2147483648
      %v844 = vxor.u32 %v654, 2147483648
      %v845 = vxor.u32 %v659, 2147483648
      %v846 = vxor.u32 %v662, 2147483648
      %v847 = vxor.u32 %v667, 2147483648
      %v848 = vxor.u32 %v670, 2147483648
      %v849 = vxor.u32 %v675, 2147483648
      %v850 = vxor.u32 %v678, 2147483648
      %v851 = vxor.u32 %v683, 2147483648
      %v852 = vxor.u32 %v686, 2147483648
      %v853 = vxor.u32 %v691, 2147483648
      %v854 = vxor.u32 %v694, 2147483648
      %v855 = vxor.u32 %v699, 2147483648
      %v856 = vxor.u32 %v702, 2147483648
      %v857 = vxor.u32 %v707, 2147483648
      %v858 = vxor.u32 %v710, 2147483648
      %v859 = vxor.u32 %v715, 2147483648
      %v860 = vxor.u32 %v718, 2147483648
      %v861 = vxor.u32 %v723, 2147483648
      %v862 = vxor.u32 %v726, 2147483648
      %v863 = vxor.u32 %v731, 2147483648
      %v864 = vxor.u32 %v734, 2147483648
      %v865 = vxor.u32 %v739, 2147483648
      %v866 = vxor.u32 %v742, 2147483648
      %v867 = vxor.u32 %v747, 2147483648
      %v868 = vxor.u32 %v750, 2147483648
      %v869 = vxor.u32 %v755, 2147483648
      %v870 = vxor.u32 %v758, 2147483648
      %v871 = vxor.u32 %v763, 2147483648
      %v872 = vxor.u32 %v766, 2147483648
      %v873 = vxor.u32 %v771, 2147483648
      %v874 = vxor.u32 %v774, 2147483648
      %v875 = vxor.u32 %v779, 2147483648
      %v876 = vxor.u32 %v782, 2147483648
      %v877 = vxor.u32 %v787, 2147483648
      %v878 = vxor.u32 %v790, 2147483648
      %v879 = vxor.u32 %v795, 2147483648
      %v880 = vxor.u32 %v798, 2147483648
      %v881 = vxor.u32 %v803, 2147483648
      %v882 = vxor.u32 %v806, 2147483648
      %v883 = vxor.u32 %v811, 2147483648
      %v884 = vxor.u32 %v814, 2147483648
      %v885 = vxor.u32 %v819, 2147483648
      %v886 = vxor.u32 %v822, 2147483648
      %v887 = vxor.u32 %v827, 2147483648
      %v888 = vxor.u32 %v830, 2147483648
      %v889 = vxor.u32 %v835, 2147483648
      %v890 = vxor.u32 %v838, 2147483648
      %v891 = vmul.f32 %v841, 1.442695
      %v892 = vpow.pop %v891
      %v893 = vmul.f32 %v842, 1.442695
      %v894 = vpow.pop %v893
      %v895 = vmul.f32 %v843, 1.442695
      %v896 = vpow.pop %v895
      %v897 = vmul.f32 %v844, 1.442695
      %v898 = vpow.pop %v897
      %v899 = vmul.f32 %v845, 1.442695
      %v900 = vpow.pop %v899
      %v901 = vmul.f32 %v846, 1.442695
      %v902 = vpow.pop %v901
      %v903 = vmul.f32 %v847, 1.442695
      %v904 = vpow.pop %v903
      %v905 = vmul.f32 %v848, 1.442695
      %v906 = vpow.pop %v905
      %v907 = vmul.f32 %v849, 1.442695
      %v908 = vpow.pop %v907
      %v909 = vmul.f32 %v850, 1.442695
      %v910 = vpow.pop %v909
      %v911 = vmul.f32 %v851, 1.442695
      %v912 = vpow.pop %v911
      %v913 = vmul.f32 %v852, 1.442695
      %v914 = vpow.pop %v913
      %v915 = vmul.f32 %v853, 1.442695
      %v916 = vpow.pop %v915
      %v917 = vmul.f32 %v854, 1.442695
      %v918 = vpow.pop %v917
      %v919 = vmul.f32 %v855, 1.442695
      %v920 = vpow.pop %v919
      %v921 = vmul.f32 %v856, 1.442695
      %v922 = vpow.pop %v921
      %v923 = vmul.f32 %v857, 1.442695
      %v924 = vpow.pop %v923
      %v925 = vmul.f32 %v858, 1.442695
      %v926 = vpow.pop %v925
      %v927 = vmul.f32 %v859, 1.442695
      %v928 = vpow.pop %v927
      %v929 = vmul.f32 %v860, 1.442695
      %v930 = vpow.pop %v929
      %v931 = vmul.f32 %v861, 1.442695
      %v932 = vpow.pop %v931
      %v933 = vmul.f32 %v862, 1.442695
      %v934 = vpow.pop %v933
      %v935 = vmul.f32 %v863, 1.442695
      %v936 = vpow.pop %v935
      %v937 = vmul.f32 %v864, 1.442695
      %v938 = vpow.pop %v937
      %v939 = vmul.f32 %v865, 1.442695
      %v940 = vpow.pop %v939
      %v941 = vmul.f32 %v866, 1.442695
      %v942 = vpow.pop %v941
      %v943 = vmul.f32 %v867, 1.442695
      %v944 = vpow.pop %v943
      %v945 = vmul.f32 %v868, 1.442695
      %v946 = vpow.pop %v945
      %v947 = vmul.f32 %v869, 1.442695
      %v948 = vpow.pop %v947
      %v949 = vmul.f32 %v870, 1.442695
      %v950 = vpow.pop %v949
      %v951 = vmul.f32 %v871, 1.442695
      %v952 = vpow.pop %v951
      %v953 = vmul.f32 %v872, 1.442695
      %v954 = vpow.pop %v953
      %v955 = vmul.f32 %v873, 1.442695
      %v956 = vpow.pop %v955
      %v957 = vmul.f32 %v874, 1.442695
      %v958 = vpow.pop %v957
      %v959 = vmul.f32 %v875, 1.442695
      %v960 = vpow.pop %v959
      %v961 = vmul.f32 %v876, 1.442695
      %v962 = vpow.pop %v961
      %v963 = vmul.f32 %v877, 1.442695
      %v964 = vpow.pop %v963
      %v965 = vmul.f32 %v878, 1.442695
      %v966 = vpow.pop %v965
      %v967 = vmul.f32 %v879, 1.442695
      %v968 = vpow.pop %v967
      %v969 = vmul.f32 %v880, 1.442695
      %v970 = vpow.pop %v969
      %v971 = vmul.f32 %v881, 1.442695
      %v972 = vpow.pop %v971
      %v973 = vmul.f32 %v882, 1.442695
      %v974 = vpow.pop %v973
      %v975 = vmul.f32 %v883, 1.442695
      %v976 = vpow.pop %v975
      %v977 = vmul.f32 %v884, 1.442695
      %v978 = vpow.pop %v977
      %v979 = vmul.f32 %v885, 1.442695
      %v980 = vpow.pop %v979
      %v981 = vmul.f32 %v886, 1.442695
      %v982 = vpow.pop %v981
      %v983 = vmul.f32 %v887, 1.442695
      %v984 = vpow.pop %v983
      %v985 = vmul.f32 %v888, 1.442695
      %v986 = vpow.pop %v985
      %v987 = vmul.f32 %v889, 1.442695
      %v988 = vpow.pop %v987
      %v989 = vmul.f32 %v890, 1.442695
      %v990 = vpow.pop %v989
      %v991 = vadd.f32 %v892, 1.0
      %v992 = vadd.f32 %v894, 1.0
      %v993 = vadd.f32 %v896, 1.0
      %v994 = vadd.f32 %v898, 1.0
      %v995 = vadd.f32 %v900, 1.0
      %v996 = vadd.f32 %v902, 1.0
      %v997 = vadd.f32 %v904, 1.0
      %v998 = vadd.f32 %v906, 1.0
      %v999 = vadd.f32 %v908, 1.0
      %v1000 = vadd.f32 %v910, 1.0
      %v1001 = vadd.f32 %v912, 1.0
      %v1002 = vadd.f32 %v914, 1.0
      %v1003 = vadd.f32 %v916, 1.0
      %v1004 = vadd.f32 %v918, 1.0
      %v1005 = vadd.f32 %v920, 1.0
      %v1006 = vadd.f32 %v922, 1.0
      %v1007 = vadd.f32 %v924, 1.0
      %v1008 = vadd.f32 %v926, 1.0
      %v1009 = vadd.f32 %v928, 1.0
      %v1010 = vadd.f32 %v930, 1.0
      %v1011 = vadd.f32 %v932, 1.0
      %v1012 = vadd.f32 %v934, 1.0
      %v1013 = vadd.f32 %v936, 1.0
      %v1014 = vadd.f32 %v938, 1.0
      %v1015 = vadd.f32 %v940, 1.0
      %v1016 = vadd.f32 %v942, 1.0
      %v1017 = vadd.f32 %v944, 1.0
      %v1018 = vadd.f32 %v946, 1.0
      %v1019 = vadd.f32 %v948, 1.0
      %v1020 = vadd.f32 %v950, 1.0
      %v1021 = vadd.f32 %v952, 1.0
      %v1022 = vadd.f32 %v954, 1.0
      %v1023 = vadd.f32 %v956, 1.0
      %v1024 = vadd.f32 %v958, 1.0
      %v1025 = vadd.f32 %v960, 1.0
      %v1026 = vadd.f32 %v962, 1.0
      %v1027 = vadd.f32 %v964, 1.0
      %v1028 = vadd.f32 %v966, 1.0
      %v1029 = vadd.f32 %v968, 1.0
      %v1030 = vadd.f32 %v970, 1.0
      %v1031 = vadd.f32 %v972, 1.0
      %v1032 = vadd.f32 %v974, 1.0
      %v1033 = vadd.f32 %v976, 1.0
      %v1034 = vadd.f32 %v978, 1.0
      %v1035 = vadd.f32 %v980, 1.0
      %v1036 = vadd.f32 %v982, 1.0
      %v1037 = vadd.f32 %v984, 1.0
      %v1038 = vadd.f32 %v986, 1.0
      %v1039 = vadd.f32 %v988, 1.0
      %v1040 = vadd.f32 %v990, 1.0
      %v1041 = vrcp.pop %v991
      %v1042 = vmul.f32 1.0, %v1041
      %v1043 = vrcp.pop %v992
      %v1044 = vmul.f32 1.0, %v1043
      %v1045 = vrcp.pop %v993
      %v1046 = vmul.f32 1.0, %v1045
      %v1047 = vrcp.pop %v994
      %v1048 = vmul.f32 1.0, %v1047
      %v1049 = vrcp.pop %v995
      %v1050 = vmul.f32 1.0, %v1049
      %v1051 = vrcp.pop %v996
      %v1052 = vmul.f32 1.0, %v1051
      %v1053 = vrcp.pop %v997
      %v1054 = vmul.f32 1.0, %v1053
      %v1055 = vrcp.pop %v998
      %v1056 = vmul.f32 1.0, %v1055
      %v1057 = vrcp.pop %v999
      %v1058 = vmul.f32 1.0, %v1057
      %v1059 = vrcp.pop %v1000
      %v1060 = vmul.f32 1.0, %v1059
      %v1061 = vrcp.pop %v1001
      %v1062 = vmul.f32 1.0, %v1061
      %v1063 = vrcp.pop %v1002
      %v1064 = vmul.f32 1.0, %v1063
      %v1065 = vrcp.pop %v1003
      %v1066 = vmul.f32 1.0, %v1065
      %v1067 = vrcp.pop %v1004
      %v1068 = vmul.f32 1.0, %v1067
      %v1069 = vrcp.pop %v1005
      %v1070 = vmul.f32 1.0, %v1069
      %v1071 = vrcp.pop %v1006
      %v1072 = vmul.f32 1.0, %v1071
      %v1073 = vrcp.pop %v1007
      %v1074 = vmul.f32 1.0, %v1073
      %v1075 = vrcp.pop %v1008
      %v1076 = vmul.f32 1.0, %v1075
      %v1077 = vrcp.pop %v1009
      %v1078 = vmul.f32 1.0, %v1077
      %v1079 = vrcp.pop %v1010
      %v1080 = vmul.f32 1.0, %v1079
      %v1081 = vrcp.pop %v1011
      %v1082 = vmul.f32 1.0, %v1081
      %v1083 = vrcp.pop %v1012
      %v1084 = vmul.f32 1.0, %v1083
      %v1085 = vrcp.pop %v1013
      %v1086 = vmul.f32 1.0, %v1085
      %v1087 = vrcp.pop %v1014
      %v1088 = vmul.f32 1.0, %v1087
      %v1089 = vrcp.pop %v1015
      %v1090 = vmul.f32 1.0, %v1089
      %v1091 = vrcp.pop %v1016
      %v1092 = vmul.f32 1.0, %v1091
      %v1093 = vrcp.pop %v1017
      %v1094 = vmul.f32 1.0, %v1093
      %v1095 = vrcp.pop %v1018
      %v1096 = vmul.f32 1.0, %v1095
      %v1097 = vrcp.pop %v1019
      %v1098 = vmul.f32 1.0, %v1097
      %v1099 = vrcp.pop %v1020
      %v1100 = vmul.f32 1.0, %v1099
      %v1101 = vrcp.pop %v1021
      %v1102 = vmul.f32 1.0, %v1101
      %v1103 = vrcp.pop %v1022
      %v1104 = vmul.f32 1.0, %v1103
      %v1105 = vrcp.pop %v1023
      %v1106 = vmul.f32 1.0, %v1105
      %v1107 = vrcp.pop %v1024
      %v1108 = vmul.f32 1.0, %v1107
      %v1109 = vrcp.pop %v1025
      %v1110 = vmul.f32 1.0, %v1109
      %v1111 = vrcp.pop %v1026
      %v1112 = vmul.f32 1.0, %v1111
      %v1113 = vrcp.pop %v1027
      %v1114 = vmul.f32 1.0, %v1113
      %v1115 = vrcp.pop %v1028
      %v1116 = vmul.f32 1.0, %v1115
      %v1117 = vrcp.pop %v1029
      %v1118 = vmul.f32 1.0, %v1117
      %v1119 = vrcp.pop %v1030
      %v1120 = vmul.f32 1.0, %v1119
      %v1121 = vrcp.pop %v1031
      %v1122 = vmul.f32 1.0, %v1121
      %v1123 = vrcp.pop %v1032
      %v1124 = vmul.f32 1.0, %v1123
      %v1125 = vrcp.pop %v1033
      %v1126 = vmul.f32 1.0, %v1125
      %v1127 = vrcp.pop %v1034
      %v1128 = vmul.f32 1.0, %v1127
      %v1129 = vrcp.pop %v1035
      %v1130 = vmul.f32 1.0, %v1129
      %v1131 = vrcp.pop %v1036
      %v1132 = vmul.f32 1.0, %v1131
      %v1133 = vrcp.pop %v1037
      %v1134 = vmul.f32 1.0, %v1133
      %v1135 = vrcp.pop %v1038
      %v1136 = vmul.f32 1.0, %v1135
      %v1137 = vrcp.pop %v1039
      %v1138 = vmul.f32 1.0, %v1137
      %v1139 = vrcp.pop %v1040
      %v1140 = vmul.f32 1.0, %v1139
      %1141 = vst [vmem:[%s175] sm:$0xff] %v1042
      %1142 = vst [vmem:[%s175 + $0x8] sm:$0xff] %v1044
      %1143 = vst [vmem:[%s175 + $0x10] sm:$0xff] %v1046
      %1144 = vst [vmem:[%s175 + $0x18] sm:$0xff] %v1048
      %1145 = vst [vmem:[%s175 + $0x20] sm:$0xff] %v1050
      %1146 = vst [vmem:[%s175 + $0x28] sm:$0xff] %v1052
      %1147 = vst [vmem:[%s175 + $0x30] sm:$0xff] %v1054
      %1148 = vst [vmem:[%s175 + $0x38] sm:$0xff] %v1056
      %1149 = vst [vmem:[%s175 + $0x40] sm:$0xff] %v1058
      %1150 = vst [vmem:[%s175 + $0x48] sm:$0xff] %v1060
      %1151 = vst [vmem:[%s175 + $0x50] sm:$0xff] %v1062
      %1152 = vst [vmem:[%s175 + $0x58] sm:$0xff] %v1064
      %1153 = vst [vmem:[%s175 + $0x60] sm:$0xff] %v1066
      %1154 = vst [vmem:[%s175 + $0x68] sm:$0xff] %v1068
      %1155 = vst [vmem:[%s175 + $0x70] sm:$0xff] %v1070
      %1156 = vst [vmem:[%s175 + $0x78] sm:$0xff] %v1072
      %1157 = vst [vmem:[%s175 + $0x80] sm:$0xff] %v1074
      %1158 = vst [vmem:[%s175 + $0x88] sm:$0xff] %v1076
      %1159 = vst [vmem:[%s175 + $0x90] sm:$0xff] %v1078
      %1160 = vst [vmem:[%s175 + $0x98] sm:$0xff] %v1080
      %1161 = vst [vmem:[%s175 + $0xa0] sm:$0xff] %v1082
      %1162 = vst [vmem:[%s175 + $0xa8] sm:$0xff] %v1084
      %1163 = vst [vmem:[%s175 + $0xb0] sm:$0xff] %v1086
      %1164 = vst [vmem:[%s175 + $0xb8] sm:$0xff] %v1088
      %1165 = vst [vmem:[%s175 + $0xc0] sm:$0xff] %v1090
      %1166 = vst [vmem:[%s175 + $0xc8] sm:$0xff] %v1092
      %1167 = vst [vmem:[%s175 + $0xd0] sm:$0xff] %v1094
      %1168 = vst [vmem:[%s175 + $0xd8] sm:$0xff] %v1096
      %1169 = vst [vmem:[%s175 + $0xe0] sm:$0xff] %v1098
      %1170 = vst [vmem:[%s175 + $0xe8] sm:$0xff] %v1100
      %1171 = vst [vmem:[%s175 + $0xf0] sm:$0xff] %v1102
      %1172 = vst [vmem:[%s175 + $0xf8] sm:$0xff] %v1104
      %1173 = vst [vmem:[%s175 + $0x100] sm:$0xff] %v1106
      %1174 = vst [vmem:[%s175 + $0x108] sm:$0xff] %v1108
      %1175 = vst [vmem:[%s175 + $0x110] sm:$0xff] %v1110
      %1176 = vst [vmem:[%s175 + $0x118] sm:$0xff] %v1112
      %1177 = vst [vmem:[%s175 + $0x120] sm:$0xff] %v1114
      %1178 = vst [vmem:[%s175 + $0x128] sm:$0xff] %v1116
      %1179 = vst [vmem:[%s175 + $0x130] sm:$0xff] %v1118
      %1180 = vst [vmem:[%s175 + $0x138] sm:$0xff] %v1120
      %1181 = vst [vmem:[%s175 + $0x140] sm:$0xff] %v1122
      %1182 = vst [vmem:[%s175 + $0x148] sm:$0xff] %v1124
      %1183 = vst [vmem:[%s175 + $0x150] sm:$0xff] %v1126
      %1184 = vst [vmem:[%s175 + $0x158] sm:$0xff] %v1128
      %1185 = vst [vmem:[%s175 + $0x160] sm:$0xff] %v1130
      %1186 = vst [vmem:[%s175 + $0x168] sm:$0xff] %v1132
      %1187 = vst [vmem:[%s175 + $0x170] sm:$0xff] %v1134
      %1188 = vst [vmem:[%s175 + $0x178] sm:$0xff] %v1136
      %1189 = vst [vmem:[%s175 + $0x180] sm:$0xff] %v1138
      %1190 = vst [vmem:[%s175 + $0x188] sm:$0xff] %v1140
      %s1191 = smul.u32 50, %s14
      %p1192 = scmp.lt.s32.totalorder %s1191, 199
      %s1193 = scalar_select %p1192, %s1191, 199
      %s1194 = smul.addr %s1193, 8
      %s1195 = scalar_lea.vmem %s3, %s1194
      // Predicated region
      $region33: #{deep_generator_forward.7} parent=31 // pred_check
        %p1196 = pneg %p100
      $region34: #{deep_generator_forward.7} parent=31 // pred_check_branch
        %1198 = sbr.rel (%p1196) target = $region36
      $region35: #{deep_generator_forward.7} parent=31 // pred_region
        %s1199 = smul.u32 50, %s14
      $region36: #{deep_generator_forward.7} parent=31 // pred_fallthru
        _
    $region32: #{deep_generator_forward.7} parent=5 // pred_fallthru
      _
    %p1200 = scmp.le.s32.totalorder 2, %s9
    // Predicated region
    $region37: #{deep_generator_forward.7} parent=5 // pred_check
      %p1201 = pneg %p1200
    $region38: #{deep_generator_forward.7} parent=5 // pred_check_branch
      %1203 = sbr.rel (%p1201) target = $region40
    $region39: #{deep_generator_forward.7} parent=5 // pred_region
      %s1204 = ssub.s32 %s9, 2
      // Predicated region
      $region41: #{deep_generator_forward.7} parent=39 // pred_check
        %p1205 = pneg %p106
      $region42: #{deep_generator_forward.7} parent=39 // pred_check_branch
        %1207 = sbr.rel (%p1205) target = $region44
      $region43: #{deep_generator_forward.7} parent=39 // pred_region
        %s1208 = smul.u32 50, %s15
        %p1209 = scmp.lt.s32.totalorder %s1208, 199
        %s1210 = scalar_select %p1209, %s1208, 199
        %s1211 = smul.addr %s1210, 8
        %s1212 = scalar_lea.vmem %s3, %s1211
      $region44: #{deep_generator_forward.7} parent=39 // pred_fallthru
        _
    $region40: #{deep_generator_forward.7} parent=5 // pred_fallthru
      _
  $region6: #{deep_generator_forward.7} parent=0 // loop_footer
    %s13 = sadd.s32 1, %s9
  $region7: #{deep_generator_forward.7} parent=0 // loop_footer_branch
    %8 = sbr.rel target = $region3
  $region8: #{deep_generator_forward.7} parent=0 // loop_exit
    _

</llo_original>
